<compile_context>
chip_gen: v6e
topology: v6e:2x2x1
jax: 0.10.0
libtpu: 0.0.40
codegen_flags: <defaults>
</compile_context>

<pallas_src>
import functools

import jax
import jax.numpy as jnp
from jax.experimental import pallas as pl
from jax.experimental.pallas import tpu as pltpu

EXTRA_BLOCK_CHANNELS = 5
EPS = 1e-5
LANE = 128
SUBLANE = 8


# ------------------------------ small helpers ------------------------------

def _round_up(x, m):
    return (x + m - 1) // m * m


def _cdiv(a, b):
    return -(-a // b)


def _lane_pad(c):
    return _round_up(c, LANE)


def _balanced_tile(dim, preferred, unit):
    """Tile size: the whole (unit-rounded) dim if it fits under `preferred`, otherwise the
    dim split into ceil(dim/preferred) near-equal unit-aligned tiles.  Never collapses to
    tiny tiles for awkward dims (we pad up to the tile instead of requiring divisibility)."""
    d = _round_up(max(dim, 1), unit)
    if d <= preferred:
        return d
    n_tiles = _cdiv(d, preferred)
    return _round_up(_cdiv(d, n_tiles), unit)


def _tile_n(n):
    """Output/RHS lane tile: 256 when it divides (keeps v6e/v7x 256-wide MXU columns full),
    otherwise the whole (128-rounded) dim when modest (no N padding), else fall back to 128."""
    d = _round_up(n, LANE)
    if d % 256 == 0:
        return 256
    if d <= 512:
        return d
    return LANE


@functools.lru_cache(maxsize=None)
def _vmem_limit_bytes():
    """Generation-aware VMEM budget: ~2/3 of per-core VMEM (v7x 64 MiB -> ~42 MiB,
    v5e/v6e 128 MiB -> capped at 96 MiB).  Conservative fallback if the query fails."""
    cap = 64 * 1024 * 1024
    try:
        info = pltpu.get_tpu_info()
        cap = int(getattr(info, "vmem_capacity_bytes", cap))
    except Exception:
        pass
    return max(32 * 1024 * 1024, min(cap * 2 // 3, 96 * 1024 * 1024))


def _pad_vec(v, c):
    return jnp.pad(v.astype(jnp.float32), (0, c - v.shape[0])).reshape(1, c)


# -------------- GEMM with fused CapNorm statistics (bf16 -> bf16/f32) --------------

def _mm_stats_kernel(a_ref, b_ref, o_ref, sum_ref, ssq_ref):
    """Single-K-slab GEMM: C = A @ B, plus per-channel sum / sum-of-squares partials of C.
    The partials are kept as 8 sublane phases (pure VPU adds); the final 8->1 and
    cross-tile reduction is a tiny XLA op outside the kernel."""
    acc = jnp.dot(a_ref[...], b_ref[...], preferred_element_type=jnp.float32)
    o_ref[...] = acc.astype(o_ref.dtype)
    tm, tn = acc.shape
    part = acc.reshape(tm // SUBLANE, SUBLANE, tn)
    sum_ref[...] = jnp.sum(part, axis=0)[None]
    ssq_ref[...] = jnp.sum(part * part, axis=0)[None]


def _mm_stats_kernel_ktiled(a_ref, b_ref, o_ref, sum_ref, ssq_ref, acc_ref):
    """K-tiled variant (only used when the whole K slab would not fit comfortably in VMEM)."""
    @pl.when(pl.program_id(2) == 0)
    def _():
        acc_ref[...] = jnp.zeros_like(acc_ref)

    acc_ref[...] += jnp.dot(a_ref[...], b_ref[...], preferred_element_type=jnp.float32)

    @pl.when(pl.program_id(2) == pl.num_programs(2) - 1)
    def _():
        acc = acc_ref[...]
        o_ref[...] = acc.astype(o_ref.dtype)
        tm, tn = acc.shape
        part = acc.reshape(tm // SUBLANE, SUBLANE, tn)
        sum_ref[...] = jnp.sum(part, axis=0)[None]
        ssq_ref[...] = jnp.sum(part * part, axis=0)[None]


def pallas_matmul_stats(a, b, out_dtype=jnp.bfloat16):
    """(M, K) @ (K, N) -> C in `out_dtype`, plus per-column sum(C) and sum(C*C) in f32.

    bf16 MXU inputs, f32 accumulation.  The statistics are fused into the GEMM epilogue
    so the CapNorm stats pass never re-reads the (M, N) conv output from HBM.  Padded
    M rows / K cols are zero so they contribute nothing to the sums."""
    M, K = a.shape
    K2, N = b.shape
    assert K == K2
    tm = _balanced_tile(M, 512, 16)          # >=16 rows for bf16 sublane packing
    tn = _tile_n(N)
    Mp = _round_up(M, tm)
    Np = _round_up(N, tn)
    Kp = _round_up(K, LANE)

    single_k = Kp <= 8192                    # whole K slab resident in VMEM -> no K grid axis
    if not single_k:
        tk = 512                             # multiple of 256: full MXU columns on v6e/v7x
        Kp = _round_up(K, tk)

    a_p = a if (Mp, Kp) == (M, K) else jnp.pad(a, ((0, Mp - M), (0, Kp - K)))
    b_p = b if (Kp, Np) == (K, N) else jnp.pad(b, ((0, Kp - K), (0, Np - N)))
    a_p = a_p.astype(jnp.bfloat16)
    b_p = b_p.astype(jnp.bfloat16)

    gm, gn = Mp // tm, Np // tn
    out_shape = (jax.ShapeDtypeStruct((Mp, Np), out_dtype),
                 jax.ShapeDtypeStruct((gm, SUBLANE, Np), jnp.float32),
                 jax.ShapeDtypeStruct((gm, SUBLANE, Np), jnp.float32))

    if single_k:
        out, s_part, q_part = pl.pallas_call(
            _mm_stats_kernel,
            out_shape=out_shape,
            grid=(gm, gn),
            in_specs=[pl.BlockSpec((tm, Kp), lambda i, j: (i, 0)),
                      pl.BlockSpec((Kp, tn), lambda i, j: (0, j))],
            out_specs=(pl.BlockSpec((tm, tn), lambda i, j: (i, j)),
                       pl.BlockSpec((1, SUBLANE, tn), lambda i, j: (i, 0, j)),
                       pl.BlockSpec((1, SUBLANE, tn), lambda i, j: (i, 0, j))),
            compiler_params=pltpu.CompilerParams(
                dimension_semantics=("parallel", "parallel"),
                vmem_limit_bytes=_vmem_limit_bytes()),
        )(a_p, b_p)
    else:
        out, s_part, q_part = pl.pallas_call(
            _mm_stats_kernel_ktiled,
            out_shape=out_shape,
            grid=(gm, gn, Kp // tk),
            in_specs=[pl.BlockSpec((tm, tk), lambda i, j, k: (i, k)),
                      pl.BlockSpec((tk, tn), lambda i, j, k: (k, j))],
            out_specs=(pl.BlockSpec((tm, tn), lambda i, j, k: (i, j)),
                       pl.BlockSpec((1, SUBLANE, tn), lambda i, j, k: (i, 0, j)),
                       pl.BlockSpec((1, SUBLANE, tn), lambda i, j, k: (i, 0, j))),
            scratch_shapes=[pltpu.VMEM((tm, tn), jnp.float32)],
            compiler_params=pltpu.CompilerParams(
                dimension_semantics=("parallel", "parallel", "arbitrary"),
                vmem_limit_bytes=_vmem_limit_bytes()),
        )(a_p, b_p)

    s = jnp.sum(s_part, axis=(0, 1)).reshape(1, Np)
    q = jnp.sum(q_part, axis=(0, 1)).reshape(1, Np)
    if (Mp, Np) != (M, N):
        out = out[:M, :N]
        s = s[:, :N]
        q = q[:, :N]
    return out, s, q


# --------------------------- CapNorm scale/shift fold ---------------------------

def _capnorm_scale_shift(s, q, m, gamma, beta):
    """Fold batch stats + cap + gamma/beta into per-channel (scale, shift).  Tiny (1,C) XLA.
    Variance via E[x^2]-E[x]^2 in f32 can drift slightly from a Welford reference."""
    mean = s / m
    var = jnp.maximum(q / m - mean * mean, 0.0)
    denom = jnp.maximum(jnp.sqrt(var + EPS), 1.0)   # "cap": never scale up
    scale = gamma / denom
    shift = beta - mean * scale
    return scale, shift


# ----------------- CapNorm apply (+ optional fused residual + ReLU) -----------------

def _affine_kernel(x_ref, scale_ref, shift_ref, o_ref, *, apply_relu):
    y = x_ref[...].astype(jnp.float32) * scale_ref[...] + shift_ref[...]
    if apply_relu:
        y = jnp.maximum(y, 0.0)
    o_ref[...] = y.astype(o_ref.dtype)


def _affine_residual_kernel(x_ref, scale_ref, shift_ref,
                            r_ref, rscale_ref, rshift_ref, o_ref, *, apply_relu):
    y = x_ref[...].astype(jnp.float32) * scale_ref[...] + shift_ref[...]
    y = y + r_ref[...].astype(jnp.float32) * rscale_ref[...] + rshift_ref[...]
    if apply_relu:
        y = jnp.maximum(y, 0.0)
    o_ref[...] = y.astype(o_ref.dtype)


def _affine_plain_residual_kernel(x_ref, scale_ref, shift_ref, r_ref, o_ref, *, apply_relu):
    y = (x_ref[...].astype(jnp.float32) * scale_ref[...] + shift_ref[...]
         + r_ref[...].astype(jnp.float32))
    if apply_relu:
        y = jnp.maximum(y, 0.0)
    o_ref[...] = y.astype(o_ref.dtype)


def _elementwise_call(kernel, arrays, M, C, out_dtype):
    tm_pref = 512 if C <= 2048 else 256
    tm = _balanced_tile(M, tm_pref, SUBLANE)
    Mp = _round_up(M, tm)
    specs, padded = [], []
    for a in arrays:
        if a.shape[0] == 1:                       # broadcast (1, C) scale/shift
            specs.append(pl.BlockSpec((1, C), lambda i: (0, 0)))
            padded.append(a)
        else:                                     # full (M, C) tensor, tiled over rows
            specs.append(pl.BlockSpec((tm, C), lambda i: (i, 0)))
            padded.append(jnp.pad(a, ((0, Mp - M), (0, 0))) if Mp != M else a)
    out = pl.pallas_call(
        kernel,
        out_shape=jax.ShapeDtypeStruct((Mp, C), out_dtype),
        grid=(Mp // tm,),
        in_specs=specs,
        out_specs=pl.BlockSpec((tm, C), lambda i: (i, 0)),
        compiler_params=pltpu.CompilerParams(
            dimension_semantics=("parallel",),
            vmem_limit_bytes=_vmem_limit_bytes()),
    )(*padded)
    return out[:M] if Mp != M else out


def pallas_affine(x, scale, shift, *, apply_relu, out_dtype=jnp.float32):
    M, C = x.shape
    kern = functools.partial(_affine_kernel, apply_relu=apply_relu)
    return _elementwise_call(kern, (x, scale, shift), M, C, out_dtype)


def pallas_affine_residual(x, scale, shift, r, rscale, rshift, *,
                           apply_relu, out_dtype=jnp.float32):
    M, C = x.shape
    kern = functools.partial(_affine_residual_kernel, apply_relu=apply_relu)
    return _elementwise_call(kern, (x, scale, shift, r, rscale, rshift), M, C, out_dtype)


def pallas_residual(x, scale, shift, r, *, apply_relu, out_dtype=jnp.float32):
    """relu( x*scale + shift + r ) — identity-shortcut epilogue (no affine on r)."""
    M, C = x.shape
    kern = functools.partial(_affine_plain_residual_kernel, apply_relu=apply_relu)
    return _elementwise_call(kern, (x, scale, shift, r), M, C, out_dtype)


# ------------------------------- conv glue ----------------------------------

def _im2col(x_nhwc, ksize, stride, padding):
    # TODO(synk): implicit im2col via shifted element-offset windows of the padded NHWC
    # activation would remove this HBM materialization; kept explicit for robustness.
    N, H, W, C = x_nhwc.shape
    xp = jnp.pad(x_nhwc, ((0, 0), (padding, padding), (padding, padding), (0, 0)))
    Ho = (H + 2 * padding - ksize) // stride + 1
    Wo = (W + 2 * padding - ksize) // stride + 1
    cols = []
    for kh in range(ksize):
        for kw in range(ksize):
            cols.append(xp[:, kh:kh + stride * Ho:stride, kw:kw + stride * Wo:stride, :])
    patches = jnp.stack(cols, axis=3)                       # (N, Ho, Wo, k*k, C)
    return patches.reshape(N * Ho * Wo, ksize * ksize * C), (N, Ho, Wo)


def _conv_weight_matrix(w_oihw, cin_pad, cout_pad):
    """OIHW -> (k*k*cin_pad, cout_pad), zero-padding channel dims to lane multiples."""
    O, I, kh, kw = w_oihw.shape
    w = jnp.transpose(w_oihw, (2, 3, 1, 0))                 # (kh, kw, I, O)
    w = jnp.pad(w, ((0, 0), (0, 0), (0, cin_pad - I), (0, cout_pad - O)))
    return w.reshape(kh * kw * cin_pad, cout_pad)


def _conv2d_pallas(x_nhwc, w_oihw, stride, padding, cout_pad):
    """Bias-free conv2d (== ElasticConv2d forward) with CapNorm statistics fused into the
    GEMM epilogue.  The conv output activation is stored in bf16 to halve HBM traffic."""
    O, I, kh, kw = w_oihw.shape
    cin_pad = x_nhwc.shape[-1]
    patches, (N, Ho, Wo) = _im2col(x_nhwc, kh, stride, padding)
    wmat = _conv_weight_matrix(w_oihw, cin_pad, cout_pad)
    out, s, q = pallas_matmul_stats(patches, wmat, out_dtype=jnp.bfloat16)
    return out, s, q, (N, Ho, Wo)


# ------------------------------ ElasticBlock ---------------------------------

def init_elastic_block_params(key, in_channels, out_channels,
                              initial_hidden_channels=2.0, stride=1):
    hidden = int(initial_hidden_channels) + EXTRA_BLOCK_CHANNELS
    k1, k2, k3 = jax.random.split(key, 3)
    params = {
        "stride": stride,
        "hidden_channels": jnp.float32(initial_hidden_channels),  # unused in forward
        "conv1_w": 0.1 * jax.random.normal(k1, (hidden, in_channels, 3, 3), jnp.float32),
        "bn1_gamma": jnp.ones((hidden,), jnp.float32),
        "bn1_beta": jnp.zeros((hidden,), jnp.float32),
        "conv2_w": 0.1 * jax.random.normal(k2, (out_channels, hidden, 3, 3), jnp.float32),
        "bn2_gamma": jnp.ones((out_channels,), jnp.float32),
        "bn2_beta": jnp.zeros((out_channels,), jnp.float32),
    }
    if stride != 1 or in_channels != out_channels:
        params["sc_w"] = 0.1 * jax.random.normal(
            k3, (out_channels, in_channels, 1, 1), jnp.float32)
        params["sc_gamma"] = jnp.ones((out_channels,), jnp.float32)
        params["sc_beta"] = jnp.zeros((out_channels,), jnp.float32)
    return params


def elastic_block_forward(x_nchw, params):
    stride = params["stride"]
    Cin = x_nchw.shape[1]
    hidden = params["conv1_w"].shape[0]
    Cout = params["conv2_w"].shape[0]
    Cp_in, Cp_h, Cp_out = _lane_pad(Cin), _lane_pad(hidden), _lane_pad(Cout)

    # NCHW -> NHWC, pad channels to lane width once (padded lanes stay exactly zero).
    x = jnp.transpose(x_nchw, (0, 2, 3, 1)).astype(jnp.float32)
    x = jnp.pad(x, ((0, 0), (0, 0), (0, 0), (0, Cp_in - Cin)))
    x_bf16 = x.astype(jnp.bfloat16)                          # GEMM-side activation dtype

    # conv1 -> bn1 -> relu   (CapNorm statistics fused into the conv GEMM epilogue)
    c1, s1, q1, (N, Ho, Wo) = _conv2d_pallas(x_bf16, params["conv1_w"], stride, 1, Cp_h)
    M = N * Ho * Wo
    scale1, shift1 = _capnorm_scale_shift(
        s1, q1, M, _pad_vec(params["bn1_gamma"], Cp_h), _pad_vec(params["bn1_beta"], Cp_h))
    h = pallas_affine(c1, scale1, shift1, apply_relu=True, out_dtype=jnp.bfloat16)
    h = h.reshape(N, Ho, Wo, Cp_h)

    # conv2 -> bn2 statistics (bn2 affine fused with residual + relu below)
    c2, s2, q2, _ = _conv2d_pallas(h, params["conv2_w"], 1, 1, Cp_out)
    scale2, shift2 = _capnorm_scale_shift(
        s2, q2, M, _pad_vec(params["bn2_gamma"], Cp_out), _pad_vec(params["bn2_beta"], Cp_out))

    if "sc_w" in params:
        # projection shortcut: 1x1 conv (stride s) + CapNorm, stats fused as well
        xs = x_bf16[:, ::stride, ::stride, :].reshape(M, Cp_in)
        wsc = _conv_weight_matrix(params["sc_w"], Cp_in, Cp_out)
        sc, ss, qs = pallas_matmul_stats(xs, wsc, out_dtype=jnp.bfloat16)
        scale_s, shift_s = _capnorm_scale_shift(
            ss, qs, M, _pad_vec(params["sc_gamma"], Cp_out), _pad_vec(params["sc_beta"], Cp_out))
        # fused epilogue: relu( bn2(conv2) + bn_sc(shortcut) )
        out = pallas_affine_residual(c2, scale2, shift2, sc, scale_s, shift_s,
                                     apply_relu=True, out_dtype=jnp.float32)
    else:
        # identity shortcut: bf16 residual fed directly, no per-channel affine on it
        assert stride == 1 and Cp_in == Cp_out, "identity shortcut requires same shape"
        r = x_bf16.reshape(M, Cp_in)
        out = pallas_residual(c2, scale2, shift2, r, apply_relu=True, out_dtype=jnp.float32)

    out = out.reshape(N, Ho, Wo, Cp_out)[..., :Cout]
    return jnp.transpose(out, (0, 3, 1, 2))                  # NHWC -> NCHW


if __name__ == "__main__":
    key = jax.random.PRNGKey(0)
    kx, kp, kx2, kp2 = jax.random.split(key, 4)

    # projection-shortcut block: batch=2, in_channels=4, out_channels=8, spatial=16, stride=1
    x = jax.random.normal(kx, (2, 4, 16, 16), jnp.float32)        # NCHW like PyTorch
    params = init_elastic_block_params(kp, in_channels=4, out_channels=8,
                                       initial_hidden_channels=2.0, stride=1)
    out = elastic_block_forward(x, params)
    jax.block_until_ready(out)
    assert out.shape == (2, 8, 16, 16) and out.dtype == jnp.float32

    # identity-shortcut block (in == out, stride 1) exercises the no-affine residual path
    x2 = jax.random.normal(kx2, (2, 8, 16, 16), jnp.float32)
    params2 = init_elastic_block_params(kp2, in_channels=8, out_channels=8,
                                        initial_hidden_channels=2.0, stride=1)
    out2 = elastic_block_forward(x2, params2)
    jax.block_until_ready(out2)
    assert out2.shape == (2, 8, 16, 16) and out2.dtype == jnp.float32

    print("KERNEL_OK")
</pallas_src>

<mosaic_0001>
module attributes {stable_mosaic.version = 11 : i64} {
  func.func @_mm_stats_kernel(%arg0: i32, %arg1: i32, %arg2: memref<512x1152xbf16, #tpu.memory_space<vmem>>, %arg3: memref<1152x128xbf16, #tpu.memory_space<vmem>>, %arg4: memref<512x128xbf16, #tpu.memory_space<vmem>>, %arg5: memref<1x8x128xf32, #tpu.memory_space<vmem>>, %arg6: memref<1x8x128xf32, #tpu.memory_space<vmem>>) attributes {dimension_semantics = [#tpu.dimension_semantics<parallel>, #tpu.dimension_semantics<parallel>], iteration_bounds = array<i64: 1, 1>, scalar_prefetch = 0 : i64, scratch_operands = 0 : i64, tpu.core_type = #tpu.core_type<tc>, window_params = [{transform_indices = @transform_0, window_bounds = array<i64: 512, 1152>}, {transform_indices = @transform_1, window_bounds = array<i64: 1152, 128>}, {transform_indices = @transform_2, window_bounds = array<i64: 512, 128>}, {transform_indices = @transform_3, window_bounds = array<i64: 1, 8, 128>}, {transform_indices = @transform_4, window_bounds = array<i64: 1, 8, 128>}]} {
    %c0 = arith.constant 0 : index
    %c0_0 = arith.constant 0 : index
    %0 = vector.load %arg2[%c0, %c0_0] : memref<512x1152xbf16, #tpu.memory_space<vmem>>, vector<512x1152xbf16>
    %c0_1 = arith.constant 0 : index
    %c0_2 = arith.constant 0 : index
    %1 = vector.load %arg3[%c0_1, %c0_2] : memref<1152x128xbf16, #tpu.memory_space<vmem>>, vector<1152x128xbf16>
    %cst = arith.constant dense<0.000000e+00> : vector<512x128xf32>
    %2 = tpu.matmul %0, %1, %cst {dimension_numbers = #tpu.dot_dimension_numbers<[1], [0], [0], [1], [0, 0, 1, 1], [], []>} : vector<512x1152xbf16>, vector<1152x128xbf16>, vector<512x128xf32> -> vector<512x128xf32>
    %3 = arith.truncf %2 : vector<512x128xf32> to vector<512x128xbf16>
    %c0_3 = arith.constant 0 : index
    %c0_4 = arith.constant 0 : index
    %4 = vector.load %arg4[%c0_3, %c0_4] : memref<512x128xbf16, #tpu.memory_space<vmem>>, vector<512x128xbf16>
    tpu.vector_store %arg4[%c0_3, %c0_4], %3 {strides = array<i32>} : memref<512x128xbf16, #tpu.memory_space<vmem>>, vector<512x128xbf16>,
    %5 = vector.shape_cast %2 : vector<512x128xf32> to vector<64x8x128xf32>
    %cst_5 = arith.constant dense<0.000000e+00> : vector<8x128xf32>
    %6 = vector.multi_reduction <add>, %5, %cst_5 [0] : vector<64x8x128xf32> to vector<8x128xf32>
    %7 = vector.shape_cast %6 : vector<8x128xf32> to vector<1x8x128xf32>
    %c0_6 = arith.constant 0 : index
    %c0_7 = arith.constant 0 : index
    %c0_8 = arith.constant 0 : index
    %8 = vector.load %arg5[%c0_6, %c0_7, %c0_8] : memref<1x8x128xf32, #tpu.memory_space<vmem>>, vector<1x8x128xf32>
    tpu.vector_store %arg5[%c0_6, %c0_7, %c0_8], %7 {strides = array<i32>} : memref<1x8x128xf32, #tpu.memory_space<vmem>>, vector<1x8x128xf32>,
    %9 = arith.mulf %5, %5 : vector<64x8x128xf32>
    %cst_9 = arith.constant dense<0.000000e+00> : vector<8x128xf32>
    %10 = vector.multi_reduction <add>, %9, %cst_9 [0] : vector<64x8x128xf32> to vector<8x128xf32>
    %11 = vector.shape_cast %10 : vector<8x128xf32> to vector<1x8x128xf32>
    %c0_10 = arith.constant 0 : index
    %c0_11 = arith.constant 0 : index
    %c0_12 = arith.constant 0 : index
    %12 = vector.load %arg6[%c0_10, %c0_11, %c0_12] : memref<1x8x128xf32, #tpu.memory_space<vmem>>, vector<1x8x128xf32>
    tpu.vector_store %arg6[%c0_10, %c0_11, %c0_12], %11 {strides = array<i32>} : memref<1x8x128xf32, #tpu.memory_space<vmem>>, vector<1x8x128xf32>,
    return
  }
  func.func @transform_0(%arg0: i32, %arg1: i32) -> (i32, i32) {
    %c0_i32 = arith.constant 0 : i32
    %c0_i32_0 = arith.constant 0 : i32
    return %arg0, %c0_i32 : i32, i32
  }
  func.func @transform_1(%arg0: i32, %arg1: i32) -> (i32, i32) {
    %c0_i32 = arith.constant 0 : i32
    %c0_i32_0 = arith.constant 0 : i32
    return %c0_i32, %arg1 : i32, i32
  }
  func.func @transform_2(%arg0: i32, %arg1: i32) -> (i32, i32) {
    %c0_i32 = arith.constant 0 : i32
    return %arg0, %arg1 : i32, i32
  }
  func.func @transform_3(%arg0: i32, %arg1: i32) -> (i32, i32, i32) {
    %c0_i32 = arith.constant 0 : i32
    %c0_i32_0 = arith.constant 0 : i32
    return %arg0, %c0_i32, %arg1 : i32, i32, i32
  }
  func.func @transform_4(%arg0: i32, %arg1: i32) -> (i32, i32, i32) {
    %c0_i32 = arith.constant 0 : i32
    %c0_i32_0 = arith.constant 0 : i32
    return %arg0, %c0_i32, %arg1 : i32, i32, i32
  }
}

</mosaic_0001>

<llo_original>
// kernel: tpu_custom_call.1
$region0: #{tpu_custom_call.1}
  #allocation0 [shape = 'u32[]', space=smem, size = 0x4, offset = 0x4, fixed_abs, tag = 'smem constant byte address 0x4 - core index']
  #allocation1 [shape = 'u32[144,128]{1,0:T(1,128)}', space=vmem, size = 0x12000, scoped, tag = 'internal scratch']
  %s0 = inlined_call_operand.hbm [shape: bf16[512,1152], index: 0, kind: input, shape index: {}]
  %s1 = inlined_call_operand.hbm [shape: bf16[1152,128], index: 1, kind: input, shape index: {}]
  %s2 = inlined_call_operand.hbm [shape: bf16[512,128], index: 2, kind: output, shape index: {0}]
  %s3 = inlined_call_operand.hbm [shape: f32[1,8,128], index: 3, kind: output, shape index: {1}]
  %s4 = inlined_call_operand.hbm [shape: f32[1,8,128], index: 4, kind: output, shape index: {2}]
  %5 = xla_tuple %s2, %s3, %s4
  %s6 = sld [smem:[#allocation0]]
  $region42: #{tpu_custom_call.1} parent=0
    _
  %s8 = ssub.s32 1, %s6
  %s9 = scalar_select 0, %s8, %s6
  $region1: #{tpu_custom_call.1} parent=0
    #allocation2 [shape = 'u8[1179648]{0}', space=vmem, size = 0x120000, scoped, tag = 'input window, operand 0, single buffered']
    #allocation3 [shape = 's32[1]{0}', space=sflag, size = 0x4, scoped, tag = 'scoped memory for tpu_custom_call.1']
    #allocation4 [shape = 's32[1]{0}', space=sflag, size = 0x4, scoped, tag = 'scoped memory for tpu_custom_call.1']
    #allocation5 [shape = 'u8[294912]{0}', space=vmem, size = 0x48000, scoped, tag = 'input window, operand 1, single buffered']
    #allocation6 [shape = 's32[1]{0}', space=sflag, size = 0x4, scoped, tag = 'scoped memory for tpu_custom_call.1']
    #allocation7 [shape = 'u8[131072]{0}', space=vmem, size = 0x20000, scoped, tag = 'output window, operand 0, single buffered']
    #allocation8 [shape = 'u8[4096]{0}', space=vmem, size = 0x1000, scoped, tag = 'output window, operand 1, single buffered']
    #allocation9 [shape = 's32[1]{0}', space=sflag, size = 0x4, scoped, tag = 'scoped memory for tpu_custom_call.1']
    #allocation10 [shape = 'u8[4096]{0}', space=vmem, size = 0x1000, scoped, tag = 'output window, operand 2, single buffered']
    %10 = vsyncpa [#allocation3], 0
    %11 = vsyncpa [#allocation6], 0
    %12 = vsyncpa [#allocation4], 0
    %13 = vsyncpa [#allocation9], 0
    // Predicated region
    $region2: #{tpu_custom_call.1} parent=1 // pred_check
      _
    $region3: #{tpu_custom_call.1} parent=1 // pred_check_branch
      %15 = sbr.rel (0) target = $region5
    $region4: #{tpu_custom_call.1} parent=1 // pred_region
      %s17 = ssub.s32 36864, 36864
      %18 = vsyncadd [#allocation3], %s17
      %s19 = sshll.u32 [#allocation2], 4
      %s20 = int_to_ptr.vmem [resolvable:$true] %s19
      %25 = dma.hbm_to_vmem [thread:$0]  %s0, 36864, %s20, [#allocation3], 576, 576, 36
    $region5: #{tpu_custom_call.1} parent=1 // pred_fallthru
      _
    // Predicated region
    $region6: #{tpu_custom_call.1} parent=1 // pred_check
      _
    $region7: #{tpu_custom_call.1} parent=1 // pred_check_branch
      %27 = sbr.rel (0) target = $region9
    $region8: #{tpu_custom_call.1} parent=1 // pred_region
      %s29 = ssub.s32 9216, 9216
      %30 = vsyncadd [#allocation6], %s29
      %s31 = sshll.u32 [#allocation5], 4
      %s32 = int_to_ptr.vmem [resolvable:$true] %s31
      %37 = dma.hbm_to_vmem [thread:$0]  %s1, 9216, %s32, [#allocation6], 64, 64, 4
    $region9: #{tpu_custom_call.1} parent=1 // pred_fallthru
      _
    // Predicated region
    $region10: #{tpu_custom_call.1} parent=1 // pred_check
      _
    $region11: #{tpu_custom_call.1} parent=1 // pred_check_branch
      %39 = sbr.rel (0) target = $region13
    $region12: #{tpu_custom_call.1} parent=1 // pred_region
      %40 = dma.done [#allocation3], 36864
    $region13: #{tpu_custom_call.1} parent=1 // pred_fallthru
      _
    // Predicated region
    $region14: #{tpu_custom_call.1} parent=1 // pred_check
      _
    $region15: #{tpu_custom_call.1} parent=1 // pred_check_branch
      %42 = sbr.rel (0) target = $region17
    $region16: #{tpu_custom_call.1} parent=1 // pred_region
      %43 = dma.done [#allocation6], 9216
    $region17: #{tpu_custom_call.1} parent=1 // pred_fallthru
      _
    %v45 = vld [vmem:[#allocation2] sm:$0xff]
    %v46 = vld [vmem:[#allocation2 + $0x8] sm:$0xff]
    %v47 = vld [vmem:[#allocation2 + $0x10] sm:$0xff]
    %v48 = vld [vmem:[#allocation2 + $0x18] sm:$0xff]
    %v49 = vld [vmem:[#allocation2 + $0x20] sm:$0xf]
    %v50 = vld [vmem:[#allocation2 + $0x24] sm:$0xff]
    %v51 = vld [vmem:[#allocation2 + $0x2c] sm:$0xff]
    %v52 = vld [vmem:[#allocation2 + $0x34] sm:$0xff]
    %v53 = vld [vmem:[#allocation2 + $0x3c] sm:$0xff]
    %v54 = vld [vmem:[#allocation2 + $0x44] sm:$0xf]
    %v55 = vld [vmem:[#allocation2 + $0x48] sm:$0xff]
    %v56 = vld [vmem:[#allocation2 + $0x50] sm:$0xff]
    %v57 = vld [vmem:[#allocation2 + $0x58] sm:$0xff]
    %v58 = vld [vmem:[#allocation2 + $0x60] sm:$0xff]
    %v59 = vld [vmem:[#allocation2 + $0x68] sm:$0xf]
    %v60 = vld [vmem:[#allocation2 + $0x6c] sm:$0xff]
    %v61 = vld [vmem:[#allocation2 + $0x74] sm:$0xff]
    %v62 = vld [vmem:[#allocation2 + $0x7c] sm:$0xff]
    %v63 = vld [vmem:[#allocation2 + $0x84] sm:$0xff]
    %v64 = vld [vmem:[#allocation2 + $0x8c] sm:$0xf]
    %v65 = vld [vmem:[#allocation2 + $0x90] sm:$0xff]
    %v66 = vld [vmem:[#allocation2 + $0x98] sm:$0xff]
    %v67 = vld [vmem:[#allocation2 + $0xa0] sm:$0xff]
    %v68 = vld [vmem:[#allocation2 + $0xa8] sm:$0xff]
    %v69 = vld [vmem:[#allocation2 + $0xb0] sm:$0xf]
    %v70 = vld [vmem:[#allocation2 + $0xb4] sm:$0xff]
    %v71 = vld [vmem:[#allocation2 + $0xbc] sm:$0xff]
    %v72 = vld [vmem:[#allocation2 + $0xc4] sm:$0xff]
    %v73 = vld [vmem:[#allocation2 + $0xcc] sm:$0xff]
    %v74 = vld [vmem:[#allocation2 + $0xd4] sm:$0xf]
    %v75 = vld [vmem:[#allocation2 + $0xd8] sm:$0xff]
    %v76 = vld [vmem:[#allocation2 + $0xe0] sm:$0xff]
    %v77 = vld [vmem:[#allocation2 + $0xe8] sm:$0xff]
    %v78 = vld [vmem:[#allocation2 + $0xf0] sm:$0xff]
    %v79 = vld [vmem:[#allocation2 + $0xf8] sm:$0xf]
    %v80 = vld [vmem:[#allocation2 + $0xfc] sm:$0xff]
    %v81 = vld [vmem:[#allocation2 + $0x104] sm:$0xff]
    %v82 = vld [vmem:[#allocation2 + $0x10c] sm:$0xff]
    %v83 = vld [vmem:[#allocation2 + $0x114] sm:$0xff]
    %v84 = vld [vmem:[#allocation2 + $0x11c] sm:$0xf]
    %v85 = vld [vmem:[#allocation2 + $0x120] sm:$0xff]
    %v86 = vld [vmem:[#allocation2 + $0x128] sm:$0xff]
    %v87 = vld [vmem:[#allocation2 + $0x130] sm:$0xff]
    %v88 = vld [vmem:[#allocation2 + $0x138] sm:$0xff]
    %v89 = vld [vmem:[#allocation2 + $0x140] sm:$0xf]
    %v90 = vld [vmem:[#allocation2 + $0x144] sm:$0xff]
    %v91 = vld [vmem:[#allocation2 + $0x14c] sm:$0xff]
    %v92 = vld [vmem:[#allocation2 + $0x154] sm:$0xff]
    %v93 = vld [vmem:[#allocation2 + $0x15c] sm:$0xff]
    %v94 = vld [vmem:[#allocation2 + $0x164] sm:$0xf]
    %v95 = vld [vmem:[#allocation2 + $0x168] sm:$0xff]
    %v96 = vld [vmem:[#allocation2 + $0x170] sm:$0xff]
    %v97 = vld [vmem:[#allocation2 + $0x178] sm:$0xff]
    %v98 = vld [vmem:[#allocation2 + $0x180] sm:$0xff]
    %v99 = vld [vmem:[#allocation2 + $0x188] sm:$0xf]
    %v100 = vld [vmem:[#allocation2 + $0x18c] sm:$0xff]
    %v101 = vld [vmem:[#allocation2 + $0x194] sm:$0xff]
    %v102 = vld [vmem:[#allocation2 + $0x19c] sm:$0xff]
    %v103 = vld [vmem:[#allocation2 + $0x1a4] sm:$0xff]
    %v104 = vld [vmem:[#allocation2 + $0x1ac] sm:$0xf]
    %v105 = vld [vmem:[#allocation2 + $0x1b0] sm:$0xff]
    %v106 = vld [vmem:[#allocation2 + $0x1b8] sm:$0xff]
    %v107 = vld [vmem:[#allocation2 + $0x1c0] sm:$0xff]
    %v108 = vld [vmem:[#allocation2 + $0x1c8] sm:$0xff]
    %v109 = vld [vmem:[#allocation2 + $0x1d0] sm:$0xf]
    %v110 = vld [vmem:[#allocation2 + $0x1d4] sm:$0xff]
    %v111 = vld [vmem:[#allocation2 + $0x1dc] sm:$0xff]
    %v112 = vld [vmem:[#allocation2 + $0x1e4] sm:$0xff]
    %v113 = vld [vmem:[#allocation2 + $0x1ec] sm:$0xff]
    %v114 = vld [vmem:[#allocation2 + $0x1f4] sm:$0xf]
    %v115 = vld [vmem:[#allocation2 + $0x1f8] sm:$0xff]
    %v116 = vld [vmem:[#allocation2 + $0x200] sm:$0xff]
    %v117 = vld [vmem:[#allocation2 + $0x208] sm:$0xff]
    %v118 = vld [vmem:[#allocation2 + $0x210] sm:$0xff]
    %v119 = vld [vmem:[#allocation2 + $0x218] sm:$0xf]
    %v120 = vld [vmem:[#allocation2 + $0x21c] sm:$0xff]
    %v121 = vld [vmem:[#allocation2 + $0x224] sm:$0xff]
    %v122 = vld [vmem:[#allocation2 + $0x22c] sm:$0xff]
    %v123 = vld [vmem:[#allocation2 + $0x234] sm:$0xff]
    %v124 = vld [vmem:[#allocation2 + $0x23c] sm:$0xf]
    %v125 = vld [vmem:[#allocation2 + $0x240] sm:$0xff]
    %v126 = vld [vmem:[#allocation2 + $0x248] sm:$0xff]
    %v127 = vld [vmem:[#allocation2 + $0x250] sm:$0xff]
    %v128 = vld [vmem:[#allocation2 + $0x258] sm:$0xff]
    %v129 = vld [vmem:[#allocation2 + $0x260] sm:$0xf]
    %v130 = vld [vmem:[#allocation2 + $0x264] sm:$0xff]
    %v131 = vld [vmem:[#allocation2 + $0x26c] sm:$0xff]
    %v132 = vld [vmem:[#allocation2 + $0x274] sm:$0xff]
    %v133 = vld [vmem:[#allocation2 + $0x27c] sm:$0xff]
    %v134 = vld [vmem:[#allocation2 + $0x284] sm:$0xf]
    %v135 = vld [vmem:[#allocation2 + $0x288] sm:$0xff]
    %v136 = vld [vmem:[#allocation2 + $0x290] sm:$0xff]
    %v137 = vld [vmem:[#allocation2 + $0x298] sm:$0xff]
    %v138 = vld [vmem:[#allocation2 + $0x2a0] sm:$0xff]
    %v139 = vld [vmem:[#allocation2 + $0x2a8] sm:$0xf]
    %v140 = vld [vmem:[#allocation2 + $0x2ac] sm:$0xff]
    %v141 = vld [vmem:[#allocation2 + $0x2b4] sm:$0xff]
    %v142 = vld [vmem:[#allocation2 + $0x2bc] sm:$0xff]
    %v143 = vld [vmem:[#allocation2 + $0x2c4] sm:$0xff]
    %v144 = vld [vmem:[#allocation2 + $0x2cc] sm:$0xf]
    %v145 = vld [vmem:[#allocation2 + $0x2d0] sm:$0xff]
    %v146 = vld [vmem:[#allocation2 + $0x2d8] sm:$0xff]
    %v147 = vld [vmem:[#allocation2 + $0x2e0] sm:$0xff]
    %v148 = vld [vmem:[#allocation2 + $0x2e8] sm:$0xff]
    %v149 = vld [vmem:[#allocation2 + $0x2f0] sm:$0xf]
    %v150 = vld [vmem:[#allocation2 + $0x2f4] sm:$0xff]
    %v151 = vld [vmem:[#allocation2 + $0x2fc] sm:$0xff]
    %v152 = vld [vmem:[#allocation2 + $0x304] sm:$0xff]
    %v153 = vld [vmem:[#allocation2 + $0x30c] sm:$0xff]
    %v154 = vld [vmem:[#allocation2 + $0x314] sm:$0xf]
    %v155 = vld [vmem:[#allocation2 + $0x318] sm:$0xff]
    %v156 = vld [vmem:[#allocation2 + $0x320] sm:$0xff]
    %v157 = vld [vmem:[#allocation2 + $0x328] sm:$0xff]
    %v158 = vld [vmem:[#allocation2 + $0x330] sm:$0xff]
    %v159 = vld [vmem:[#allocation2 + $0x338] sm:$0xf]
    %v160 = vld [vmem:[#allocation2 + $0x33c] sm:$0xff]
    %v161 = vld [vmem:[#allocation2 + $0x344] sm:$0xff]
    %v162 = vld [vmem:[#allocation2 + $0x34c] sm:$0xff]
    %v163 = vld [vmem:[#allocation2 + $0x354] sm:$0xff]
    %v164 = vld [vmem:[#allocation2 + $0x35c] sm:$0xf]
    %v165 = vld [vmem:[#allocation2 + $0x360] sm:$0xff]
    %v166 = vld [vmem:[#allocation2 + $0x368] sm:$0xff]
    %v167 = vld [vmem:[#allocation2 + $0x370] sm:$0xff]
    %v168 = vld [vmem:[#allocation2 + $0x378] sm:$0xff]
    %v169 = vld [vmem:[#allocation2 + $0x380] sm:$0xf]
    %v170 = vld [vmem:[#allocation2 + $0x384] sm:$0xff]
    %v171 = vld [vmem:[#allocation2 + $0x38c] sm:$0xff]
    %v172 = vld [vmem:[#allocation2 + $0x394] sm:$0xff]
    %v173 = vld [vmem:[#allocation2 + $0x39c] sm:$0xff]
    %v174 = vld [vmem:[#allocation2 + $0x3a4] sm:$0xf]
    %v175 = vld [vmem:[#allocation2 + $0x3a8] sm:$0xff]
    %v176 = vld [vmem:[#allocation2 + $0x3b0] sm:$0xff]
    %v177 = vld [vmem:[#allocation2 + $0x3b8] sm:$0xff]
    %v178 = vld [vmem:[#allocation2 + $0x3c0] sm:$0xff]
    %v179 = vld [vmem:[#allocation2 + $0x3c8] sm:$0xf]
    %v180 = vld [vmem:[#allocation2 + $0x3cc] sm:$0xff]
    %v181 = vld [vmem:[#allocation2 + $0x3d4] sm:$0xff]
    %v182 = vld [vmem:[#allocation2 + $0x3dc] sm:$0xff]
    %v183 = vld [vmem:[#allocation2 + $0x3e4] sm:$0xff]
    %v184 = vld [vmem:[#allocation2 + $0x3ec] sm:$0xf]
    %v185 = vld [vmem:[#allocation2 + $0x3f0] sm:$0xff]
    %v186 = vld [vmem:[#allocation2 + $0x3f8] sm:$0xff]
    %v187 = vld [vmem:[#allocation2 + $0x400] sm:$0xff]
    %v188 = vld [vmem:[#allocation2 + $0x408] sm:$0xff]
    %v189 = vld [vmem:[#allocation2 + $0x410] sm:$0xf]
    %v190 = vld [vmem:[#allocation2 + $0x414] sm:$0xff]
    %v191 = vld [vmem:[#allocation2 + $0x41c] sm:$0xff]
    %v192 = vld [vmem:[#allocation2 + $0x424] sm:$0xff]
    %v193 = vld [vmem:[#allocation2 + $0x42c] sm:$0xff]
    %v194 = vld [vmem:[#allocation2 + $0x434] sm:$0xf]
    %v195 = vld [vmem:[#allocation2 + $0x438] sm:$0xff]
    %v196 = vld [vmem:[#allocation2 + $0x440] sm:$0xff]
    %v197 = vld [vmem:[#allocation2 + $0x448] sm:$0xff]
    %v198 = vld [vmem:[#allocation2 + $0x450] sm:$0xff]
    %v199 = vld [vmem:[#allocation2 + $0x458] sm:$0xf]
    %v200 = vld [vmem:[#allocation2 + $0x45c] sm:$0xff]
    %v201 = vld [vmem:[#allocation2 + $0x464] sm:$0xff]
    %v202 = vld [vmem:[#allocation2 + $0x46c] sm:$0xff]
    %v203 = vld [vmem:[#allocation2 + $0x474] sm:$0xff]
    %v204 = vld [vmem:[#allocation2 + $0x47c] sm:$0xf]
    %v205 = vld [vmem:[#allocation2 + $0x480] sm:$0xff]
    %v206 = vld [vmem:[#allocation2 + $0x488] sm:$0xff]
    %v207 = vld [vmem:[#allocation2 + $0x490] sm:$0xff]
    %v208 = vld [vmem:[#allocation2 + $0x498] sm:$0xff]
    %v209 = vld [vmem:[#allocation2 + $0x4a0] sm:$0xf]
    %v210 = vld [vmem:[#allocation2 + $0x4a4] sm:$0xff]
    %v211 = vld [vmem:[#allocation2 + $0x4ac] sm:$0xff]
    %v212 = vld [vmem:[#allocation2 + $0x4b4] sm:$0xff]
    %v213 = vld [vmem:[#allocation2 + $0x4bc] sm:$0xff]
    %v214 = vld [vmem:[#allocation2 + $0x4c4] sm:$0xf]
    %v215 = vld [vmem:[#allocation2 + $0x4c8] sm:$0xff]
    %v216 = vld [vmem:[#allocation2 + $0x4d0] sm:$0xff]
    %v217 = vld [vmem:[#allocation2 + $0x4d8] sm:$0xff]
    %v218 = vld [vmem:[#allocation2 + $0x4e0] sm:$0xff]
    %v219 = vld [vmem:[#allocation2 + $0x4e8] sm:$0xf]
    %v220 = vld [vmem:[#allocation2 + $0x4ec] sm:$0xff]
    %v221 = vld [vmem:[#allocation2 + $0x4f4] sm:$0xff]
    %v222 = vld [vmem:[#allocation2 + $0x4fc] sm:$0xff]
    %v223 = vld [vmem:[#allocation2 + $0x504] sm:$0xff]
    %v224 = vld [vmem:[#allocation2 + $0x50c] sm:$0xf]
    %v225 = vld [vmem:[#allocation2 + $0x510] sm:$0xff]
    %v226 = vld [vmem:[#allocation2 + $0x518] sm:$0xff]
    %v227 = vld [vmem:[#allocation2 + $0x520] sm:$0xff]
    %v228 = vld [vmem:[#allocation2 + $0x528] sm:$0xff]
    %v229 = vld [vmem:[#allocation2 + $0x530] sm:$0xf]
    %v230 = vld [vmem:[#allocation2 + $0x534] sm:$0xff]
    %v231 = vld [vmem:[#allocation2 + $0x53c] sm:$0xff]
    %v232 = vld [vmem:[#allocation2 + $0x544] sm:$0xff]
    %v233 = vld [vmem:[#allocation2 + $0x54c] sm:$0xff]
    %v234 = vld [vmem:[#allocation2 + $0x554] sm:$0xf]
    %v235 = vld [vmem:[#allocation2 + $0x558] sm:$0xff]
    %v236 = vld [vmem:[#allocation2 + $0x560] sm:$0xff]
    %v237 = vld [vmem:[#allocation2 + $0x568] sm:$0xff]
    %v238 = vld [vmem:[#allocation2 + $0x570] sm:$0xff]
    %v239 = vld [vmem:[#allocation2 + $0x578] sm:$0xf]
    %v240 = vld [vmem:[#allocation2 + $0x57c] sm:$0xff]
    %v241 = vld [vmem:[#allocation2 + $0x584] sm:$0xff]
    %v242 = vld [vmem:[#allocation2 + $0x58c] sm:$0xff]
    %v243 = vld [vmem:[#allocation2 + $0x594] sm:$0xff]
    %v244 = vld [vmem:[#allocation2 + $0x59c] sm:$0xf]
    %v245 = vld [vmem:[#allocation2 + $0x5a0] sm:$0xff]
    %v246 = vld [vmem:[#allocation2 + $0x5a8] sm:$0xff]
    %v247 = vld [vmem:[#allocation2 + $0x5b0] sm:$0xff]
    %v248 = vld [vmem:[#allocation2 + $0x5b8] sm:$0xff]
    %v249 = vld [vmem:[#allocation2 + $0x5c0] sm:$0xf]
    %v250 = vld [vmem:[#allocation2 + $0x5c4] sm:$0xff]
    %v251 = vld [vmem:[#allocation2 + $0x5cc] sm:$0xff]
    %v252 = vld [vmem:[#allocation2 + $0x5d4] sm:$0xff]
    %v253 = vld [vmem:[#allocation2 + $0x5dc] sm:$0xff]
    %v254 = vld [vmem:[#allocation2 + $0x5e4] sm:$0xf]
    %v255 = vld [vmem:[#allocation2 + $0x5e8] sm:$0xff]
    %v256 = vld [vmem:[#allocation2 + $0x5f0] sm:$0xff]
    %v257 = vld [vmem:[#allocation2 + $0x5f8] sm:$0xff]
    %v258 = vld [vmem:[#allocation2 + $0x600] sm:$0xff]
    %v259 = vld [vmem:[#allocation2 + $0x608] sm:$0xf]
    %v260 = vld [vmem:[#allocation2 + $0x60c] sm:$0xff]
    %v261 = vld [vmem:[#allocation2 + $0x614] sm:$0xff]
    %v262 = vld [vmem:[#allocation2 + $0x61c] sm:$0xff]
    %v263 = vld [vmem:[#allocation2 + $0x624] sm:$0xff]
    %v264 = vld [vmem:[#allocation2 + $0x62c] sm:$0xf]
    %v265 = vld [vmem:[#allocation2 + $0x630] sm:$0xff]
    %v266 = vld [vmem:[#allocation2 + $0x638] sm:$0xff]
    %v267 = vld [vmem:[#allocation2 + $0x640] sm:$0xff]
    %v268 = vld [vmem:[#allocation2 + $0x648] sm:$0xff]
    %v269 = vld [vmem:[#allocation2 + $0x650] sm:$0xf]
    %v270 = vld [vmem:[#allocation2 + $0x654] sm:$0xff]
    %v271 = vld [vmem:[#allocation2 + $0x65c] sm:$0xff]
    %v272 = vld [vmem:[#allocation2 + $0x664] sm:$0xff]
    %v273 = vld [vmem:[#allocation2 + $0x66c] sm:$0xff]
    %v274 = vld [vmem:[#allocation2 + $0x674] sm:$0xf]
    %v275 = vld [vmem:[#allocation2 + $0x678] sm:$0xff]
    %v276 = vld [vmem:[#allocation2 + $0x680] sm:$0xff]
    %v277 = vld [vmem:[#allocation2 + $0x688] sm:$0xff]
    %v278 = vld [vmem:[#allocation2 + $0x690] sm:$0xff]
    %v279 = vld [vmem:[#allocation2 + $0x698] sm:$0xf]
    %v280 = vld [vmem:[#allocation2 + $0x69c] sm:$0xff]
    %v281 = vld [vmem:[#allocation2 + $0x6a4] sm:$0xff]
    %v282 = vld [vmem:[#allocation2 + $0x6ac] sm:$0xff]
    %v283 = vld [vmem:[#allocation2 + $0x6b4] sm:$0xff]
    %v284 = vld [vmem:[#allocation2 + $0x6bc] sm:$0xf]
    %v285 = vld [vmem:[#allocation2 + $0x6c0] sm:$0xff]
    %v286 = vld [vmem:[#allocation2 + $0x6c8] sm:$0xff]
    %v287 = vld [vmem:[#allocation2 + $0x6d0] sm:$0xff]
    %v288 = vld [vmem:[#allocation2 + $0x6d8] sm:$0xff]
    %v289 = vld [vmem:[#allocation2 + $0x6e0] sm:$0xf]
    %v290 = vld [vmem:[#allocation2 + $0x6e4] sm:$0xff]
    %v291 = vld [vmem:[#allocation2 + $0x6ec] sm:$0xff]
    %v292 = vld [vmem:[#allocation2 + $0x6f4] sm:$0xff]
    %v293 = vld [vmem:[#allocation2 + $0x6fc] sm:$0xff]
    %v294 = vld [vmem:[#allocation2 + $0x704] sm:$0xf]
    %v295 = vld [vmem:[#allocation2 + $0x708] sm:$0xff]
    %v296 = vld [vmem:[#allocation2 + $0x710] sm:$0xff]
    %v297 = vld [vmem:[#allocation2 + $0x718] sm:$0xff]
    %v298 = vld [vmem:[#allocation2 + $0x720] sm:$0xff]
    %v299 = vld [vmem:[#allocation2 + $0x728] sm:$0xf]
    %v300 = vld [vmem:[#allocation2 + $0x72c] sm:$0xff]
    %v301 = vld [vmem:[#allocation2 + $0x734] sm:$0xff]
    %v302 = vld [vmem:[#allocation2 + $0x73c] sm:$0xff]
    %v303 = vld [vmem:[#allocation2 + $0x744] sm:$0xff]
    %v304 = vld [vmem:[#allocation2 + $0x74c] sm:$0xf]
    %v305 = vld [vmem:[#allocation2 + $0x750] sm:$0xff]
    %v306 = vld [vmem:[#allocation2 + $0x758] sm:$0xff]
    %v307 = vld [vmem:[#allocation2 + $0x760] sm:$0xff]
    %v308 = vld [vmem:[#allocation2 + $0x768] sm:$0xff]
    %v309 = vld [vmem:[#allocation2 + $0x770] sm:$0xf]
    %v310 = vld [vmem:[#allocation2 + $0x774] sm:$0xff]
    %v311 = vld [vmem:[#allocation2 + $0x77c] sm:$0xff]
    %v312 = vld [vmem:[#allocation2 + $0x784] sm:$0xff]
    %v313 = vld [vmem:[#allocation2 + $0x78c] sm:$0xff]
    %v314 = vld [vmem:[#allocation2 + $0x794] sm:$0xf]
    %v315 = vld [vmem:[#allocation2 + $0x798] sm:$0xff]
    %v316 = vld [vmem:[#allocation2 + $0x7a0] sm:$0xff]
    %v317 = vld [vmem:[#allocation2 + $0x7a8] sm:$0xff]
    %v318 = vld [vmem:[#allocation2 + $0x7b0] sm:$0xff]
    %v319 = vld [vmem:[#allocation2 + $0x7b8] sm:$0xf]
    %v320 = vld [vmem:[#allocation2 + $0x7bc] sm:$0xff]
    %v321 = vld [vmem:[#allocation2 + $0x7c4] sm:$0xff]
    %v322 = vld [vmem:[#allocation2 + $0x7cc] sm:$0xff]
    %v323 = vld [vmem:[#allocation2 + $0x7d4] sm:$0xff]
    %v324 = vld [vmem:[#allocation2 + $0x7dc] sm:$0xf]
    %v325 = vld [vmem:[#allocation2 + $0x7e0] sm:$0xff]
    %v326 = vld [vmem:[#allocation2 + $0x7e8] sm:$0xff]
    %v327 = vld [vmem:[#allocation2 + $0x7f0] sm:$0xff]
    %v328 = vld [vmem:[#allocation2 + $0x7f8] sm:$0xff]
    %v329 = vld [vmem:[#allocation2 + $0x800] sm:$0xf]
    %v330 = vld [vmem:[#allocation2 + $0x804] sm:$0xff]
    %v331 = vld [vmem:[#allocation2 + $0x80c] sm:$0xff]
    %v332 = vld [vmem:[#allocation2 + $0x814] sm:$0xff]
    %v333 = vld [vmem:[#allocation2 + $0x81c] sm:$0xff]
    %v334 = vld [vmem:[#allocation2 + $0x824] sm:$0xf]
    %v335 = vld [vmem:[#allocation2 + $0x828] sm:$0xff]
    %v336 = vld [vmem:[#allocation2 + $0x830] sm:$0xff]
    %v337 = vld [vmem:[#allocation2 + $0x838] sm:$0xff]
    %v338 = vld [vmem:[#allocation2 + $0x840] sm:$0xff]
    %v339 = vld [vmem:[#allocation2 + $0x848] sm:$0xf]
    %v340 = vld [vmem:[#allocation2 + $0x84c] sm:$0xff]
    %v341 = vld [vmem:[#allocation2 + $0x854] sm:$0xff]
    %v342 = vld [vmem:[#allocation2 + $0x85c] sm:$0xff]
    %v343 = vld [vmem:[#allocation2 + $0x864] sm:$0xff]
    %v344 = vld [vmem:[#allocation2 + $0x86c] sm:$0xf]
    %v345 = vld [vmem:[#allocation2 + $0x870] sm:$0xff]
    %v346 = vld [vmem:[#allocation2 + $0x878] sm:$0xff]
    %v347 = vld [vmem:[#allocation2 + $0x880] sm:$0xff]
    %v348 = vld [vmem:[#allocation2 + $0x888] sm:$0xff]
    %v349 = vld [vmem:[#allocation2 + $0x890] sm:$0xf]
    %v350 = vld [vmem:[#allocation2 + $0x894] sm:$0xff]
    %v351 = vld [vmem:[#allocation2 + $0x89c] sm:$0xff]
    %v352 = vld [vmem:[#allocation2 + $0x8a4] sm:$0xff]
    %v353 = vld [vmem:[#allocation2 + $0x8ac] sm:$0xff]
    %v354 = vld [vmem:[#allocation2 + $0x8b4] sm:$0xf]
    %v355 = vld [vmem:[#allocation2 + $0x8b8] sm:$0xff]
    %v356 = vld [vmem:[#allocation2 + $0x8c0] sm:$0xff]
    %v357 = vld [vmem:[#allocation2 + $0x8c8] sm:$0xff]
    %v358 = vld [vmem:[#allocation2 + $0x8d0] sm:$0xff]
    %v359 = vld [vmem:[#allocation2 + $0x8d8] sm:$0xf]
    %v360 = vld [vmem:[#allocation2 + $0x8dc] sm:$0xff]
    %v361 = vld [vmem:[#allocation2 + $0x8e4] sm:$0xff]
    %v362 = vld [vmem:[#allocation2 + $0x8ec] sm:$0xff]
    %v363 = vld [vmem:[#allocation2 + $0x8f4] sm:$0xff]
    %v364 = vld [vmem:[#allocation2 + $0x8fc] sm:$0xf]
    %v365 = vld [vmem:[#allocation5] sm:$0xf]
    %v366 = vld [vmem:[#allocation5 + $0x4] sm:$0xf]
    %v367 = vld [vmem:[#allocation5 + $0x8] sm:$0xf]
    %v368 = vld [vmem:[#allocation5 + $0xc] sm:$0xf]
    %v369 = vld [vmem:[#allocation5 + $0x10] sm:$0xf]
    %v370 = vld [vmem:[#allocation5 + $0x14] sm:$0xf]
    %v371 = vld [vmem:[#allocation5 + $0x18] sm:$0xf]
    %v372 = vld [vmem:[#allocation5 + $0x1c] sm:$0xf]
    %v373 = vld [vmem:[#allocation5 + $0x20] sm:$0xf]
    %v374 = vld [vmem:[#allocation5 + $0x24] sm:$0xf]
    %v375 = vld [vmem:[#allocation5 + $0x28] sm:$0xf]
    %v376 = vld [vmem:[#allocation5 + $0x2c] sm:$0xf]
    %v377 = vld [vmem:[#allocation5 + $0x30] sm:$0xf]
    %v378 = vld [vmem:[#allocation5 + $0x34] sm:$0xf]
    %v379 = vld [vmem:[#allocation5 + $0x38] sm:$0xf]
    %v380 = vld [vmem:[#allocation5 + $0x3c] sm:$0xf]
    %v381 = vld [vmem:[#allocation5 + $0x40] sm:$0xf]
    %v382 = vld [vmem:[#allocation5 + $0x44] sm:$0xf]
    %v383 = vld [vmem:[#allocation5 + $0x48] sm:$0xf]
    %v384 = vld [vmem:[#allocation5 + $0x4c] sm:$0xf]
    %v385 = vld [vmem:[#allocation5 + $0x50] sm:$0xf]
    %v386 = vld [vmem:[#allocation5 + $0x54] sm:$0xf]
    %v387 = vld [vmem:[#allocation5 + $0x58] sm:$0xf]
    %v388 = vld [vmem:[#allocation5 + $0x5c] sm:$0xf]
    %v389 = vld [vmem:[#allocation5 + $0x60] sm:$0xf]
    %v390 = vld [vmem:[#allocation5 + $0x64] sm:$0xf]
    %v391 = vld [vmem:[#allocation5 + $0x68] sm:$0xf]
    %v392 = vld [vmem:[#allocation5 + $0x6c] sm:$0xf]
    %v393 = vld [vmem:[#allocation5 + $0x70] sm:$0xf]
    %v394 = vld [vmem:[#allocation5 + $0x74] sm:$0xf]
    %v395 = vld [vmem:[#allocation5 + $0x78] sm:$0xf]
    %v396 = vld [vmem:[#allocation5 + $0x7c] sm:$0xf]
    %v397 = vld [vmem:[#allocation5 + $0x80] sm:$0xf]
    %v398 = vld [vmem:[#allocation5 + $0x84] sm:$0xf]
    %v399 = vld [vmem:[#allocation5 + $0x88] sm:$0xf]
    %v400 = vld [vmem:[#allocation5 + $0x8c] sm:$0xf]
    %v401 = vld [vmem:[#allocation5 + $0x90] sm:$0xf]
    %v402 = vld [vmem:[#allocation5 + $0x94] sm:$0xf]
    %v403 = vld [vmem:[#allocation5 + $0x98] sm:$0xf]
    %v404 = vld [vmem:[#allocation5 + $0x9c] sm:$0xf]
    %v405 = vld [vmem:[#allocation5 + $0xa0] sm:$0xf]
    %v406 = vld [vmem:[#allocation5 + $0xa4] sm:$0xf]
    %v407 = vld [vmem:[#allocation5 + $0xa8] sm:$0xf]
    %v408 = vld [vmem:[#allocation5 + $0xac] sm:$0xf]
    %v409 = vld [vmem:[#allocation5 + $0xb0] sm:$0xf]
    %v410 = vld [vmem:[#allocation5 + $0xb4] sm:$0xf]
    %v411 = vld [vmem:[#allocation5 + $0xb8] sm:$0xf]
    %v412 = vld [vmem:[#allocation5 + $0xbc] sm:$0xf]
    %v413 = vld [vmem:[#allocation5 + $0xc0] sm:$0xf]
    %v414 = vld [vmem:[#allocation5 + $0xc4] sm:$0xf]
    %v415 = vld [vmem:[#allocation5 + $0xc8] sm:$0xf]
    %v416 = vld [vmem:[#allocation5 + $0xcc] sm:$0xf]
    %v417 = vld [vmem:[#allocation5 + $0xd0] sm:$0xf]
    %v418 = vld [vmem:[#allocation5 + $0xd4] sm:$0xf]
    %v419 = vld [vmem:[#allocation5 + $0xd8] sm:$0xf]
    %v420 = vld [vmem:[#allocation5 + $0xdc] sm:$0xf]
    %v421 = vld [vmem:[#allocation5 + $0xe0] sm:$0xf]
    %v422 = vld [vmem:[#allocation5 + $0xe4] sm:$0xf]
    %v423 = vld [vmem:[#allocation5 + $0xe8] sm:$0xf]
    %v424 = vld [vmem:[#allocation5 + $0xec] sm:$0xf]
    %v425 = vld [vmem:[#allocation5 + $0xf0] sm:$0xf]
    %v426 = vld [vmem:[#allocation5 + $0xf4] sm:$0xf]
    %v427 = vld [vmem:[#allocation5 + $0xf8] sm:$0xf]
    %v428 = vld [vmem:[#allocation5 + $0xfc] sm:$0xf]
    %v429 = vld [vmem:[#allocation5 + $0x100] sm:$0xf]
    %v430 = vld [vmem:[#allocation5 + $0x104] sm:$0xf]
    %v431 = vld [vmem:[#allocation5 + $0x108] sm:$0xf]
    %v432 = vld [vmem:[#allocation5 + $0x10c] sm:$0xf]
    %v433 = vld [vmem:[#allocation5 + $0x110] sm:$0xf]
    %v434 = vld [vmem:[#allocation5 + $0x114] sm:$0xf]
    %v435 = vld [vmem:[#allocation5 + $0x118] sm:$0xf]
    %v436 = vld [vmem:[#allocation5 + $0x11c] sm:$0xf]
    %v437 = vld [vmem:[#allocation5 + $0x120] sm:$0xf]
    %v438 = vld [vmem:[#allocation5 + $0x124] sm:$0xf]
    %v439 = vld [vmem:[#allocation5 + $0x128] sm:$0xf]
    %v440 = vld [vmem:[#allocation5 + $0x12c] sm:$0xf]
    %v441 = vld [vmem:[#allocation5 + $0x130] sm:$0xf]
    %v442 = vld [vmem:[#allocation5 + $0x134] sm:$0xf]
    %v443 = vld [vmem:[#allocation5 + $0x138] sm:$0xf]
    %v444 = vld [vmem:[#allocation5 + $0x13c] sm:$0xf]
    %v445 = vld [vmem:[#allocation5 + $0x140] sm:$0xf]
    %v446 = vld [vmem:[#allocation5 + $0x144] sm:$0xf]
    %v447 = vld [vmem:[#allocation5 + $0x148] sm:$0xf]
    %v448 = vld [vmem:[#allocation5 + $0x14c] sm:$0xf]
    %v449 = vld [vmem:[#allocation5 + $0x150] sm:$0xf]
    %v450 = vld [vmem:[#allocation5 + $0x154] sm:$0xf]
    %v451 = vld [vmem:[#allocation5 + $0x158] sm:$0xf]
    %v452 = vld [vmem:[#allocation5 + $0x15c] sm:$0xf]
    %v453 = vld [vmem:[#allocation5 + $0x160] sm:$0xf]
    %v454 = vld [vmem:[#allocation5 + $0x164] sm:$0xf]
    %v455 = vld [vmem:[#allocation5 + $0x168] sm:$0xf]
    %v456 = vld [vmem:[#allocation5 + $0x16c] sm:$0xf]
    %v457 = vld [vmem:[#allocation5 + $0x170] sm:$0xf]
    %v458 = vld [vmem:[#allocation5 + $0x174] sm:$0xf]
    %v459 = vld [vmem:[#allocation5 + $0x178] sm:$0xf]
    %v460 = vld [vmem:[#allocation5 + $0x17c] sm:$0xf]
    %v461 = vld [vmem:[#allocation5 + $0x180] sm:$0xf]
    %v462 = vld [vmem:[#allocation5 + $0x184] sm:$0xf]
    %v463 = vld [vmem:[#allocation5 + $0x188] sm:$0xf]
    %v464 = vld [vmem:[#allocation5 + $0x18c] sm:$0xf]
    %v465 = vld [vmem:[#allocation5 + $0x190] sm:$0xf]
    %v466 = vld [vmem:[#allocation5 + $0x194] sm:$0xf]
    %v467 = vld [vmem:[#allocation5 + $0x198] sm:$0xf]
    %v468 = vld [vmem:[#allocation5 + $0x19c] sm:$0xf]
    %v469 = vld [vmem:[#allocation5 + $0x1a0] sm:$0xf]
    %v470 = vld [vmem:[#allocation5 + $0x1a4] sm:$0xf]
    %v471 = vld [vmem:[#allocation5 + $0x1a8] sm:$0xf]
    %v472 = vld [vmem:[#allocation5 + $0x1ac] sm:$0xf]
    %v473 = vld [vmem:[#allocation5 + $0x1b0] sm:$0xf]
    %v474 = vld [vmem:[#allocation5 + $0x1b4] sm:$0xf]
    %v475 = vld [vmem:[#allocation5 + $0x1b8] sm:$0xf]
    %v476 = vld [vmem:[#allocation5 + $0x1bc] sm:$0xf]
    %v477 = vld [vmem:[#allocation5 + $0x1c0] sm:$0xf]
    %v478 = vld [vmem:[#allocation5 + $0x1c4] sm:$0xf]
    %v479 = vld [vmem:[#allocation5 + $0x1c8] sm:$0xf]
    %v480 = vld [vmem:[#allocation5 + $0x1cc] sm:$0xf]
    %v481 = vld [vmem:[#allocation5 + $0x1d0] sm:$0xf]
    %v482 = vld [vmem:[#allocation5 + $0x1d4] sm:$0xf]
    %v483 = vld [vmem:[#allocation5 + $0x1d8] sm:$0xf]
    %v484 = vld [vmem:[#allocation5 + $0x1dc] sm:$0xf]
    %v485 = vld [vmem:[#allocation5 + $0x1e0] sm:$0xf]
    %v486 = vld [vmem:[#allocation5 + $0x1e4] sm:$0xf]
    %v487 = vld [vmem:[#allocation5 + $0x1e8] sm:$0xf]
    %v488 = vld [vmem:[#allocation5 + $0x1ec] sm:$0xf]
    %v489 = vld [vmem:[#allocation5 + $0x1f0] sm:$0xf]
    %v490 = vld [vmem:[#allocation5 + $0x1f4] sm:$0xf]
    %v491 = vld [vmem:[#allocation5 + $0x1f8] sm:$0xf]
    %v492 = vld [vmem:[#allocation5 + $0x1fc] sm:$0xf]
    %v493 = vld [vmem:[#allocation5 + $0x200] sm:$0xf]
    %v494 = vld [vmem:[#allocation5 + $0x204] sm:$0xf]
    %v495 = vld [vmem:[#allocation5 + $0x208] sm:$0xf]
    %v496 = vld [vmem:[#allocation5 + $0x20c] sm:$0xf]
    %v497 = vld [vmem:[#allocation5 + $0x210] sm:$0xf]
    %v498 = vld [vmem:[#allocation5 + $0x214] sm:$0xf]
    %v499 = vld [vmem:[#allocation5 + $0x218] sm:$0xf]
    %v500 = vld [vmem:[#allocation5 + $0x21c] sm:$0xf]
    %v501 = vld [vmem:[#allocation5 + $0x220] sm:$0xf]
    %v502 = vld [vmem:[#allocation5 + $0x224] sm:$0xf]
    %v503 = vld [vmem:[#allocation5 + $0x228] sm:$0xf]
    %v504 = vld [vmem:[#allocation5 + $0x22c] sm:$0xf]
    %v505 = vld [vmem:[#allocation5 + $0x230] sm:$0xf]
    %v506 = vld [vmem:[#allocation5 + $0x234] sm:$0xf]
    %v507 = vld [vmem:[#allocation5 + $0x238] sm:$0xf]
    %v508 = vld [vmem:[#allocation5 + $0x23c] sm:$0xf]
    %v829 = vunpack.c.l.b16 %v45
    %v830 = vunpack.c.h.b16 %v45
    %v831 = vunpack.c.l.b16 %v46
    %v832 = vunpack.c.h.b16 %v46
    %v833 = vunpack.c.l.b16 %v47
    %v834 = vunpack.c.h.b16 %v47
    %v835 = vunpack.c.l.b16 %v48
    %v836 = vunpack.c.h.b16 %v48
    %v837 = vunpack.c.l.b16 %v49
    %v838 = vunpack.c.l.b16 %v50
    %v839 = vunpack.c.h.b16 %v50
    %v840 = vunpack.c.l.b16 %v51
    %v841 = vunpack.c.h.b16 %v51
    %v842 = vunpack.c.l.b16 %v52
    %v843 = vunpack.c.h.b16 %v52
    %v844 = vunpack.c.l.b16 %v53
    %v845 = vunpack.c.h.b16 %v53
    %v846 = vunpack.c.l.b16 %v54
    %v847 = vunpack.c.l.b16 %v55
    %v848 = vunpack.c.h.b16 %v55
    %v849 = vunpack.c.l.b16 %v56
    %v850 = vunpack.c.h.b16 %v56
    %v851 = vunpack.c.l.b16 %v57
    %v852 = vunpack.c.h.b16 %v57
    %v853 = vunpack.c.l.b16 %v58
    %v854 = vunpack.c.h.b16 %v58
    %v855 = vunpack.c.l.b16 %v59
    %v856 = vunpack.c.l.b16 %v60
    %v857 = vunpack.c.h.b16 %v60
    %v858 = vunpack.c.l.b16 %v61
    %v859 = vunpack.c.h.b16 %v61
    %v860 = vunpack.c.l.b16 %v62
    %v861 = vunpack.c.h.b16 %v62
    %v862 = vunpack.c.l.b16 %v63
    %v863 = vunpack.c.h.b16 %v63
    %v864 = vunpack.c.l.b16 %v64
    %v865 = vunpack.c.l.b16 %v65
    %v866 = vunpack.c.h.b16 %v65
    %v867 = vunpack.c.l.b16 %v66
    %v868 = vunpack.c.h.b16 %v66
    %v869 = vunpack.c.l.b16 %v67
    %v870 = vunpack.c.h.b16 %v67
    %v871 = vunpack.c.l.b16 %v68
    %v872 = vunpack.c.h.b16 %v68
    %v873 = vunpack.c.l.b16 %v69
    %v874 = vunpack.c.l.b16 %v70
    %v875 = vunpack.c.h.b16 %v70
    %v876 = vunpack.c.l.b16 %v71
    %v877 = vunpack.c.h.b16 %v71
    %v878 = vunpack.c.l.b16 %v72
    %v879 = vunpack.c.h.b16 %v72
    %v880 = vunpack.c.l.b16 %v73
    %v881 = vunpack.c.h.b16 %v73
    %v882 = vunpack.c.l.b16 %v74
    %v883 = vunpack.c.l.b16 %v75
    %v884 = vunpack.c.h.b16 %v75
    %v885 = vunpack.c.l.b16 %v76
    %v886 = vunpack.c.h.b16 %v76
    %v887 = vunpack.c.l.b16 %v77
    %v888 = vunpack.c.h.b16 %v77
    %v889 = vunpack.c.l.b16 %v78
    %v890 = vunpack.c.h.b16 %v78
    %v891 = vunpack.c.l.b16 %v79
    %v892 = vunpack.c.l.b16 %v80
    %v893 = vunpack.c.h.b16 %v80
    %v894 = vunpack.c.l.b16 %v81
    %v895 = vunpack.c.h.b16 %v81
    %v896 = vunpack.c.l.b16 %v82
    %v897 = vunpack.c.h.b16 %v82
    %v898 = vunpack.c.l.b16 %v83
    %v899 = vunpack.c.h.b16 %v83
    %v900 = vunpack.c.l.b16 %v84
    %v901 = vunpack.c.l.b16 %v85
    %v902 = vunpack.c.h.b16 %v85
    %v903 = vunpack.c.l.b16 %v86
    %v904 = vunpack.c.h.b16 %v86
    %v905 = vunpack.c.l.b16 %v87
    %v906 = vunpack.c.h.b16 %v87
    %v907 = vunpack.c.l.b16 %v88
    %v908 = vunpack.c.h.b16 %v88
    %v909 = vunpack.c.l.b16 %v89
    %v910 = vunpack.c.l.b16 %v90
    %v911 = vunpack.c.h.b16 %v90
    %v912 = vunpack.c.l.b16 %v91
    %v913 = vunpack.c.h.b16 %v91
    %v914 = vunpack.c.l.b16 %v92
    %v915 = vunpack.c.h.b16 %v92
    %v916 = vunpack.c.l.b16 %v93
    %v917 = vunpack.c.h.b16 %v93
    %v918 = vunpack.c.l.b16 %v94
    %v919 = vunpack.c.l.b16 %v95
    %v920 = vunpack.c.h.b16 %v95
    %v921 = vunpack.c.l.b16 %v96
    %v922 = vunpack.c.h.b16 %v96
    %v923 = vunpack.c.l.b16 %v97
    %v924 = vunpack.c.h.b16 %v97
    %v925 = vunpack.c.l.b16 %v98
    %v926 = vunpack.c.h.b16 %v98
    %v927 = vunpack.c.l.b16 %v99
    %v928 = vunpack.c.l.b16 %v100
    %v929 = vunpack.c.h.b16 %v100
    %v930 = vunpack.c.l.b16 %v101
    %v931 = vunpack.c.h.b16 %v101
    %v932 = vunpack.c.l.b16 %v102
    %v933 = vunpack.c.h.b16 %v102
    %v934 = vunpack.c.l.b16 %v103
    %v935 = vunpack.c.h.b16 %v103
    %v936 = vunpack.c.l.b16 %v104
    %v937 = vunpack.c.l.b16 %v105
    %v938 = vunpack.c.h.b16 %v105
    %v939 = vunpack.c.l.b16 %v106
    %v940 = vunpack.c.h.b16 %v106
    %v941 = vunpack.c.l.b16 %v107
    %v942 = vunpack.c.h.b16 %v107
    %v943 = vunpack.c.l.b16 %v108
    %v944 = vunpack.c.h.b16 %v108
    %v945 = vunpack.c.l.b16 %v109
    %v946 = vunpack.c.l.b16 %v110
    %v947 = vunpack.c.h.b16 %v110
    %v948 = vunpack.c.l.b16 %v111
    %v949 = vunpack.c.h.b16 %v111
    %v950 = vunpack.c.l.b16 %v112
    %v951 = vunpack.c.h.b16 %v112
    %v952 = vunpack.c.l.b16 %v113
    %v953 = vunpack.c.h.b16 %v113
    %v954 = vunpack.c.l.b16 %v114
    %v955 = vunpack.c.l.b16 %v115
    %v956 = vunpack.c.h.b16 %v115
    %v957 = vunpack.c.l.b16 %v116
    %v958 = vunpack.c.h.b16 %v116
    %v959 = vunpack.c.l.b16 %v117
    %v960 = vunpack.c.h.b16 %v117
    %v961 = vunpack.c.l.b16 %v118
    %v962 = vunpack.c.h.b16 %v118
    %v963 = vunpack.c.l.b16 %v119
    %v964 = vunpack.c.l.b16 %v120
    %v965 = vunpack.c.h.b16 %v120
    %v966 = vunpack.c.l.b16 %v121
    %v967 = vunpack.c.h.b16 %v121
    %v968 = vunpack.c.l.b16 %v122
    %v969 = vunpack.c.h.b16 %v122
    %v970 = vunpack.c.l.b16 %v123
    %v971 = vunpack.c.h.b16 %v123
    %v972 = vunpack.c.l.b16 %v124
    %v973 = vunpack.c.l.b16 %v125
    %v974 = vunpack.c.h.b16 %v125
    %v975 = vunpack.c.l.b16 %v126
    %v976 = vunpack.c.h.b16 %v126
    %v977 = vunpack.c.l.b16 %v127
    %v978 = vunpack.c.h.b16 %v127
    %v979 = vunpack.c.l.b16 %v128
    %v980 = vunpack.c.h.b16 %v128
    %v981 = vunpack.c.l.b16 %v129
    %v982 = vunpack.c.l.b16 %v130
    %v983 = vunpack.c.h.b16 %v130
    %v984 = vunpack.c.l.b16 %v131
    %v985 = vunpack.c.h.b16 %v131
    %v986 = vunpack.c.l.b16 %v132
    %v987 = vunpack.c.h.b16 %v132
    %v988 = vunpack.c.l.b16 %v133
    %v989 = vunpack.c.h.b16 %v133
    %v990 = vunpack.c.l.b16 %v134
    %v991 = vunpack.c.l.b16 %v135
    %v992 = vunpack.c.h.b16 %v135
    %v993 = vunpack.c.l.b16 %v136
    %v994 = vunpack.c.h.b16 %v136
    %v995 = vunpack.c.l.b16 %v137
    %v996 = vunpack.c.h.b16 %v137
    %v997 = vunpack.c.l.b16 %v138
    %v998 = vunpack.c.h.b16 %v138
    %v999 = vunpack.c.l.b16 %v139
    %v1000 = vunpack.c.l.b16 %v140
    %v1001 = vunpack.c.h.b16 %v140
    %v1002 = vunpack.c.l.b16 %v141
    %v1003 = vunpack.c.h.b16 %v141
    %v1004 = vunpack.c.l.b16 %v142
    %v1005 = vunpack.c.h.b16 %v142
    %v1006 = vunpack.c.l.b16 %v143
    %v1007 = vunpack.c.h.b16 %v143
    %v1008 = vunpack.c.l.b16 %v144
    %v1009 = vunpack.c.l.b16 %v145
    %v1010 = vunpack.c.h.b16 %v145
    %v1011 = vunpack.c.l.b16 %v146
    %v1012 = vunpack.c.h.b16 %v146
    %v1013 = vunpack.c.l.b16 %v147
    %v1014 = vunpack.c.h.b16 %v147
    %v1015 = vunpack.c.l.b16 %v148
    %v1016 = vunpack.c.h.b16 %v148
    %v1017 = vunpack.c.l.b16 %v149
    %v1018 = vunpack.c.l.b16 %v150
    %v1019 = vunpack.c.h.b16 %v150
    %v1020 = vunpack.c.l.b16 %v151
    %v1021 = vunpack.c.h.b16 %v151
    %v1022 = vunpack.c.l.b16 %v152
    %v1023 = vunpack.c.h.b16 %v152
    %v1024 = vunpack.c.l.b16 %v153
    %v1025 = vunpack.c.h.b16 %v153
    %v1026 = vunpack.c.l.b16 %v154
    %v1027 = vunpack.c.l.b16 %v155
    %v1028 = vunpack.c.h.b16 %v155
    %v1029 = vunpack.c.l.b16 %v156
    %v1030 = vunpack.c.h.b16 %v156
    %v1031 = vunpack.c.l.b16 %v157
    %v1032 = vunpack.c.h.b16 %v157
    %v1033 = vunpack.c.l.b16 %v158
    %v1034 = vunpack.c.h.b16 %v158
    %v1035 = vunpack.c.l.b16 %v159
    %v1036 = vunpack.c.l.b16 %v160
    %v1037 = vunpack.c.h.b16 %v160
    %v1038 = vunpack.c.l.b16 %v161
    %v1039 = vunpack.c.h.b16 %v161
    %v1040 = vunpack.c.l.b16 %v162
    %v1041 = vunpack.c.h.b16 %v162
    %v1042 = vunpack.c.l.b16 %v163
    %v1043 = vunpack.c.h.b16 %v163
    %v1044 = vunpack.c.l.b16 %v164
    %v1045 = vunpack.c.l.b16 %v165
    %v1046 = vunpack.c.h.b16 %v165
    %v1047 = vunpack.c.l.b16 %v166
    %v1048 = vunpack.c.h.b16 %v166
    %v1049 = vunpack.c.l.b16 %v167
    %v1050 = vunpack.c.h.b16 %v167
    %v1051 = vunpack.c.l.b16 %v168
    %v1052 = vunpack.c.h.b16 %v168
    %v1053 = vunpack.c.l.b16 %v169
    %v1054 = vunpack.c.l.b16 %v170
    %v1055 = vunpack.c.h.b16 %v170
    %v1056 = vunpack.c.l.b16 %v171
    %v1057 = vunpack.c.h.b16 %v171
    %v1058 = vunpack.c.l.b16 %v172
    %v1059 = vunpack.c.h.b16 %v172
    %v1060 = vunpack.c.l.b16 %v173
    %v1061 = vunpack.c.h.b16 %v173
    %v1062 = vunpack.c.l.b16 %v174
    %v1063 = vunpack.c.l.b16 %v175
    %v1064 = vunpack.c.h.b16 %v175
    %v1065 = vunpack.c.l.b16 %v176
    %v1066 = vunpack.c.h.b16 %v176
    %v1067 = vunpack.c.l.b16 %v177
    %v1068 = vunpack.c.h.b16 %v177
    %v1069 = vunpack.c.l.b16 %v178
    %v1070 = vunpack.c.h.b16 %v178
    %v1071 = vunpack.c.l.b16 %v179
    %v1072 = vunpack.c.l.b16 %v180
    %v1073 = vunpack.c.h.b16 %v180
    %v1074 = vunpack.c.l.b16 %v181
    %v1075 = vunpack.c.h.b16 %v181
    %v1076 = vunpack.c.l.b16 %v182
    %v1077 = vunpack.c.h.b16 %v182
    %v1078 = vunpack.c.l.b16 %v183
    %v1079 = vunpack.c.h.b16 %v183
    %v1080 = vunpack.c.l.b16 %v184
    %v1081 = vunpack.c.l.b16 %v185
    %v1082 = vunpack.c.h.b16 %v185
    %v1083 = vunpack.c.l.b16 %v186
    %v1084 = vunpack.c.h.b16 %v186
    %v1085 = vunpack.c.l.b16 %v187
    %v1086 = vunpack.c.h.b16 %v187
    %v1087 = vunpack.c.l.b16 %v188
    %v1088 = vunpack.c.h.b16 %v188
    %v1089 = vunpack.c.l.b16 %v189
    %v1090 = vunpack.c.l.b16 %v190
    %v1091 = vunpack.c.h.b16 %v190
    %v1092 = vunpack.c.l.b16 %v191
    %v1093 = vunpack.c.h.b16 %v191
    %v1094 = vunpack.c.l.b16 %v192
    %v1095 = vunpack.c.h.b16 %v192
    %v1096 = vunpack.c.l.b16 %v193
    %v1097 = vunpack.c.h.b16 %v193
    %v1098 = vunpack.c.l.b16 %v194
    %v1099 = vunpack.c.l.b16 %v195
    %v1100 = vunpack.c.h.b16 %v195
    %v1101 = vunpack.c.l.b16 %v196
    %v1102 = vunpack.c.h.b16 %v196
    %v1103 = vunpack.c.l.b16 %v197
    %v1104 = vunpack.c.h.b16 %v197
    %v1105 = vunpack.c.l.b16 %v198
    %v1106 = vunpack.c.h.b16 %v198
    %v1107 = vunpack.c.l.b16 %v199
    %v1108 = vunpack.c.l.b16 %v200
    %v1109 = vunpack.c.h.b16 %v200
    %v1110 = vunpack.c.l.b16 %v201
    %v1111 = vunpack.c.h.b16 %v201
    %v1112 = vunpack.c.l.b16 %v202
    %v1113 = vunpack.c.h.b16 %v202
    %v1114 = vunpack.c.l.b16 %v203
    %v1115 = vunpack.c.h.b16 %v203
    %v1116 = vunpack.c.l.b16 %v204
    %v1117 = vunpack.c.l.b16 %v205
    %v1118 = vunpack.c.h.b16 %v205
    %v1119 = vunpack.c.l.b16 %v206
    %v1120 = vunpack.c.h.b16 %v206
    %v1121 = vunpack.c.l.b16 %v207
    %v1122 = vunpack.c.h.b16 %v207
    %v1123 = vunpack.c.l.b16 %v208
    %v1124 = vunpack.c.h.b16 %v208
    %v1125 = vunpack.c.l.b16 %v209
    %v1126 = vunpack.c.l.b16 %v210
    %v1127 = vunpack.c.h.b16 %v210
    %v1128 = vunpack.c.l.b16 %v211
    %v1129 = vunpack.c.h.b16 %v211
    %v1130 = vunpack.c.l.b16 %v212
    %v1131 = vunpack.c.h.b16 %v212
    %v1132 = vunpack.c.l.b16 %v213
    %v1133 = vunpack.c.h.b16 %v213
    %v1134 = vunpack.c.l.b16 %v214
    %v1135 = vunpack.c.l.b16 %v215
    %v1136 = vunpack.c.h.b16 %v215
    %v1137 = vunpack.c.l.b16 %v216
    %v1138 = vunpack.c.h.b16 %v216
    %v1139 = vunpack.c.l.b16 %v217
    %v1140 = vunpack.c.h.b16 %v217
    %v1141 = vunpack.c.l.b16 %v218
    %v1142 = vunpack.c.h.b16 %v218
    %v1143 = vunpack.c.l.b16 %v219
    %v1144 = vunpack.c.l.b16 %v220
    %v1145 = vunpack.c.h.b16 %v220
    %v1146 = vunpack.c.l.b16 %v221
    %v1147 = vunpack.c.h.b16 %v221
    %v1148 = vunpack.c.l.b16 %v222
    %v1149 = vunpack.c.h.b16 %v222
    %v1150 = vunpack.c.l.b16 %v223
    %v1151 = vunpack.c.h.b16 %v223
    %v1152 = vunpack.c.l.b16 %v224
    %v1153 = vunpack.c.l.b16 %v225
    %v1154 = vunpack.c.h.b16 %v225
    %v1155 = vunpack.c.l.b16 %v226
    %v1156 = vunpack.c.h.b16 %v226
    %v1157 = vunpack.c.l.b16 %v227
    %v1158 = vunpack.c.h.b16 %v227
    %v1159 = vunpack.c.l.b16 %v228
    %v1160 = vunpack.c.h.b16 %v228
    %v1161 = vunpack.c.l.b16 %v229
    %v1162 = vunpack.c.l.b16 %v230
    %v1163 = vunpack.c.h.b16 %v230
    %v1164 = vunpack.c.l.b16 %v231
    %v1165 = vunpack.c.h.b16 %v231
    %v1166 = vunpack.c.l.b16 %v232
    %v1167 = vunpack.c.h.b16 %v232
    %v1168 = vunpack.c.l.b16 %v233
    %v1169 = vunpack.c.h.b16 %v233
    %v1170 = vunpack.c.l.b16 %v234
    %v1171 = vunpack.c.l.b16 %v235
    %v1172 = vunpack.c.h.b16 %v235
    %v1173 = vunpack.c.l.b16 %v236
    %v1174 = vunpack.c.h.b16 %v236
    %v1175 = vunpack.c.l.b16 %v237
    %v1176 = vunpack.c.h.b16 %v237
    %v1177 = vunpack.c.l.b16 %v238
    %v1178 = vunpack.c.h.b16 %v238
    %v1179 = vunpack.c.l.b16 %v239
    %v1180 = vunpack.c.l.b16 %v240
    %v1181 = vunpack.c.h.b16 %v240
    %v1182 = vunpack.c.l.b16 %v241
    %v1183 = vunpack.c.h.b16 %v241
    %v1184 = vunpack.c.l.b16 %v242
    %v1185 = vunpack.c.h.b16 %v242
    %v1186 = vunpack.c.l.b16 %v243
    %v1187 = vunpack.c.h.b16 %v243
    %v1188 = vunpack.c.l.b16 %v244
    %v1189 = vunpack.c.l.b16 %v245
    %v1190 = vunpack.c.h.b16 %v245
    %v1191 = vunpack.c.l.b16 %v246
    %v1192 = vunpack.c.h.b16 %v246
    %v1193 = vunpack.c.l.b16 %v247
    %v1194 = vunpack.c.h.b16 %v247
    %v1195 = vunpack.c.l.b16 %v248
    %v1196 = vunpack.c.h.b16 %v248
    %v1197 = vunpack.c.l.b16 %v249
    %v1198 = vunpack.c.l.b16 %v250
    %v1199 = vunpack.c.h.b16 %v250
    %v1200 = vunpack.c.l.b16 %v251
    %v1201 = vunpack.c.h.b16 %v251
    %v1202 = vunpack.c.l.b16 %v252
    %v1203 = vunpack.c.h.b16 %v252
    %v1204 = vunpack.c.l.b16 %v253
    %v1205 = vunpack.c.h.b16 %v253
    %v1206 = vunpack.c.l.b16 %v254
    %v1207 = vunpack.c.l.b16 %v255
    %v1208 = vunpack.c.h.b16 %v255
    %v1209 = vunpack.c.l.b16 %v256
    %v1210 = vunpack.c.h.b16 %v256
    %v1211 = vunpack.c.l.b16 %v257
    %v1212 = vunpack.c.h.b16 %v257
    %v1213 = vunpack.c.l.b16 %v258
    %v1214 = vunpack.c.h.b16 %v258
    %v1215 = vunpack.c.l.b16 %v259
    %v1216 = vunpack.c.l.b16 %v260
    %v1217 = vunpack.c.h.b16 %v260
    %v1218 = vunpack.c.l.b16 %v261
    %v1219 = vunpack.c.h.b16 %v261
    %v1220 = vunpack.c.l.b16 %v262
    %v1221 = vunpack.c.h.b16 %v262
    %v1222 = vunpack.c.l.b16 %v263
    %v1223 = vunpack.c.h.b16 %v263
    %v1224 = vunpack.c.l.b16 %v264
    %v1225 = vunpack.c.l.b16 %v265
    %v1226 = vunpack.c.h.b16 %v265
    %v1227 = vunpack.c.l.b16 %v266
    %v1228 = vunpack.c.h.b16 %v266
    %v1229 = vunpack.c.l.b16 %v267
    %v1230 = vunpack.c.h.b16 %v267
    %v1231 = vunpack.c.l.b16 %v268
    %v1232 = vunpack.c.h.b16 %v268
    %v1233 = vunpack.c.l.b16 %v269
    %v1234 = vunpack.c.l.b16 %v270
    %v1235 = vunpack.c.h.b16 %v270
    %v1236 = vunpack.c.l.b16 %v271
    %v1237 = vunpack.c.h.b16 %v271
    %v1238 = vunpack.c.l.b16 %v272
    %v1239 = vunpack.c.h.b16 %v272
    %v1240 = vunpack.c.l.b16 %v273
    %v1241 = vunpack.c.h.b16 %v273
    %v1242 = vunpack.c.l.b16 %v274
    %v1243 = vunpack.c.l.b16 %v275
    %v1244 = vunpack.c.h.b16 %v275
    %v1245 = vunpack.c.l.b16 %v276
    %v1246 = vunpack.c.h.b16 %v276
    %v1247 = vunpack.c.l.b16 %v277
    %v1248 = vunpack.c.h.b16 %v277
    %v1249 = vunpack.c.l.b16 %v278
    %v1250 = vunpack.c.h.b16 %v278
    %v1251 = vunpack.c.l.b16 %v279
    %v1252 = vunpack.c.l.b16 %v280
    %v1253 = vunpack.c.h.b16 %v280
    %v1254 = vunpack.c.l.b16 %v281
    %v1255 = vunpack.c.h.b16 %v281
    %v1256 = vunpack.c.l.b16 %v282
    %v1257 = vunpack.c.h.b16 %v282
    %v1258 = vunpack.c.l.b16 %v283
    %v1259 = vunpack.c.h.b16 %v283
    %v1260 = vunpack.c.l.b16 %v284
    %v1261 = vunpack.c.l.b16 %v285
    %v1262 = vunpack.c.h.b16 %v285
    %v1263 = vunpack.c.l.b16 %v286
    %v1264 = vunpack.c.h.b16 %v286
    %v1265 = vunpack.c.l.b16 %v287
    %v1266 = vunpack.c.h.b16 %v287
    %v1267 = vunpack.c.l.b16 %v288
    %v1268 = vunpack.c.h.b16 %v288
    %v1269 = vunpack.c.l.b16 %v289
    %v1270 = vunpack.c.l.b16 %v290
    %v1271 = vunpack.c.h.b16 %v290
    %v1272 = vunpack.c.l.b16 %v291
    %v1273 = vunpack.c.h.b16 %v291
    %v1274 = vunpack.c.l.b16 %v292
    %v1275 = vunpack.c.h.b16 %v292
    %v1276 = vunpack.c.l.b16 %v293
    %v1277 = vunpack.c.h.b16 %v293
    %v1278 = vunpack.c.l.b16 %v294
    %v1279 = vunpack.c.l.b16 %v295
    %v1280 = vunpack.c.h.b16 %v295
    %v1281 = vunpack.c.l.b16 %v296
    %v1282 = vunpack.c.h.b16 %v296
    %v1283 = vunpack.c.l.b16 %v297
    %v1284 = vunpack.c.h.b16 %v297
    %v1285 = vunpack.c.l.b16 %v298
    %v1286 = vunpack.c.h.b16 %v298
    %v1287 = vunpack.c.l.b16 %v299
    %v1288 = vunpack.c.l.b16 %v300
    %v1289 = vunpack.c.h.b16 %v300
    %v1290 = vunpack.c.l.b16 %v301
    %v1291 = vunpack.c.h.b16 %v301
    %v1292 = vunpack.c.l.b16 %v302
    %v1293 = vunpack.c.h.b16 %v302
    %v1294 = vunpack.c.l.b16 %v303
    %v1295 = vunpack.c.h.b16 %v303
    %v1296 = vunpack.c.l.b16 %v304
    %v1297 = vunpack.c.l.b16 %v305
    %v1298 = vunpack.c.h.b16 %v305
    %v1299 = vunpack.c.l.b16 %v306
    %v1300 = vunpack.c.h.b16 %v306
    %v1301 = vunpack.c.l.b16 %v307
    %v1302 = vunpack.c.h.b16 %v307
    %v1303 = vunpack.c.l.b16 %v308
    %v1304 = vunpack.c.h.b16 %v308
    %v1305 = vunpack.c.l.b16 %v309
    %v1306 = vunpack.c.l.b16 %v310
    %v1307 = vunpack.c.h.b16 %v310
    %v1308 = vunpack.c.l.b16 %v311
    %v1309 = vunpack.c.h.b16 %v311
    %v1310 = vunpack.c.l.b16 %v312
    %v1311 = vunpack.c.h.b16 %v312
    %v1312 = vunpack.c.l.b16 %v313
    %v1313 = vunpack.c.h.b16 %v313
    %v1314 = vunpack.c.l.b16 %v314
    %v1315 = vunpack.c.l.b16 %v315
    %v1316 = vunpack.c.h.b16 %v315
    %v1317 = vunpack.c.l.b16 %v316
    %v1318 = vunpack.c.h.b16 %v316
    %v1319 = vunpack.c.l.b16 %v317
    %v1320 = vunpack.c.h.b16 %v317
    %v1321 = vunpack.c.l.b16 %v318
    %v1322 = vunpack.c.h.b16 %v318
    %v1323 = vunpack.c.l.b16 %v319
    %v1324 = vunpack.c.l.b16 %v320
    %v1325 = vunpack.c.h.b16 %v320
    %v1326 = vunpack.c.l.b16 %v321
    %v1327 = vunpack.c.h.b16 %v321
    %v1328 = vunpack.c.l.b16 %v322
    %v1329 = vunpack.c.h.b16 %v322
    %v1330 = vunpack.c.l.b16 %v323
    %v1331 = vunpack.c.h.b16 %v323
    %v1332 = vunpack.c.l.b16 %v324
    %v1333 = vunpack.c.l.b16 %v325
    %v1334 = vunpack.c.h.b16 %v325
    %v1335 = vunpack.c.l.b16 %v326
    %v1336 = vunpack.c.h.b16 %v326
    %v1337 = vunpack.c.l.b16 %v327
    %v1338 = vunpack.c.h.b16 %v327
    %v1339 = vunpack.c.l.b16 %v328
    %v1340 = vunpack.c.h.b16 %v328
    %v1341 = vunpack.c.l.b16 %v329
    %v1342 = vunpack.c.l.b16 %v330
    %v1343 = vunpack.c.h.b16 %v330
    %v1344 = vunpack.c.l.b16 %v331
    %v1345 = vunpack.c.h.b16 %v331
    %v1346 = vunpack.c.l.b16 %v332
    %v1347 = vunpack.c.h.b16 %v332
    %v1348 = vunpack.c.l.b16 %v333
    %v1349 = vunpack.c.h.b16 %v333
    %v1350 = vunpack.c.l.b16 %v334
    %v1351 = vunpack.c.l.b16 %v335
    %v1352 = vunpack.c.h.b16 %v335
    %v1353 = vunpack.c.l.b16 %v336
    %v1354 = vunpack.c.h.b16 %v336
    %v1355 = vunpack.c.l.b16 %v337
    %v1356 = vunpack.c.h.b16 %v337
    %v1357 = vunpack.c.l.b16 %v338
    %v1358 = vunpack.c.h.b16 %v338
    %v1359 = vunpack.c.l.b16 %v339
    %v1360 = vunpack.c.l.b16 %v340
    %v1361 = vunpack.c.h.b16 %v340
    %v1362 = vunpack.c.l.b16 %v341
    %v1363 = vunpack.c.h.b16 %v341
    %v1364 = vunpack.c.l.b16 %v342
    %v1365 = vunpack.c.h.b16 %v342
    %v1366 = vunpack.c.l.b16 %v343
    %v1367 = vunpack.c.h.b16 %v343
    %v1368 = vunpack.c.l.b16 %v344
    %v1369 = vunpack.c.l.b16 %v345
    %v1370 = vunpack.c.h.b16 %v345
    %v1371 = vunpack.c.l.b16 %v346
    %v1372 = vunpack.c.h.b16 %v346
    %v1373 = vunpack.c.l.b16 %v347
    %v1374 = vunpack.c.h.b16 %v347
    %v1375 = vunpack.c.l.b16 %v348
    %v1376 = vunpack.c.h.b16 %v348
    %v1377 = vunpack.c.l.b16 %v349
    %v1378 = vunpack.c.l.b16 %v350
    %v1379 = vunpack.c.h.b16 %v350
    %v1380 = vunpack.c.l.b16 %v351
    %v1381 = vunpack.c.h.b16 %v351
    %v1382 = vunpack.c.l.b16 %v352
    %v1383 = vunpack.c.h.b16 %v352
    %v1384 = vunpack.c.l.b16 %v353
    %v1385 = vunpack.c.h.b16 %v353
    %v1386 = vunpack.c.l.b16 %v354
    %v1387 = vunpack.c.l.b16 %v355
    %v1388 = vunpack.c.h.b16 %v355
    %v1389 = vunpack.c.l.b16 %v356
    %v1390 = vunpack.c.h.b16 %v356
    %v1391 = vunpack.c.l.b16 %v357
    %v1392 = vunpack.c.h.b16 %v357
    %v1393 = vunpack.c.l.b16 %v358
    %v1394 = vunpack.c.h.b16 %v358
    %v1395 = vunpack.c.l.b16 %v359
    %v1396 = vunpack.c.l.b16 %v360
    %v1397 = vunpack.c.h.b16 %v360
    %v1398 = vunpack.c.l.b16 %v361
    %v1399 = vunpack.c.h.b16 %v361
    %v1400 = vunpack.c.l.b16 %v362
    %v1401 = vunpack.c.h.b16 %v362
    %v1402 = vunpack.c.l.b16 %v363
    %v1403 = vunpack.c.h.b16 %v363
    %v1404 = vunpack.c.l.b16 %v364
    %v1405 = vpack.c.b16 %v838, %v829
    %v1406 = vpack.c.b16 %v839, %v830
    %v1407 = vpack.c.b16 %v840, %v831
    %v1408 = vpack.c.b16 %v841, %v832
    %v1409 = vpack.c.b16 %v842, %v833
    %v1410 = vpack.c.b16 %v843, %v834
    %v1411 = vpack.c.b16 %v844, %v835
    %v1412 = vpack.c.b16 %v845, %v836
    %v1413 = vpack.c.b16 %v846, %v837
    %v1414 = vpack.c.b16 %v856, %v847
    %v1415 = vpack.c.b16 %v857, %v848
    %v1416 = vpack.c.b16 %v858, %v849
    %v1417 = vpack.c.b16 %v859, %v850
    %v1418 = vpack.c.b16 %v860, %v851
    %v1419 = vpack.c.b16 %v861, %v852
    %v1420 = vpack.c.b16 %v862, %v853
    %v1421 = vpack.c.b16 %v863, %v854
    %v1422 = vpack.c.b16 %v864, %v855
    %v1423 = vpack.c.b16 %v874, %v865
    %v1424 = vpack.c.b16 %v875, %v866
    %v1425 = vpack.c.b16 %v876, %v867
    %v1426 = vpack.c.b16 %v877, %v868
    %v1427 = vpack.c.b16 %v878, %v869
    %v1428 = vpack.c.b16 %v879, %v870
    %v1429 = vpack.c.b16 %v880, %v871
    %v1430 = vpack.c.b16 %v881, %v872
    %v1431 = vpack.c.b16 %v882, %v873
    %v1432 = vpack.c.b16 %v892, %v883
    %v1433 = vpack.c.b16 %v893, %v884
    %v1434 = vpack.c.b16 %v894, %v885
    %v1435 = vpack.c.b16 %v895, %v886
    %v1436 = vpack.c.b16 %v896, %v887
    %v1437 = vpack.c.b16 %v897, %v888
    %v1438 = vpack.c.b16 %v898, %v889
    %v1439 = vpack.c.b16 %v899, %v890
    %v1440 = vpack.c.b16 %v900, %v891
    %v1441 = vpack.c.b16 %v910, %v901
    %v1442 = vpack.c.b16 %v911, %v902
    %v1443 = vpack.c.b16 %v912, %v903
    %v1444 = vpack.c.b16 %v913, %v904
    %v1445 = vpack.c.b16 %v914, %v905
    %v1446 = vpack.c.b16 %v915, %v906
    %v1447 = vpack.c.b16 %v916, %v907
    %v1448 = vpack.c.b16 %v917, %v908
    %v1449 = vpack.c.b16 %v918, %v909
    %v1450 = vpack.c.b16 %v928, %v919
    %v1451 = vpack.c.b16 %v929, %v920
    %v1452 = vpack.c.b16 %v930, %v921
    %v1453 = vpack.c.b16 %v931, %v922
    %v1454 = vpack.c.b16 %v932, %v923
    %v1455 = vpack.c.b16 %v933, %v924
    %v1456 = vpack.c.b16 %v934, %v925
    %v1457 = vpack.c.b16 %v935, %v926
    %v1458 = vpack.c.b16 %v936, %v927
    %v1459 = vpack.c.b16 %v946, %v937
    %v1460 = vpack.c.b16 %v947, %v938
    %v1461 = vpack.c.b16 %v948, %v939
    %v1462 = vpack.c.b16 %v949, %v940
    %v1463 = vpack.c.b16 %v950, %v941
    %v1464 = vpack.c.b16 %v951, %v942
    %v1465 = vpack.c.b16 %v952, %v943
    %v1466 = vpack.c.b16 %v953, %v944
    %v1467 = vpack.c.b16 %v954, %v945
    %v1468 = vpack.c.b16 %v964, %v955
    %v1469 = vpack.c.b16 %v965, %v956
    %v1470 = vpack.c.b16 %v966, %v957
    %v1471 = vpack.c.b16 %v967, %v958
    %v1472 = vpack.c.b16 %v968, %v959
    %v1473 = vpack.c.b16 %v969, %v960
    %v1474 = vpack.c.b16 %v970, %v961
    %v1475 = vpack.c.b16 %v971, %v962
    %v1476 = vpack.c.b16 %v972, %v963
    %v1477 = vpack.c.b16 %v982, %v973
    %v1478 = vpack.c.b16 %v983, %v974
    %v1479 = vpack.c.b16 %v984, %v975
    %v1480 = vpack.c.b16 %v985, %v976
    %v1481 = vpack.c.b16 %v986, %v977
    %v1482 = vpack.c.b16 %v987, %v978
    %v1483 = vpack.c.b16 %v988, %v979
    %v1484 = vpack.c.b16 %v989, %v980
    %v1485 = vpack.c.b16 %v990, %v981
    %v1486 = vpack.c.b16 %v1000, %v991
    %v1487 = vpack.c.b16 %v1001, %v992
    %v1488 = vpack.c.b16 %v1002, %v993
    %v1489 = vpack.c.b16 %v1003, %v994
    %v1490 = vpack.c.b16 %v1004, %v995
    %v1491 = vpack.c.b16 %v1005, %v996
    %v1492 = vpack.c.b16 %v1006, %v997
    %v1493 = vpack.c.b16 %v1007, %v998
    %v1494 = vpack.c.b16 %v1008, %v999
    %v1495 = vpack.c.b16 %v1018, %v1009
    %v1496 = vpack.c.b16 %v1019, %v1010
    %v1497 = vpack.c.b16 %v1020, %v1011
    %v1498 = vpack.c.b16 %v1021, %v1012
    %v1499 = vpack.c.b16 %v1022, %v1013
    %v1500 = vpack.c.b16 %v1023, %v1014
    %v1501 = vpack.c.b16 %v1024, %v1015
    %v1502 = vpack.c.b16 %v1025, %v1016
    %v1503 = vpack.c.b16 %v1026, %v1017
    %v1504 = vpack.c.b16 %v1036, %v1027
    %v1505 = vpack.c.b16 %v1037, %v1028
    %v1506 = vpack.c.b16 %v1038, %v1029
    %v1507 = vpack.c.b16 %v1039, %v1030
    %v1508 = vpack.c.b16 %v1040, %v1031
    %v1509 = vpack.c.b16 %v1041, %v1032
    %v1510 = vpack.c.b16 %v1042, %v1033
    %v1511 = vpack.c.b16 %v1043, %v1034
    %v1512 = vpack.c.b16 %v1044, %v1035
    %v1513 = vpack.c.b16 %v1054, %v1045
    %v1514 = vpack.c.b16 %v1055, %v1046
    %v1515 = vpack.c.b16 %v1056, %v1047
    %v1516 = vpack.c.b16 %v1057, %v1048
    %v1517 = vpack.c.b16 %v1058, %v1049
    %v1518 = vpack.c.b16 %v1059, %v1050
    %v1519 = vpack.c.b16 %v1060, %v1051
    %v1520 = vpack.c.b16 %v1061, %v1052
    %v1521 = vpack.c.b16 %v1062, %v1053
    %v1522 = vpack.c.b16 %v1072, %v1063
    %v1523 = vpack.c.b16 %v1073, %v1064
    %v1524 = vpack.c.b16 %v1074, %v1065
    %v1525 = vpack.c.b16 %v1075, %v1066
    %v1526 = vpack.c.b16 %v1076, %v1067
    %v1527 = vpack.c.b16 %v1077, %v1068
    %v1528 = vpack.c.b16 %v1078, %v1069
    %v1529 = vpack.c.b16 %v1079, %v1070
    %v1530 = vpack.c.b16 %v1080, %v1071
    %v1531 = vpack.c.b16 %v1090, %v1081
    %v1532 = vpack.c.b16 %v1091, %v1082
    %v1533 = vpack.c.b16 %v1092, %v1083
    %v1534 = vpack.c.b16 %v1093, %v1084
    %v1535 = vpack.c.b16 %v1094, %v1085
    %v1536 = vpack.c.b16 %v1095, %v1086
    %v1537 = vpack.c.b16 %v1096, %v1087
    %v1538 = vpack.c.b16 %v1097, %v1088
    %v1539 = vpack.c.b16 %v1098, %v1089
    %v1540 = vpack.c.b16 %v1108, %v1099
    %v1541 = vpack.c.b16 %v1109, %v1100
    %v1542 = vpack.c.b16 %v1110, %v1101
    %v1543 = vpack.c.b16 %v1111, %v1102
    %v1544 = vpack.c.b16 %v1112, %v1103
    %v1545 = vpack.c.b16 %v1113, %v1104
    %v1546 = vpack.c.b16 %v1114, %v1105
    %v1547 = vpack.c.b16 %v1115, %v1106
    %v1548 = vpack.c.b16 %v1116, %v1107
    %v1549 = vpack.c.b16 %v1126, %v1117
    %v1550 = vpack.c.b16 %v1127, %v1118
    %v1551 = vpack.c.b16 %v1128, %v1119
    %v1552 = vpack.c.b16 %v1129, %v1120
    %v1553 = vpack.c.b16 %v1130, %v1121
    %v1554 = vpack.c.b16 %v1131, %v1122
    %v1555 = vpack.c.b16 %v1132, %v1123
    %v1556 = vpack.c.b16 %v1133, %v1124
    %v1557 = vpack.c.b16 %v1134, %v1125
    %v1558 = vpack.c.b16 %v1144, %v1135
    %v1559 = vpack.c.b16 %v1145, %v1136
    %v1560 = vpack.c.b16 %v1146, %v1137
    %v1561 = vpack.c.b16 %v1147, %v1138
    %v1562 = vpack.c.b16 %v1148, %v1139
    %v1563 = vpack.c.b16 %v1149, %v1140
    %v1564 = vpack.c.b16 %v1150, %v1141
    %v1565 = vpack.c.b16 %v1151, %v1142
    %v1566 = vpack.c.b16 %v1152, %v1143
    %v1567 = vpack.c.b16 %v1162, %v1153
    %v1568 = vpack.c.b16 %v1163, %v1154
    %v1569 = vpack.c.b16 %v1164, %v1155
    %v1570 = vpack.c.b16 %v1165, %v1156
    %v1571 = vpack.c.b16 %v1166, %v1157
    %v1572 = vpack.c.b16 %v1167, %v1158
    %v1573 = vpack.c.b16 %v1168, %v1159
    %v1574 = vpack.c.b16 %v1169, %v1160
    %v1575 = vpack.c.b16 %v1170, %v1161
    %v1576 = vpack.c.b16 %v1180, %v1171
    %v1577 = vpack.c.b16 %v1181, %v1172
    %v1578 = vpack.c.b16 %v1182, %v1173
    %v1579 = vpack.c.b16 %v1183, %v1174
    %v1580 = vpack.c.b16 %v1184, %v1175
    %v1581 = vpack.c.b16 %v1185, %v1176
    %v1582 = vpack.c.b16 %v1186, %v1177
    %v1583 = vpack.c.b16 %v1187, %v1178
    %v1584 = vpack.c.b16 %v1188, %v1179
    %v1585 = vpack.c.b16 %v1198, %v1189
    %v1586 = vpack.c.b16 %v1199, %v1190
    %v1587 = vpack.c.b16 %v1200, %v1191
    %v1588 = vpack.c.b16 %v1201, %v1192
    %v1589 = vpack.c.b16 %v1202, %v1193
    %v1590 = vpack.c.b16 %v1203, %v1194
    %v1591 = vpack.c.b16 %v1204, %v1195
    %v1592 = vpack.c.b16 %v1205, %v1196
    %v1593 = vpack.c.b16 %v1206, %v1197
    %v1594 = vpack.c.b16 %v1216, %v1207
    %v1595 = vpack.c.b16 %v1217, %v1208
    %v1596 = vpack.c.b16 %v1218, %v1209
    %v1597 = vpack.c.b16 %v1219, %v1210
    %v1598 = vpack.c.b16 %v1220, %v1211
    %v1599 = vpack.c.b16 %v1221, %v1212
    %v1600 = vpack.c.b16 %v1222, %v1213
    %v1601 = vpack.c.b16 %v1223, %v1214
    %v1602 = vpack.c.b16 %v1224, %v1215
    %v1603 = vpack.c.b16 %v1234, %v1225
    %v1604 = vpack.c.b16 %v1235, %v1226
    %v1605 = vpack.c.b16 %v1236, %v1227
    %v1606 = vpack.c.b16 %v1237, %v1228
    %v1607 = vpack.c.b16 %v1238, %v1229
    %v1608 = vpack.c.b16 %v1239, %v1230
    %v1609 = vpack.c.b16 %v1240, %v1231
    %v1610 = vpack.c.b16 %v1241, %v1232
    %v1611 = vpack.c.b16 %v1242, %v1233
    %v1612 = vpack.c.b16 %v1252, %v1243
    %v1613 = vpack.c.b16 %v1253, %v1244
    %v1614 = vpack.c.b16 %v1254, %v1245
    %v1615 = vpack.c.b16 %v1255, %v1246
    %v1616 = vpack.c.b16 %v1256, %v1247
    %v1617 = vpack.c.b16 %v1257, %v1248
    %v1618 = vpack.c.b16 %v1258, %v1249
    %v1619 = vpack.c.b16 %v1259, %v1250
    %v1620 = vpack.c.b16 %v1260, %v1251
    %v1621 = vpack.c.b16 %v1270, %v1261
    %v1622 = vpack.c.b16 %v1271, %v1262
    %v1623 = vpack.c.b16 %v1272, %v1263
    %v1624 = vpack.c.b16 %v1273, %v1264
    %v1625 = vpack.c.b16 %v1274, %v1265
    %v1626 = vpack.c.b16 %v1275, %v1266
    %v1627 = vpack.c.b16 %v1276, %v1267
    %v1628 = vpack.c.b16 %v1277, %v1268
    %v1629 = vpack.c.b16 %v1278, %v1269
    %v1630 = vpack.c.b16 %v1288, %v1279
    %v1631 = vpack.c.b16 %v1289, %v1280
    %v1632 = vpack.c.b16 %v1290, %v1281
    %v1633 = vpack.c.b16 %v1291, %v1282
    %v1634 = vpack.c.b16 %v1292, %v1283
    %v1635 = vpack.c.b16 %v1293, %v1284
    %v1636 = vpack.c.b16 %v1294, %v1285
    %v1637 = vpack.c.b16 %v1295, %v1286
    %v1638 = vpack.c.b16 %v1296, %v1287
    %v1639 = vpack.c.b16 %v1306, %v1297
    %v1640 = vpack.c.b16 %v1307, %v1298
    %v1641 = vpack.c.b16 %v1308, %v1299
    %v1642 = vpack.c.b16 %v1309, %v1300
    %v1643 = vpack.c.b16 %v1310, %v1301
    %v1644 = vpack.c.b16 %v1311, %v1302
    %v1645 = vpack.c.b16 %v1312, %v1303
    %v1646 = vpack.c.b16 %v1313, %v1304
    %v1647 = vpack.c.b16 %v1314, %v1305
    %v1648 = vpack.c.b16 %v1324, %v1315
    %v1649 = vpack.c.b16 %v1325, %v1316
    %v1650 = vpack.c.b16 %v1326, %v1317
    %v1651 = vpack.c.b16 %v1327, %v1318
    %v1652 = vpack.c.b16 %v1328, %v1319
    %v1653 = vpack.c.b16 %v1329, %v1320
    %v1654 = vpack.c.b16 %v1330, %v1321
    %v1655 = vpack.c.b16 %v1331, %v1322
    %v1656 = vpack.c.b16 %v1332, %v1323
    %v1657 = vpack.c.b16 %v1342, %v1333
    %v1658 = vpack.c.b16 %v1343, %v1334
    %v1659 = vpack.c.b16 %v1344, %v1335
    %v1660 = vpack.c.b16 %v1345, %v1336
    %v1661 = vpack.c.b16 %v1346, %v1337
    %v1662 = vpack.c.b16 %v1347, %v1338
    %v1663 = vpack.c.b16 %v1348, %v1339
    %v1664 = vpack.c.b16 %v1349, %v1340
    %v1665 = vpack.c.b16 %v1350, %v1341
    %v1666 = vpack.c.b16 %v1360, %v1351
    %v1667 = vpack.c.b16 %v1361, %v1352
    %v1668 = vpack.c.b16 %v1362, %v1353
    %v1669 = vpack.c.b16 %v1363, %v1354
    %v1670 = vpack.c.b16 %v1364, %v1355
    %v1671 = vpack.c.b16 %v1365, %v1356
    %v1672 = vpack.c.b16 %v1366, %v1357
    %v1673 = vpack.c.b16 %v1367, %v1358
    %v1674 = vpack.c.b16 %v1368, %v1359
    %v1675 = vpack.c.b16 %v1378, %v1369
    %v1676 = vpack.c.b16 %v1379, %v1370
    %v1677 = vpack.c.b16 %v1380, %v1371
    %v1678 = vpack.c.b16 %v1381, %v1372
    %v1679 = vpack.c.b16 %v1382, %v1373
    %v1680 = vpack.c.b16 %v1383, %v1374
    %v1681 = vpack.c.b16 %v1384, %v1375
    %v1682 = vpack.c.b16 %v1385, %v1376
    %v1683 = vpack.c.b16 %v1386, %v1377
    %v1684 = vpack.c.b16 %v1396, %v1387
    %v1685 = vpack.c.b16 %v1397, %v1388
    %v1686 = vpack.c.b16 %v1398, %v1389
    %v1687 = vpack.c.b16 %v1399, %v1390
    %v1688 = vpack.c.b16 %v1400, %v1391
    %v1689 = vpack.c.b16 %v1401, %v1392
    %v1690 = vpack.c.b16 %v1402, %v1393
    %v1691 = vpack.c.b16 %v1403, %v1394
    %v1692 = vpack.c.b16 %v1404, %v1395
    %v2125 = vunpack.c.l.b16 %v365
    %v2126 = vunpack.c.l.b16 %v366
    %v2127 = vunpack.c.l.b16 %v367
    %v2128 = vunpack.c.l.b16 %v368
    %v2129 = vunpack.c.l.b16 %v369
    %v2130 = vunpack.c.l.b16 %v370
    %v2131 = vunpack.c.l.b16 %v371
    %v2132 = vunpack.c.l.b16 %v372
    %v2133 = vunpack.c.l.b16 %v373
    %v2134 = vunpack.c.l.b16 %v374
    %v2135 = vunpack.c.l.b16 %v375
    %v2136 = vunpack.c.l.b16 %v376
    %v2137 = vunpack.c.l.b16 %v377
    %v2138 = vunpack.c.l.b16 %v378
    %v2139 = vunpack.c.l.b16 %v379
    %v2140 = vunpack.c.l.b16 %v380
    %v2141 = vunpack.c.l.b16 %v381
    %v2142 = vunpack.c.l.b16 %v382
    %v2143 = vunpack.c.l.b16 %v383
    %v2144 = vunpack.c.l.b16 %v384
    %v2145 = vunpack.c.l.b16 %v385
    %v2146 = vunpack.c.l.b16 %v386
    %v2147 = vunpack.c.l.b16 %v387
    %v2148 = vunpack.c.l.b16 %v388
    %v2149 = vunpack.c.l.b16 %v389
    %v2150 = vunpack.c.l.b16 %v390
    %v2151 = vunpack.c.l.b16 %v391
    %v2152 = vunpack.c.l.b16 %v392
    %v2153 = vunpack.c.l.b16 %v393
    %v2154 = vunpack.c.l.b16 %v394
    %v2155 = vunpack.c.l.b16 %v395
    %v2156 = vunpack.c.l.b16 %v396
    %v2157 = vunpack.c.l.b16 %v397
    %v2158 = vunpack.c.l.b16 %v398
    %v2159 = vunpack.c.l.b16 %v399
    %v2160 = vunpack.c.l.b16 %v400
    %v2161 = vunpack.c.l.b16 %v401
    %v2162 = vunpack.c.l.b16 %v402
    %v2163 = vunpack.c.l.b16 %v403
    %v2164 = vunpack.c.l.b16 %v404
    %v2165 = vunpack.c.l.b16 %v405
    %v2166 = vunpack.c.l.b16 %v406
    %v2167 = vunpack.c.l.b16 %v407
    %v2168 = vunpack.c.l.b16 %v408
    %v2169 = vunpack.c.l.b16 %v409
    %v2170 = vunpack.c.l.b16 %v410
    %v2171 = vunpack.c.l.b16 %v411
    %v2172 = vunpack.c.l.b16 %v412
    %v2173 = vunpack.c.l.b16 %v413
    %v2174 = vunpack.c.l.b16 %v414
    %v2175 = vunpack.c.l.b16 %v415
    %v2176 = vunpack.c.l.b16 %v416
    %v2177 = vunpack.c.l.b16 %v417
    %v2178 = vunpack.c.l.b16 %v418
    %v2179 = vunpack.c.l.b16 %v419
    %v2180 = vunpack.c.l.b16 %v420
    %v2181 = vunpack.c.l.b16 %v421
    %v2182 = vunpack.c.l.b16 %v422
    %v2183 = vunpack.c.l.b16 %v423
    %v2184 = vunpack.c.l.b16 %v424
    %v2185 = vunpack.c.l.b16 %v425
    %v2186 = vunpack.c.l.b16 %v426
    %v2187 = vunpack.c.l.b16 %v427
    %v2188 = vunpack.c.l.b16 %v428
    %v2189 = vunpack.c.l.b16 %v429
    %v2190 = vunpack.c.l.b16 %v430
    %v2191 = vunpack.c.l.b16 %v431
    %v2192 = vunpack.c.l.b16 %v432
    %v2193 = vunpack.c.l.b16 %v433
    %v2194 = vunpack.c.l.b16 %v434
    %v2195 = vunpack.c.l.b16 %v435
    %v2196 = vunpack.c.l.b16 %v436
    %v2197 = vunpack.c.l.b16 %v437
    %v2198 = vunpack.c.l.b16 %v438
    %v2199 = vunpack.c.l.b16 %v439
    %v2200 = vunpack.c.l.b16 %v440
    %v2201 = vunpack.c.l.b16 %v441
    %v2202 = vunpack.c.l.b16 %v442
    %v2203 = vunpack.c.l.b16 %v443
    %v2204 = vunpack.c.l.b16 %v444
    %v2205 = vunpack.c.l.b16 %v445
    %v2206 = vunpack.c.l.b16 %v446
    %v2207 = vunpack.c.l.b16 %v447
    %v2208 = vunpack.c.l.b16 %v448
    %v2209 = vunpack.c.l.b16 %v449
    %v2210 = vunpack.c.l.b16 %v450
    %v2211 = vunpack.c.l.b16 %v451
    %v2212 = vunpack.c.l.b16 %v452
    %v2213 = vunpack.c.l.b16 %v453
    %v2214 = vunpack.c.l.b16 %v454
    %v2215 = vunpack.c.l.b16 %v455
    %v2216 = vunpack.c.l.b16 %v456
    %v2217 = vunpack.c.l.b16 %v457
    %v2218 = vunpack.c.l.b16 %v458
    %v2219 = vunpack.c.l.b16 %v459
    %v2220 = vunpack.c.l.b16 %v460
    %v2221 = vunpack.c.l.b16 %v461
    %v2222 = vunpack.c.l.b16 %v462
    %v2223 = vunpack.c.l.b16 %v463
    %v2224 = vunpack.c.l.b16 %v464
    %v2225 = vunpack.c.l.b16 %v465
    %v2226 = vunpack.c.l.b16 %v466
    %v2227 = vunpack.c.l.b16 %v467
    %v2228 = vunpack.c.l.b16 %v468
    %v2229 = vunpack.c.l.b16 %v469
    %v2230 = vunpack.c.l.b16 %v470
    %v2231 = vunpack.c.l.b16 %v471
    %v2232 = vunpack.c.l.b16 %v472
    %v2233 = vunpack.c.l.b16 %v473
    %v2234 = vunpack.c.l.b16 %v474
    %v2235 = vunpack.c.l.b16 %v475
    %v2236 = vunpack.c.l.b16 %v476
    %v2237 = vunpack.c.l.b16 %v477
    %v2238 = vunpack.c.l.b16 %v478
    %v2239 = vunpack.c.l.b16 %v479
    %v2240 = vunpack.c.l.b16 %v480
    %v2241 = vunpack.c.l.b16 %v481
    %v2242 = vunpack.c.l.b16 %v482
    %v2243 = vunpack.c.l.b16 %v483
    %v2244 = vunpack.c.l.b16 %v484
    %v2245 = vunpack.c.l.b16 %v485
    %v2246 = vunpack.c.l.b16 %v486
    %v2247 = vunpack.c.l.b16 %v487
    %v2248 = vunpack.c.l.b16 %v488
    %v2249 = vunpack.c.l.b16 %v489
    %v2250 = vunpack.c.l.b16 %v490
    %v2251 = vunpack.c.l.b16 %v491
    %v2252 = vunpack.c.l.b16 %v492
    %v2253 = vunpack.c.l.b16 %v493
    %v2254 = vunpack.c.l.b16 %v494
    %v2255 = vunpack.c.l.b16 %v495
    %v2256 = vunpack.c.l.b16 %v496
    %v2257 = vunpack.c.l.b16 %v497
    %v2258 = vunpack.c.l.b16 %v498
    %v2259 = vunpack.c.l.b16 %v499
    %v2260 = vunpack.c.l.b16 %v500
    %v2261 = vunpack.c.l.b16 %v501
    %v2262 = vunpack.c.l.b16 %v502
    %v2263 = vunpack.c.l.b16 %v503
    %v2264 = vunpack.c.l.b16 %v504
    %v2265 = vunpack.c.l.b16 %v505
    %v2266 = vunpack.c.l.b16 %v506
    %v2267 = vunpack.c.l.b16 %v507
    %v2268 = vunpack.c.l.b16 %v508
    %v2269 = vpack.c.b16 %v2126, %v2125
    %v2270 = vpack.c.b16 %v2128, %v2127
    %v2271 = vpack.c.b16 %v2130, %v2129
    %v2272 = vpack.c.b16 %v2132, %v2131
    %v2273 = vpack.c.b16 %v2134, %v2133
    %v2274 = vpack.c.b16 %v2136, %v2135
    %v2275 = vpack.c.b16 %v2138, %v2137
    %v2276 = vpack.c.b16 %v2140, %v2139
    %v2277 = vpack.c.b16 %v2142, %v2141
    %v2278 = vpack.c.b16 %v2144, %v2143
    %v2279 = vpack.c.b16 %v2146, %v2145
    %v2280 = vpack.c.b16 %v2148, %v2147
    %v2281 = vpack.c.b16 %v2150, %v2149
    %v2282 = vpack.c.b16 %v2152, %v2151
    %v2283 = vpack.c.b16 %v2154, %v2153
    %v2284 = vpack.c.b16 %v2156, %v2155
    %v2285 = vpack.c.b16 %v2158, %v2157
    %v2286 = vpack.c.b16 %v2160, %v2159
    %v2287 = vpack.c.b16 %v2162, %v2161
    %v2288 = vpack.c.b16 %v2164, %v2163
    %v2289 = vpack.c.b16 %v2166, %v2165
    %v2290 = vpack.c.b16 %v2168, %v2167
    %v2291 = vpack.c.b16 %v2170, %v2169
    %v2292 = vpack.c.b16 %v2172, %v2171
    %v2293 = vpack.c.b16 %v2174, %v2173
    %v2294 = vpack.c.b16 %v2176, %v2175
    %v2295 = vpack.c.b16 %v2178, %v2177
    %v2296 = vpack.c.b16 %v2180, %v2179
    %v2297 = vpack.c.b16 %v2182, %v2181
    %v2298 = vpack.c.b16 %v2184, %v2183
    %v2299 = vpack.c.b16 %v2186, %v2185
    %v2300 = vpack.c.b16 %v2188, %v2187
    %v2301 = vpack.c.b16 %v2190, %v2189
    %v2302 = vpack.c.b16 %v2192, %v2191
    %v2303 = vpack.c.b16 %v2194, %v2193
    %v2304 = vpack.c.b16 %v2196, %v2195
    %v2305 = vpack.c.b16 %v2198, %v2197
    %v2306 = vpack.c.b16 %v2200, %v2199
    %v2307 = vpack.c.b16 %v2202, %v2201
    %v2308 = vpack.c.b16 %v2204, %v2203
    %v2309 = vpack.c.b16 %v2206, %v2205
    %v2310 = vpack.c.b16 %v2208, %v2207
    %v2311 = vpack.c.b16 %v2210, %v2209
    %v2312 = vpack.c.b16 %v2212, %v2211
    %v2313 = vpack.c.b16 %v2214, %v2213
    %v2314 = vpack.c.b16 %v2216, %v2215
    %v2315 = vpack.c.b16 %v2218, %v2217
    %v2316 = vpack.c.b16 %v2220, %v2219
    %v2317 = vpack.c.b16 %v2222, %v2221
    %v2318 = vpack.c.b16 %v2224, %v2223
    %v2319 = vpack.c.b16 %v2226, %v2225
    %v2320 = vpack.c.b16 %v2228, %v2227
    %v2321 = vpack.c.b16 %v2230, %v2229
    %v2322 = vpack.c.b16 %v2232, %v2231
    %v2323 = vpack.c.b16 %v2234, %v2233
    %v2324 = vpack.c.b16 %v2236, %v2235
    %v2325 = vpack.c.b16 %v2238, %v2237
    %v2326 = vpack.c.b16 %v2240, %v2239
    %v2327 = vpack.c.b16 %v2242, %v2241
    %v2328 = vpack.c.b16 %v2244, %v2243
    %v2329 = vpack.c.b16 %v2246, %v2245
    %v2330 = vpack.c.b16 %v2248, %v2247
    %v2331 = vpack.c.b16 %v2250, %v2249
    %v2332 = vpack.c.b16 %v2252, %v2251
    %v2333 = vpack.c.b16 %v2254, %v2253
    %v2334 = vpack.c.b16 %v2256, %v2255
    %v2335 = vpack.c.b16 %v2258, %v2257
    %v2336 = vpack.c.b16 %v2260, %v2259
    %v2337 = vpack.c.b16 %v2262, %v2261
    %v2338 = vpack.c.b16 %v2264, %v2263
    %v2339 = vpack.c.b16 %v2266, %v2265
    %v2340 = vpack.c.b16 %v2268, %v2267
    %2413 = vmatprep.subr.bf16.mxu0 0
    %2414 = vmatpush1.bf16.msra.mxu0 %v2276
    %2415 = vmatprep.subr.bf16.mxu0 0
    %2416 = vmatpush1.bf16.msra.mxu0 %v2275
    %2417 = vmatprep.subr.bf16.mxu0 0
    %2418 = vmatpush1.bf16.msra.mxu0 %v2274
    %2419 = vmatprep.subr.bf16.mxu0 0
    %2420 = vmatpush1.bf16.msra.mxu0 %v2273
    %2421 = vmatprep.subr.bf16.mxu0 0
    %2422 = vmatpush1.bf16.msra.mxu0 %v2272
    %2423 = vmatprep.subr.bf16.mxu0 0
    %2424 = vmatpush1.bf16.msra.mxu0 %v2271
    %2425 = vmatprep.subr.bf16.mxu0 0
    %2426 = vmatpush1.bf16.msra.mxu0 %v2270
    %2427 = vmatprep.subr.bf16.mxu0 0
    %2428 = vmatpush1.bf16.msra.mxu0 %v2269
    %2429 = vmatprep.subr.bf16.mxu0 0
    %2430 = vmatpush2.bf16.msra.mxu0 %v2284
    %2431 = vmatprep.subr.bf16.mxu0 0
    %2432 = vmatpush2.bf16.msra.mxu0 %v2283
    %2433 = vmatprep.subr.bf16.mxu0 0
    %2434 = vmatpush2.bf16.msra.mxu0 %v2282
    %2435 = vmatprep.subr.bf16.mxu0 0
    %2436 = vmatpush2.bf16.msra.mxu0 %v2281
    %2437 = vmatprep.subr.bf16.mxu0 0
    %2438 = vmatpush2.bf16.msra.mxu0 %v2280
    %2439 = vmatprep.subr.bf16.mxu0 0
    %2440 = vmatpush2.bf16.msra.mxu0 %v2279
    %2441 = vmatprep.subr.bf16.mxu0 0
    %2442 = vmatpush2.bf16.msra.mxu0 %v2278
    %2443 = vmatprep.subr.bf16.mxu0 0
    %2444 = vmatpush2.bf16.msra.mxu0 %v2277
    %2445 = vmatprep.mubr.bf16.mxu0 %v1406
    %2446 = vmatmul.mubr.bf16.gmra.mxu0 %v1405
    %v2447 = vpop.f32.mrf.mxu0
    %v2448 = vadd.f32 0.0, %v2447
    %v2449 = vpop.f32.mrf.mxu0
    %v2450 = vpop.f32.mrf.mxu0
    %v2451 = vadd.f32 0.0, %v2450
    %v2452 = vpop.f32.mrf.mxu0
    %2453 = vmatprep.mubr.bf16.mxu0 %v1415
    %2454 = vmatmul.mubr.bf16.gmra.mxu0 %v1414
    %v2455 = vpop.f32.mrf.mxu0
    %v2456 = vadd.f32 0.0, %v2455
    %v2457 = vpop.f32.mrf.mxu0
    %v2458 = vpop.f32.mrf.mxu0
    %v2459 = vadd.f32 0.0, %v2458
    %v2460 = vpop.f32.mrf.mxu0
    %2461 = vmatprep.mubr.bf16.mxu0 %v1424
    %2462 = vmatmul.mubr.bf16.gmra.mxu0 %v1423
    %v2463 = vpop.f32.mrf.mxu0
    %v2464 = vadd.f32 0.0, %v2463
    %v2465 = vpop.f32.mrf.mxu0
    %v2466 = vpop.f32.mrf.mxu0
    %v2467 = vadd.f32 0.0, %v2466
    %v2468 = vpop.f32.mrf.mxu0
    %2469 = vmatprep.mubr.bf16.mxu0 %v1433
    %2470 = vmatmul.mubr.bf16.gmra.mxu0 %v1432
    %v2471 = vpop.f32.mrf.mxu0
    %v2472 = vadd.f32 0.0, %v2471
    %v2473 = vpop.f32.mrf.mxu0
    %v2474 = vpop.f32.mrf.mxu0
    %v2475 = vadd.f32 0.0, %v2474
    %v2476 = vpop.f32.mrf.mxu0
    %2477 = vmatprep.mubr.bf16.mxu0 %v1442
    %2478 = vmatmul.mubr.bf16.gmra.mxu0 %v1441
    %v2479 = vpop.f32.mrf.mxu0
    %v2480 = vadd.f32 0.0, %v2479
    %v2481 = vpop.f32.mrf.mxu0
    %v2482 = vpop.f32.mrf.mxu0
    %v2483 = vadd.f32 0.0, %v2482
    %v2484 = vpop.f32.mrf.mxu0
    %2485 = vmatprep.mubr.bf16.mxu0 %v1451
    %2486 = vmatmul.mubr.bf16.gmra.mxu0 %v1450
    %v2487 = vpop.f32.mrf.mxu0
    %v2488 = vadd.f32 0.0, %v2487
    %v2489 = vpop.f32.mrf.mxu0
    %v2490 = vpop.f32.mrf.mxu0
    %v2491 = vadd.f32 0.0, %v2490
    %v2492 = vpop.f32.mrf.mxu0
    %2493 = vmatprep.mubr.bf16.mxu0 %v1460
    %2494 = vmatmul.mubr.bf16.gmra.mxu0 %v1459
    %v2495 = vpop.f32.mrf.mxu0
    %v2496 = vadd.f32 0.0, %v2495
    %v2497 = vpop.f32.mrf.mxu0
    %v2498 = vpop.f32.mrf.mxu0
    %v2499 = vadd.f32 0.0, %v2498
    %v2500 = vpop.f32.mrf.mxu0
    %2501 = vmatprep.mubr.bf16.mxu0 %v1469
    %2502 = vmatmul.mubr.bf16.gmra.mxu0 %v1468
    %v2503 = vpop.f32.mrf.mxu0
    %v2504 = vadd.f32 0.0, %v2503
    %v2505 = vpop.f32.mrf.mxu0
    %v2506 = vpop.f32.mrf.mxu0
    %v2507 = vadd.f32 0.0, %v2506
    %v2508 = vpop.f32.mrf.mxu0
    %2509 = vmatprep.mubr.bf16.mxu0 %v1478
    %2510 = vmatmul.mubr.bf16.gmra.mxu0 %v1477
    %v2511 = vpop.f32.mrf.mxu0
    %v2512 = vadd.f32 0.0, %v2511
    %v2513 = vpop.f32.mrf.mxu0
    %v2514 = vpop.f32.mrf.mxu0
    %v2515 = vadd.f32 0.0, %v2514
    %v2516 = vpop.f32.mrf.mxu0
    %2517 = vmatprep.mubr.bf16.mxu0 %v1487
    %2518 = vmatmul.mubr.bf16.gmra.mxu0 %v1486
    %v2519 = vpop.f32.mrf.mxu0
    %v2520 = vadd.f32 0.0, %v2519
    %v2521 = vpop.f32.mrf.mxu0
    %v2522 = vpop.f32.mrf.mxu0
    %v2523 = vadd.f32 0.0, %v2522
    %v2524 = vpop.f32.mrf.mxu0
    %2525 = vmatprep.mubr.bf16.mxu0 %v1496
    %2526 = vmatmul.mubr.bf16.gmra.mxu0 %v1495
    %v2527 = vpop.f32.mrf.mxu0
    %v2528 = vadd.f32 0.0, %v2527
    %v2529 = vpop.f32.mrf.mxu0
    %v2530 = vpop.f32.mrf.mxu0
    %v2531 = vadd.f32 0.0, %v2530
    %v2532 = vpop.f32.mrf.mxu0
    %2533 = vmatprep.mubr.bf16.mxu0 %v1505
    %2534 = vmatmul.mubr.bf16.gmra.mxu0 %v1504
    %v2535 = vpop.f32.mrf.mxu0
    %v2536 = vadd.f32 0.0, %v2535
    %v2537 = vpop.f32.mrf.mxu0
    %v2538 = vpop.f32.mrf.mxu0
    %v2539 = vadd.f32 0.0, %v2538
    %v2540 = vpop.f32.mrf.mxu0
    %2541 = vmatprep.mubr.bf16.mxu0 %v1514
    %2542 = vmatmul.mubr.bf16.gmra.mxu0 %v1513
    %v2543 = vpop.f32.mrf.mxu0
    %v2544 = vadd.f32 0.0, %v2543
    %v2545 = vpop.f32.mrf.mxu0
    %v2546 = vpop.f32.mrf.mxu0
    %v2547 = vadd.f32 0.0, %v2546
    %v2548 = vpop.f32.mrf.mxu0
    %2549 = vmatprep.mubr.bf16.mxu0 %v1523
    %2550 = vmatmul.mubr.bf16.gmra.mxu0 %v1522
    %v2551 = vpop.f32.mrf.mxu0
    %v2552 = vadd.f32 0.0, %v2551
    %v2553 = vpop.f32.mrf.mxu0
    %v2554 = vpop.f32.mrf.mxu0
    %v2555 = vadd.f32 0.0, %v2554
    %v2556 = vpop.f32.mrf.mxu0
    %2557 = vmatprep.mubr.bf16.mxu0 %v1532
    %2558 = vmatmul.mubr.bf16.gmra.mxu0 %v1531
    %v2559 = vpop.f32.mrf.mxu0
    %v2560 = vadd.f32 0.0, %v2559
    %v2561 = vpop.f32.mrf.mxu0
    %v2562 = vpop.f32.mrf.mxu0
    %v2563 = vadd.f32 0.0, %v2562
    %v2564 = vpop.f32.mrf.mxu0
    %2565 = vmatprep.mubr.bf16.mxu0 %v1541
    %2566 = vmatmul.mubr.bf16.gmra.mxu0 %v1540
    %v2567 = vpop.f32.mrf.mxu0
    %v2568 = vadd.f32 0.0, %v2567
    %v2569 = vpop.f32.mrf.mxu0
    %v2570 = vpop.f32.mrf.mxu0
    %v2571 = vadd.f32 0.0, %v2570
    %v2572 = vpop.f32.mrf.mxu0
    %2573 = vmatprep.mubr.bf16.mxu0 %v1550
    %2574 = vmatmul.mubr.bf16.gmra.mxu0 %v1549
    %v2575 = vpop.f32.mrf.mxu0
    %v2576 = vadd.f32 0.0, %v2575
    %v2577 = vpop.f32.mrf.mxu0
    %v2578 = vpop.f32.mrf.mxu0
    %v2579 = vadd.f32 0.0, %v2578
    %v2580 = vpop.f32.mrf.mxu0
    %2581 = vmatprep.mubr.bf16.mxu0 %v1559
    %2582 = vmatmul.mubr.bf16.gmra.mxu0 %v1558
    %v2583 = vpop.f32.mrf.mxu0
    %v2584 = vadd.f32 0.0, %v2583
    %v2585 = vpop.f32.mrf.mxu0
    %v2586 = vpop.f32.mrf.mxu0
    %v2587 = vadd.f32 0.0, %v2586
    %v2588 = vpop.f32.mrf.mxu0
    %2589 = vmatprep.mubr.bf16.mxu0 %v1568
    %2590 = vmatmul.mubr.bf16.gmra.mxu0 %v1567
    %v2591 = vpop.f32.mrf.mxu0
    %v2592 = vadd.f32 0.0, %v2591
    %v2593 = vpop.f32.mrf.mxu0
    %v2594 = vpop.f32.mrf.mxu0
    %v2595 = vadd.f32 0.0, %v2594
    %v2596 = vpop.f32.mrf.mxu0
    %2597 = vmatprep.mubr.bf16.mxu0 %v1577
    %2598 = vmatmul.mubr.bf16.gmra.mxu0 %v1576
    %v2599 = vpop.f32.mrf.mxu0
    %v2600 = vadd.f32 0.0, %v2599
    %v2601 = vpop.f32.mrf.mxu0
    %v2602 = vpop.f32.mrf.mxu0
    %v2603 = vadd.f32 0.0, %v2602
    %v2604 = vpop.f32.mrf.mxu0
    %2605 = vmatprep.mubr.bf16.mxu0 %v1586
    %2606 = vmatmul.mubr.bf16.gmra.mxu0 %v1585
    %v2607 = vpop.f32.mrf.mxu0
    %v2608 = vadd.f32 0.0, %v2607
    %v2609 = vpop.f32.mrf.mxu0
    %v2610 = vpop.f32.mrf.mxu0
    %v2611 = vadd.f32 0.0, %v2610
    %v2612 = vpop.f32.mrf.mxu0
    %2613 = vmatprep.mubr.bf16.mxu0 %v1595
    %2614 = vmatmul.mubr.bf16.gmra.mxu0 %v1594
    %v2615 = vpop.f32.mrf.mxu0
    %v2616 = vadd.f32 0.0, %v2615
    %v2617 = vpop.f32.mrf.mxu0
    %v2618 = vpop.f32.mrf.mxu0
    %v2619 = vadd.f32 0.0, %v2618
    %v2620 = vpop.f32.mrf.mxu0
    %2621 = vmatprep.mubr.bf16.mxu0 %v1604
    %2622 = vmatmul.mubr.bf16.gmra.mxu0 %v1603
    %v2623 = vpop.f32.mrf.mxu0
    %v2624 = vadd.f32 0.0, %v2623
    %v2625 = vpop.f32.mrf.mxu0
    %v2626 = vpop.f32.mrf.mxu0
    %v2627 = vadd.f32 0.0, %v2626
    %v2628 = vpop.f32.mrf.mxu0
    %2629 = vmatprep.mubr.bf16.mxu0 %v1613
    %2630 = vmatmul.mubr.bf16.gmra.mxu0 %v1612
    %v2631 = vpop.f32.mrf.mxu0
    %v2632 = vadd.f32 0.0, %v2631
    %v2633 = vpop.f32.mrf.mxu0
    %v2634 = vpop.f32.mrf.mxu0
    %v2635 = vadd.f32 0.0, %v2634
    %v2636 = vpop.f32.mrf.mxu0
    %2637 = vmatprep.mubr.bf16.mxu0 %v1622
    %2638 = vmatmul.mubr.bf16.gmra.mxu0 %v1621
    %v2639 = vpop.f32.mrf.mxu0
    %v2640 = vadd.f32 0.0, %v2639
    %v2641 = vpop.f32.mrf.mxu0
    %v2642 = vpop.f32.mrf.mxu0
    %v2643 = vadd.f32 0.0, %v2642
    %v2644 = vpop.f32.mrf.mxu0
    %2645 = vmatprep.mubr.bf16.mxu0 %v1631
    %2646 = vmatmul.mubr.bf16.gmra.mxu0 %v1630
    %v2647 = vpop.f32.mrf.mxu0
    %v2648 = vadd.f32 0.0, %v2647
    %v2649 = vpop.f32.mrf.mxu0
    %v2650 = vpop.f32.mrf.mxu0
    %v2651 = vadd.f32 0.0, %v2650
    %v2652 = vpop.f32.mrf.mxu0
    %2653 = vmatprep.mubr.bf16.mxu0 %v1640
    %2654 = vmatmul.mubr.bf16.gmra.mxu0 %v1639
    %v2655 = vpop.f32.mrf.mxu0
    %v2656 = vadd.f32 0.0, %v2655
    %v2657 = vpop.f32.mrf.mxu0
    %v2658 = vpop.f32.mrf.mxu0
    %v2659 = vadd.f32 0.0, %v2658
    %v2660 = vpop.f32.mrf.mxu0
    %2661 = vmatprep.mubr.bf16.mxu0 %v1649
    %2662 = vmatmul.mubr.bf16.gmra.mxu0 %v1648
    %v2663 = vpop.f32.mrf.mxu0
    %v2664 = vadd.f32 0.0, %v2663
    %v2665 = vpop.f32.mrf.mxu0
    %v2666 = vpop.f32.mrf.mxu0
    %v2667 = vadd.f32 0.0, %v2666
    %v2668 = vpop.f32.mrf.mxu0
    %2669 = vmatprep.mubr.bf16.mxu0 %v1658
    %2670 = vmatmul.mubr.bf16.gmra.mxu0 %v1657
    %v2671 = vpop.f32.mrf.mxu0
    %v2672 = vadd.f32 0.0, %v2671
    %v2673 = vpop.f32.mrf.mxu0
    %v2674 = vpop.f32.mrf.mxu0
    %v2675 = vadd.f32 0.0, %v2674
    %v2676 = vpop.f32.mrf.mxu0
    %2677 = vmatprep.mubr.bf16.mxu0 %v1667
    %2678 = vmatmul.mubr.bf16.gmra.mxu0 %v1666
    %v2679 = vpop.f32.mrf.mxu0
    %v2680 = vadd.f32 0.0, %v2679
    %v2681 = vpop.f32.mrf.mxu0
    %v2682 = vpop.f32.mrf.mxu0
    %v2683 = vadd.f32 0.0, %v2682
    %v2684 = vpop.f32.mrf.mxu0
    %2685 = vmatprep.mubr.bf16.mxu0 %v1676
    %2686 = vmatmul.mubr.bf16.gmra.mxu0 %v1675
    %v2687 = vpop.f32.mrf.mxu0
    %v2688 = vadd.f32 0.0, %v2687
    %v2689 = vpop.f32.mrf.mxu0
    %v2690 = vpop.f32.mrf.mxu0
    %v2691 = vadd.f32 0.0, %v2690
    %v2692 = vpop.f32.mrf.mxu0
    %2693 = vmatprep.mubr.bf16.mxu0 %v1685
    %2694 = vmatmul.mubr.bf16.gmra.mxu0 %v1684
    %v2695 = vpop.f32.mrf.mxu0
    %v2696 = vadd.f32 0.0, %v2695
    %v2697 = vpop.f32.mrf.mxu0
    %v2698 = vpop.f32.mrf.mxu0
    %v2699 = vadd.f32 0.0, %v2698
    %v2700 = vpop.f32.mrf.mxu0
    %2701 = vdwg.mxu0
    %2702 = vmatprep.subr.bf16.mxu0 0
    %2703 = vmatpush1.bf16.msra.mxu0 %v2292
    %2704 = vmatprep.subr.bf16.mxu0 0
    %2705 = vmatpush1.bf16.msra.mxu0 %v2291
    %2706 = vmatprep.subr.bf16.mxu0 0
    %2707 = vmatpush1.bf16.msra.mxu0 %v2290
    %2708 = vmatprep.subr.bf16.mxu0 0
    %2709 = vmatpush1.bf16.msra.mxu0 %v2289
    %2710 = vmatprep.subr.bf16.mxu0 0
    %2711 = vmatpush1.bf16.msra.mxu0 %v2288
    %2712 = vmatprep.subr.bf16.mxu0 0
    %2713 = vmatpush1.bf16.msra.mxu0 %v2287
    %2714 = vmatprep.subr.bf16.mxu0 0
    %2715 = vmatpush1.bf16.msra.mxu0 %v2286
    %2716 = vmatprep.subr.bf16.mxu0 0
    %2717 = vmatpush1.bf16.msra.mxu0 %v2285
    %2718 = vmatprep.subr.bf16.mxu0 0
    %2719 = vmatpush2.bf16.msra.mxu0 %v2300
    %2720 = vmatprep.subr.bf16.mxu0 0
    %2721 = vmatpush2.bf16.msra.mxu0 %v2299
    %2722 = vmatprep.subr.bf16.mxu0 0
    %2723 = vmatpush2.bf16.msra.mxu0 %v2298
    %2724 = vmatprep.subr.bf16.mxu0 0
    %2725 = vmatpush2.bf16.msra.mxu0 %v2297
    %2726 = vmatprep.subr.bf16.mxu0 0
    %2727 = vmatpush2.bf16.msra.mxu0 %v2296
    %2728 = vmatprep.subr.bf16.mxu0 0
    %2729 = vmatpush2.bf16.msra.mxu0 %v2295
    %2730 = vmatprep.subr.bf16.mxu0 0
    %2731 = vmatpush2.bf16.msra.mxu0 %v2294
    %2732 = vmatprep.subr.bf16.mxu0 0
    %2733 = vmatpush2.bf16.msra.mxu0 %v2293
    %2734 = vmatprep.mubr.bf16.mxu0 %v1408
    %2735 = vmatmul.mubr.bf16.gmra.mxu0 %v1407
    %v2736 = vpop.f32.mrf.mxu0
    %v2737 = vadd.f32 %v2448, %v2736
    %v2738 = vpop.f32.mrf.mxu0
    %v2739 = vpop.f32.mrf.mxu0
    %v2740 = vadd.f32 %v2451, %v2739
    %v2741 = vpop.f32.mrf.mxu0
    %2742 = vmatprep.mubr.bf16.mxu0 %v1417
    %2743 = vmatmul.mubr.bf16.gmra.mxu0 %v1416
    %v2744 = vpop.f32.mrf.mxu0
    %v2745 = vadd.f32 %v2456, %v2744
    %v2746 = vpop.f32.mrf.mxu0
    %v2747 = vpop.f32.mrf.mxu0
    %v2748 = vadd.f32 %v2459, %v2747
    %v2749 = vpop.f32.mrf.mxu0
    %2750 = vmatprep.mubr.bf16.mxu0 %v1426
    %2751 = vmatmul.mubr.bf16.gmra.mxu0 %v1425
    %v2752 = vpop.f32.mrf.mxu0
    %v2753 = vadd.f32 %v2464, %v2752
    %v2754 = vpop.f32.mrf.mxu0
    %v2755 = vpop.f32.mrf.mxu0
    %v2756 = vadd.f32 %v2467, %v2755
    %v2757 = vpop.f32.mrf.mxu0
    %2758 = vmatprep.mubr.bf16.mxu0 %v1435
    %2759 = vmatmul.mubr.bf16.gmra.mxu0 %v1434
    %v2760 = vpop.f32.mrf.mxu0
    %v2761 = vadd.f32 %v2472, %v2760
    %v2762 = vpop.f32.mrf.mxu0
    %v2763 = vpop.f32.mrf.mxu0
    %v2764 = vadd.f32 %v2475, %v2763
    %v2765 = vpop.f32.mrf.mxu0
    %2766 = vmatprep.mubr.bf16.mxu0 %v1444
    %2767 = vmatmul.mubr.bf16.gmra.mxu0 %v1443
    %v2768 = vpop.f32.mrf.mxu0
    %v2769 = vadd.f32 %v2480, %v2768
    %v2770 = vpop.f32.mrf.mxu0
    %v2771 = vpop.f32.mrf.mxu0
    %v2772 = vadd.f32 %v2483, %v2771
    %v2773 = vpop.f32.mrf.mxu0
    %2774 = vmatprep.mubr.bf16.mxu0 %v1453
    %2775 = vmatmul.mubr.bf16.gmra.mxu0 %v1452
    %v2776 = vpop.f32.mrf.mxu0
    %v2777 = vadd.f32 %v2488, %v2776
    %v2778 = vpop.f32.mrf.mxu0
    %v2779 = vpop.f32.mrf.mxu0
    %v2780 = vadd.f32 %v2491, %v2779
    %v2781 = vpop.f32.mrf.mxu0
    %2782 = vmatprep.mubr.bf16.mxu0 %v1462
    %2783 = vmatmul.mubr.bf16.gmra.mxu0 %v1461
    %v2784 = vpop.f32.mrf.mxu0
    %v2785 = vadd.f32 %v2496, %v2784
    %v2786 = vpop.f32.mrf.mxu0
    %v2787 = vpop.f32.mrf.mxu0
    %v2788 = vadd.f32 %v2499, %v2787
    %v2789 = vpop.f32.mrf.mxu0
    %2790 = vmatprep.mubr.bf16.mxu0 %v1471
    %2791 = vmatmul.mubr.bf16.gmra.mxu0 %v1470
    %v2792 = vpop.f32.mrf.mxu0
    %v2793 = vadd.f32 %v2504, %v2792
    %v2794 = vpop.f32.mrf.mxu0
    %v2795 = vpop.f32.mrf.mxu0
    %v2796 = vadd.f32 %v2507, %v2795
    %v2797 = vpop.f32.mrf.mxu0
    %2798 = vmatprep.mubr.bf16.mxu0 %v1480
    %2799 = vmatmul.mubr.bf16.gmra.mxu0 %v1479
    %v2800 = vpop.f32.mrf.mxu0
    %v2801 = vadd.f32 %v2512, %v2800
    %v2802 = vpop.f32.mrf.mxu0
    %v2803 = vpop.f32.mrf.mxu0
    %v2804 = vadd.f32 %v2515, %v2803
    %v2805 = vpop.f32.mrf.mxu0
    %2806 = vmatprep.mubr.bf16.mxu0 %v1489
    %2807 = vmatmul.mubr.bf16.gmra.mxu0 %v1488
    %v2808 = vpop.f32.mrf.mxu0
    %v2809 = vadd.f32 %v2520, %v2808
    %v2810 = vpop.f32.mrf.mxu0
    %v2811 = vpop.f32.mrf.mxu0
    %v2812 = vadd.f32 %v2523, %v2811
    %v2813 = vpop.f32.mrf.mxu0
    %2814 = vmatprep.mubr.bf16.mxu0 %v1498
    %2815 = vmatmul.mubr.bf16.gmra.mxu0 %v1497
    %v2816 = vpop.f32.mrf.mxu0
    %v2817 = vadd.f32 %v2528, %v2816
    %v2818 = vpop.f32.mrf.mxu0
    %v2819 = vpop.f32.mrf.mxu0
    %v2820 = vadd.f32 %v2531, %v2819
    %v2821 = vpop.f32.mrf.mxu0
    %2822 = vmatprep.mubr.bf16.mxu0 %v1507
    %2823 = vmatmul.mubr.bf16.gmra.mxu0 %v1506
    %v2824 = vpop.f32.mrf.mxu0
    %v2825 = vadd.f32 %v2536, %v2824
    %v2826 = vpop.f32.mrf.mxu0
    %v2827 = vpop.f32.mrf.mxu0
    %v2828 = vadd.f32 %v2539, %v2827
    %v2829 = vpop.f32.mrf.mxu0
    %2830 = vmatprep.mubr.bf16.mxu0 %v1516
    %2831 = vmatmul.mubr.bf16.gmra.mxu0 %v1515
    %v2832 = vpop.f32.mrf.mxu0
    %v2833 = vadd.f32 %v2544, %v2832
    %v2834 = vpop.f32.mrf.mxu0
    %v2835 = vpop.f32.mrf.mxu0
    %v2836 = vadd.f32 %v2547, %v2835
    %v2837 = vpop.f32.mrf.mxu0
    %2838 = vmatprep.mubr.bf16.mxu0 %v1525
    %2839 = vmatmul.mubr.bf16.gmra.mxu0 %v1524
    %v2840 = vpop.f32.mrf.mxu0
    %v2841 = vadd.f32 %v2552, %v2840
    %v2842 = vpop.f32.mrf.mxu0
    %v2843 = vpop.f32.mrf.mxu0
    %v2844 = vadd.f32 %v2555, %v2843
    %v2845 = vpop.f32.mrf.mxu0
    %2846 = vmatprep.mubr.bf16.mxu0 %v1534
    %2847 = vmatmul.mubr.bf16.gmra.mxu0 %v1533
    %v2848 = vpop.f32.mrf.mxu0
    %v2849 = vadd.f32 %v2560, %v2848
    %v2850 = vpop.f32.mrf.mxu0
    %v2851 = vpop.f32.mrf.mxu0
    %v2852 = vadd.f32 %v2563, %v2851
    %v2853 = vpop.f32.mrf.mxu0
    %2854 = vmatprep.mubr.bf16.mxu0 %v1543
    %2855 = vmatmul.mubr.bf16.gmra.mxu0 %v1542
    %v2856 = vpop.f32.mrf.mxu0
    %v2857 = vadd.f32 %v2568, %v2856
    %v2858 = vpop.f32.mrf.mxu0
    %v2859 = vpop.f32.mrf.mxu0
    %v2860 = vadd.f32 %v2571, %v2859
    %v2861 = vpop.f32.mrf.mxu0
    %2862 = vmatprep.mubr.bf16.mxu0 %v1552
    %2863 = vmatmul.mubr.bf16.gmra.mxu0 %v1551
    %v2864 = vpop.f32.mrf.mxu0
    %v2865 = vadd.f32 %v2576, %v2864
    %v2866 = vpop.f32.mrf.mxu0
    %v2867 = vpop.f32.mrf.mxu0
    %v2868 = vadd.f32 %v2579, %v2867
    %v2869 = vpop.f32.mrf.mxu0
    %2870 = vmatprep.mubr.bf16.mxu0 %v1561
    %2871 = vmatmul.mubr.bf16.gmra.mxu0 %v1560
    %v2872 = vpop.f32.mrf.mxu0
    %v2873 = vadd.f32 %v2584, %v2872
    %v2874 = vpop.f32.mrf.mxu0
    %v2875 = vpop.f32.mrf.mxu0
    %v2876 = vadd.f32 %v2587, %v2875
    %v2877 = vpop.f32.mrf.mxu0
    %2878 = vmatprep.mubr.bf16.mxu0 %v1570
    %2879 = vmatmul.mubr.bf16.gmra.mxu0 %v1569
    %v2880 = vpop.f32.mrf.mxu0
    %v2881 = vadd.f32 %v2592, %v2880
    %v2882 = vpop.f32.mrf.mxu0
    %v2883 = vpop.f32.mrf.mxu0
    %v2884 = vadd.f32 %v2595, %v2883
    %v2885 = vpop.f32.mrf.mxu0
    %2886 = vmatprep.mubr.bf16.mxu0 %v1579
    %2887 = vmatmul.mubr.bf16.gmra.mxu0 %v1578
    %v2888 = vpop.f32.mrf.mxu0
    %v2889 = vadd.f32 %v2600, %v2888
    %v2890 = vpop.f32.mrf.mxu0
    %v2891 = vpop.f32.mrf.mxu0
    %v2892 = vadd.f32 %v2603, %v2891
    %v2893 = vpop.f32.mrf.mxu0
    %2894 = vmatprep.mubr.bf16.mxu0 %v1588
    %2895 = vmatmul.mubr.bf16.gmra.mxu0 %v1587
    %v2896 = vpop.f32.mrf.mxu0
    %v2897 = vadd.f32 %v2608, %v2896
    %v2898 = vpop.f32.mrf.mxu0
    %v2899 = vpop.f32.mrf.mxu0
    %v2900 = vadd.f32 %v2611, %v2899
    %v2901 = vpop.f32.mrf.mxu0
    %2902 = vmatprep.mubr.bf16.mxu0 %v1597
    %2903 = vmatmul.mubr.bf16.gmra.mxu0 %v1596
    %v2904 = vpop.f32.mrf.mxu0
    %v2905 = vadd.f32 %v2616, %v2904
    %v2906 = vpop.f32.mrf.mxu0
    %v2907 = vpop.f32.mrf.mxu0
    %v2908 = vadd.f32 %v2619, %v2907
    %v2909 = vpop.f32.mrf.mxu0
    %2910 = vmatprep.mubr.bf16.mxu0 %v1606
    %2911 = vmatmul.mubr.bf16.gmra.mxu0 %v1605
    %v2912 = vpop.f32.mrf.mxu0
    %v2913 = vadd.f32 %v2624, %v2912
    %v2914 = vpop.f32.mrf.mxu0
    %v2915 = vpop.f32.mrf.mxu0
    %v2916 = vadd.f32 %v2627, %v2915
    %v2917 = vpop.f32.mrf.mxu0
    %2918 = vmatprep.mubr.bf16.mxu0 %v1615
    %2919 = vmatmul.mubr.bf16.gmra.mxu0 %v1614
    %v2920 = vpop.f32.mrf.mxu0
    %v2921 = vadd.f32 %v2632, %v2920
    %v2922 = vpop.f32.mrf.mxu0
    %v2923 = vpop.f32.mrf.mxu0
    %v2924 = vadd.f32 %v2635, %v2923
    %v2925 = vpop.f32.mrf.mxu0
    %2926 = vmatprep.mubr.bf16.mxu0 %v1624
    %2927 = vmatmul.mubr.bf16.gmra.mxu0 %v1623
    %v2928 = vpop.f32.mrf.mxu0
    %v2929 = vadd.f32 %v2640, %v2928
    %v2930 = vpop.f32.mrf.mxu0
    %v2931 = vpop.f32.mrf.mxu0
    %v2932 = vadd.f32 %v2643, %v2931
    %v2933 = vpop.f32.mrf.mxu0
    %2934 = vmatprep.mubr.bf16.mxu0 %v1633
    %2935 = vmatmul.mubr.bf16.gmra.mxu0 %v1632
    %v2936 = vpop.f32.mrf.mxu0
    %v2937 = vadd.f32 %v2648, %v2936
    %v2938 = vpop.f32.mrf.mxu0
    %v2939 = vpop.f32.mrf.mxu0
    %v2940 = vadd.f32 %v2651, %v2939
    %v2941 = vpop.f32.mrf.mxu0
    %2942 = vmatprep.mubr.bf16.mxu0 %v1642
    %2943 = vmatmul.mubr.bf16.gmra.mxu0 %v1641
    %v2944 = vpop.f32.mrf.mxu0
    %v2945 = vadd.f32 %v2656, %v2944
    %v2946 = vpop.f32.mrf.mxu0
    %v2947 = vpop.f32.mrf.mxu0
    %v2948 = vadd.f32 %v2659, %v2947
    %v2949 = vpop.f32.mrf.mxu0
    %2950 = vmatprep.mubr.bf16.mxu0 %v1651
    %2951 = vmatmul.mubr.bf16.gmra.mxu0 %v1650
    %v2952 = vpop.f32.mrf.mxu0
    %v2953 = vadd.f32 %v2664, %v2952
    %v2954 = vpop.f32.mrf.mxu0
    %v2955 = vpop.f32.mrf.mxu0
    %v2956 = vadd.f32 %v2667, %v2955
    %v2957 = vpop.f32.mrf.mxu0
    %2958 = vmatprep.mubr.bf16.mxu0 %v1660
    %2959 = vmatmul.mubr.bf16.gmra.mxu0 %v1659
    %v2960 = vpop.f32.mrf.mxu0
    %v2961 = vadd.f32 %v2672, %v2960
    %v2962 = vpop.f32.mrf.mxu0
    %v2963 = vpop.f32.mrf.mxu0
    %v2964 = vadd.f32 %v2675, %v2963
    %v2965 = vpop.f32.mrf.mxu0
    %2966 = vmatprep.mubr.bf16.mxu0 %v1669
    %2967 = vmatmul.mubr.bf16.gmra.mxu0 %v1668
    %v2968 = vpop.f32.mrf.mxu0
    %v2969 = vadd.f32 %v2680, %v2968
    %v2970 = vpop.f32.mrf.mxu0
    %v2971 = vpop.f32.mrf.mxu0
    %v2972 = vadd.f32 %v2683, %v2971
    %v2973 = vpop.f32.mrf.mxu0
    %2974 = vmatprep.mubr.bf16.mxu0 %v1678
    %2975 = vmatmul.mubr.bf16.gmra.mxu0 %v1677
    %v2976 = vpop.f32.mrf.mxu0
    %v2977 = vadd.f32 %v2688, %v2976
    %v2978 = vpop.f32.mrf.mxu0
    %v2979 = vpop.f32.mrf.mxu0
    %v2980 = vadd.f32 %v2691, %v2979
    %v2981 = vpop.f32.mrf.mxu0
    %2982 = vmatprep.mubr.bf16.mxu0 %v1687
    %2983 = vmatmul.mubr.bf16.gmra.mxu0 %v1686
    %v2984 = vpop.f32.mrf.mxu0
    %v2985 = vadd.f32 %v2696, %v2984
    %v2986 = vpop.f32.mrf.mxu0
    %v2987 = vpop.f32.mrf.mxu0
    %v2988 = vadd.f32 %v2699, %v2987
    %v2989 = vpop.f32.mrf.mxu0
    %2990 = vdwg.mxu0
    %2991 = vmatprep.subr.bf16.mxu0 0
    %2992 = vmatpush1.bf16.msra.mxu0 %v2308
    %2993 = vmatprep.subr.bf16.mxu0 0
    %2994 = vmatpush1.bf16.msra.mxu0 %v2307
    %2995 = vmatprep.subr.bf16.mxu0 0
    %2996 = vmatpush1.bf16.msra.mxu0 %v2306
    %2997 = vmatprep.subr.bf16.mxu0 0
    %2998 = vmatpush1.bf16.msra.mxu0 %v2305
    %2999 = vmatprep.subr.bf16.mxu0 0
    %3000 = vmatpush1.bf16.msra.mxu0 %v2304
    %3001 = vmatprep.subr.bf16.mxu0 0
    %3002 = vmatpush1.bf16.msra.mxu0 %v2303
    %3003 = vmatprep.subr.bf16.mxu0 0
    %3004 = vmatpush1.bf16.msra.mxu0 %v2302
    %3005 = vmatprep.subr.bf16.mxu0 0
    %3006 = vmatpush1.bf16.msra.mxu0 %v2301
    %3007 = vmatprep.subr.bf16.mxu0 0
    %3008 = vmatpush2.bf16.msra.mxu0 %v2316
    %3009 = vmatprep.subr.bf16.mxu0 0
    %3010 = vmatpush2.bf16.msra.mxu0 %v2315
    %3011 = vmatprep.subr.bf16.mxu0 0
    %3012 = vmatpush2.bf16.msra.mxu0 %v2314
    %3013 = vmatprep.subr.bf16.mxu0 0
    %3014 = vmatpush2.bf16.msra.mxu0 %v2313
    %3015 = vmatprep.subr.bf16.mxu0 0
    %3016 = vmatpush2.bf16.msra.mxu0 %v2312
    %3017 = vmatprep.subr.bf16.mxu0 0
    %3018 = vmatpush2.bf16.msra.mxu0 %v2311
    %3019 = vmatprep.subr.bf16.mxu0 0
    %3020 = vmatpush2.bf16.msra.mxu0 %v2310
    %3021 = vmatprep.subr.bf16.mxu0 0
    %3022 = vmatpush2.bf16.msra.mxu0 %v2309
    %3023 = vmatprep.mubr.bf16.mxu0 %v1410
    %3024 = vmatmul.mubr.bf16.gmra.mxu0 %v1409
    %v3025 = vpop.f32.mrf.mxu0
    %v3026 = vadd.f32 %v2737, %v3025
    %v3027 = vpop.f32.mrf.mxu0
    %v3028 = vpop.f32.mrf.mxu0
    %v3029 = vadd.f32 %v2740, %v3028
    %v3030 = vpop.f32.mrf.mxu0
    %3031 = vmatprep.mubr.bf16.mxu0 %v1419
    %3032 = vmatmul.mubr.bf16.gmra.mxu0 %v1418
    %v3033 = vpop.f32.mrf.mxu0
    %v3034 = vadd.f32 %v2745, %v3033
    %v3035 = vpop.f32.mrf.mxu0
    %v3036 = vpop.f32.mrf.mxu0
    %v3037 = vadd.f32 %v2748, %v3036
    %v3038 = vpop.f32.mrf.mxu0
    %3039 = vmatprep.mubr.bf16.mxu0 %v1428
    %3040 = vmatmul.mubr.bf16.gmra.mxu0 %v1427
    %v3041 = vpop.f32.mrf.mxu0
    %v3042 = vadd.f32 %v2753, %v3041
    %v3043 = vpop.f32.mrf.mxu0
    %v3044 = vpop.f32.mrf.mxu0
    %v3045 = vadd.f32 %v2756, %v3044
    %v3046 = vpop.f32.mrf.mxu0
    %3047 = vmatprep.mubr.bf16.mxu0 %v1437
    %3048 = vmatmul.mubr.bf16.gmra.mxu0 %v1436
    %v3049 = vpop.f32.mrf.mxu0
    %v3050 = vadd.f32 %v2761, %v3049
    %v3051 = vpop.f32.mrf.mxu0
    %v3052 = vpop.f32.mrf.mxu0
    %v3053 = vadd.f32 %v2764, %v3052
    %v3054 = vpop.f32.mrf.mxu0
    %3055 = vmatprep.mubr.bf16.mxu0 %v1446
    %3056 = vmatmul.mubr.bf16.gmra.mxu0 %v1445
    %v3057 = vpop.f32.mrf.mxu0
    %v3058 = vadd.f32 %v2769, %v3057
    %v3059 = vpop.f32.mrf.mxu0
    %v3060 = vpop.f32.mrf.mxu0
    %v3061 = vadd.f32 %v2772, %v3060
    %v3062 = vpop.f32.mrf.mxu0
    %3063 = vmatprep.mubr.bf16.mxu0 %v1455
    %3064 = vmatmul.mubr.bf16.gmra.mxu0 %v1454
    %v3065 = vpop.f32.mrf.mxu0
    %v3066 = vadd.f32 %v2777, %v3065
    %v3067 = vpop.f32.mrf.mxu0
    %v3068 = vpop.f32.mrf.mxu0
    %v3069 = vadd.f32 %v2780, %v3068
    %v3070 = vpop.f32.mrf.mxu0
    %3071 = vmatprep.mubr.bf16.mxu0 %v1464
    %3072 = vmatmul.mubr.bf16.gmra.mxu0 %v1463
    %v3073 = vpop.f32.mrf.mxu0
    %v3074 = vadd.f32 %v2785, %v3073
    %v3075 = vpop.f32.mrf.mxu0
    %v3076 = vpop.f32.mrf.mxu0
    %v3077 = vadd.f32 %v2788, %v3076
    %v3078 = vpop.f32.mrf.mxu0
    %3079 = vmatprep.mubr.bf16.mxu0 %v1473
    %3080 = vmatmul.mubr.bf16.gmra.mxu0 %v1472
    %v3081 = vpop.f32.mrf.mxu0
    %v3082 = vadd.f32 %v2793, %v3081
    %v3083 = vpop.f32.mrf.mxu0
    %v3084 = vpop.f32.mrf.mxu0
    %v3085 = vadd.f32 %v2796, %v3084
    %v3086 = vpop.f32.mrf.mxu0
    %3087 = vmatprep.mubr.bf16.mxu0 %v1482
    %3088 = vmatmul.mubr.bf16.gmra.mxu0 %v1481
    %v3089 = vpop.f32.mrf.mxu0
    %v3090 = vadd.f32 %v2801, %v3089
    %v3091 = vpop.f32.mrf.mxu0
    %v3092 = vpop.f32.mrf.mxu0
    %v3093 = vadd.f32 %v2804, %v3092
    %v3094 = vpop.f32.mrf.mxu0
    %3095 = vmatprep.mubr.bf16.mxu0 %v1491
    %3096 = vmatmul.mubr.bf16.gmra.mxu0 %v1490
    %v3097 = vpop.f32.mrf.mxu0
    %v3098 = vadd.f32 %v2809, %v3097
    %v3099 = vpop.f32.mrf.mxu0
    %v3100 = vpop.f32.mrf.mxu0
    %v3101 = vadd.f32 %v2812, %v3100
    %v3102 = vpop.f32.mrf.mxu0
    %3103 = vmatprep.mubr.bf16.mxu0 %v1500
    %3104 = vmatmul.mubr.bf16.gmra.mxu0 %v1499
    %v3105 = vpop.f32.mrf.mxu0
    %v3106 = vadd.f32 %v2817, %v3105
    %v3107 = vpop.f32.mrf.mxu0
    %v3108 = vpop.f32.mrf.mxu0
    %v3109 = vadd.f32 %v2820, %v3108
    %v3110 = vpop.f32.mrf.mxu0
    %3111 = vmatprep.mubr.bf16.mxu0 %v1509
    %3112 = vmatmul.mubr.bf16.gmra.mxu0 %v1508
    %v3113 = vpop.f32.mrf.mxu0
    %v3114 = vadd.f32 %v2825, %v3113
    %v3115 = vpop.f32.mrf.mxu0
    %v3116 = vpop.f32.mrf.mxu0
    %v3117 = vadd.f32 %v2828, %v3116
    %v3118 = vpop.f32.mrf.mxu0
    %3119 = vmatprep.mubr.bf16.mxu0 %v1518
    %3120 = vmatmul.mubr.bf16.gmra.mxu0 %v1517
    %v3121 = vpop.f32.mrf.mxu0
    %v3122 = vadd.f32 %v2833, %v3121
    %v3123 = vpop.f32.mrf.mxu0
    %v3124 = vpop.f32.mrf.mxu0
    %v3125 = vadd.f32 %v2836, %v3124
    %v3126 = vpop.f32.mrf.mxu0
    %3127 = vmatprep.mubr.bf16.mxu0 %v1527
    %3128 = vmatmul.mubr.bf16.gmra.mxu0 %v1526
    %v3129 = vpop.f32.mrf.mxu0
    %v3130 = vadd.f32 %v2841, %v3129
    %v3131 = vpop.f32.mrf.mxu0
    %v3132 = vpop.f32.mrf.mxu0
    %v3133 = vadd.f32 %v2844, %v3132
    %v3134 = vpop.f32.mrf.mxu0
    %3135 = vmatprep.mubr.bf16.mxu0 %v1536
    %3136 = vmatmul.mubr.bf16.gmra.mxu0 %v1535
    %v3137 = vpop.f32.mrf.mxu0
    %v3138 = vadd.f32 %v2849, %v3137
    %v3139 = vpop.f32.mrf.mxu0
    %v3140 = vpop.f32.mrf.mxu0
    %v3141 = vadd.f32 %v2852, %v3140
    %v3142 = vpop.f32.mrf.mxu0
    %3143 = vmatprep.mubr.bf16.mxu0 %v1545
    %3144 = vmatmul.mubr.bf16.gmra.mxu0 %v1544
    %v3145 = vpop.f32.mrf.mxu0
    %v3146 = vadd.f32 %v2857, %v3145
    %v3147 = vpop.f32.mrf.mxu0
    %v3148 = vpop.f32.mrf.mxu0
    %v3149 = vadd.f32 %v2860, %v3148
    %v3150 = vpop.f32.mrf.mxu0
    %3151 = vmatprep.mubr.bf16.mxu0 %v1554
    %3152 = vmatmul.mubr.bf16.gmra.mxu0 %v1553
    %v3153 = vpop.f32.mrf.mxu0
    %v3154 = vadd.f32 %v2865, %v3153
    %v3155 = vpop.f32.mrf.mxu0
    %v3156 = vpop.f32.mrf.mxu0
    %v3157 = vadd.f32 %v2868, %v3156
    %v3158 = vpop.f32.mrf.mxu0
    %3159 = vmatprep.mubr.bf16.mxu0 %v1563
    %3160 = vmatmul.mubr.bf16.gmra.mxu0 %v1562
    %v3161 = vpop.f32.mrf.mxu0
    %v3162 = vadd.f32 %v2873, %v3161
    %v3163 = vpop.f32.mrf.mxu0
    %v3164 = vpop.f32.mrf.mxu0
    %v3165 = vadd.f32 %v2876, %v3164
    %v3166 = vpop.f32.mrf.mxu0
    %3167 = vmatprep.mubr.bf16.mxu0 %v1572
    %3168 = vmatmul.mubr.bf16.gmra.mxu0 %v1571
    %v3169 = vpop.f32.mrf.mxu0
    %v3170 = vadd.f32 %v2881, %v3169
    %v3171 = vpop.f32.mrf.mxu0
    %v3172 = vpop.f32.mrf.mxu0
    %v3173 = vadd.f32 %v2884, %v3172
    %v3174 = vpop.f32.mrf.mxu0
    %3175 = vmatprep.mubr.bf16.mxu0 %v1581
    %3176 = vmatmul.mubr.bf16.gmra.mxu0 %v1580
    %v3177 = vpop.f32.mrf.mxu0
    %v3178 = vadd.f32 %v2889, %v3177
    %v3179 = vpop.f32.mrf.mxu0
    %v3180 = vpop.f32.mrf.mxu0
    %v3181 = vadd.f32 %v2892, %v3180
    %v3182 = vpop.f32.mrf.mxu0
    %3183 = vmatprep.mubr.bf16.mxu0 %v1590
    %3184 = vmatmul.mubr.bf16.gmra.mxu0 %v1589
    %v3185 = vpop.f32.mrf.mxu0
    %v3186 = vadd.f32 %v2897, %v3185
    %v3187 = vpop.f32.mrf.mxu0
    %v3188 = vpop.f32.mrf.mxu0
    %v3189 = vadd.f32 %v2900, %v3188
    %v3190 = vpop.f32.mrf.mxu0
    %3191 = vmatprep.mubr.bf16.mxu0 %v1599
    %3192 = vmatmul.mubr.bf16.gmra.mxu0 %v1598
    %v3193 = vpop.f32.mrf.mxu0
    %v3194 = vadd.f32 %v2905, %v3193
    %v3195 = vpop.f32.mrf.mxu0
    %v3196 = vpop.f32.mrf.mxu0
    %v3197 = vadd.f32 %v2908, %v3196
    %v3198 = vpop.f32.mrf.mxu0
    %3199 = vmatprep.mubr.bf16.mxu0 %v1608
    %3200 = vmatmul.mubr.bf16.gmra.mxu0 %v1607
    %v3201 = vpop.f32.mrf.mxu0
    %v3202 = vadd.f32 %v2913, %v3201
    %v3203 = vpop.f32.mrf.mxu0
    %v3204 = vpop.f32.mrf.mxu0
    %v3205 = vadd.f32 %v2916, %v3204
    %v3206 = vpop.f32.mrf.mxu0
    %3207 = vmatprep.mubr.bf16.mxu0 %v1617
    %3208 = vmatmul.mubr.bf16.gmra.mxu0 %v1616
    %v3209 = vpop.f32.mrf.mxu0
    %v3210 = vadd.f32 %v2921, %v3209
    %v3211 = vpop.f32.mrf.mxu0
    %v3212 = vpop.f32.mrf.mxu0
    %v3213 = vadd.f32 %v2924, %v3212
    %v3214 = vpop.f32.mrf.mxu0
    %3215 = vmatprep.mubr.bf16.mxu0 %v1626
    %3216 = vmatmul.mubr.bf16.gmra.mxu0 %v1625
    %v3217 = vpop.f32.mrf.mxu0
    %v3218 = vadd.f32 %v2929, %v3217
    %v3219 = vpop.f32.mrf.mxu0
    %v3220 = vpop.f32.mrf.mxu0
    %v3221 = vadd.f32 %v2932, %v3220
    %v3222 = vpop.f32.mrf.mxu0
    %3223 = vmatprep.mubr.bf16.mxu0 %v1635
    %3224 = vmatmul.mubr.bf16.gmra.mxu0 %v1634
    %v3225 = vpop.f32.mrf.mxu0
    %v3226 = vadd.f32 %v2937, %v3225
    %v3227 = vpop.f32.mrf.mxu0
    %v3228 = vpop.f32.mrf.mxu0
    %v3229 = vadd.f32 %v2940, %v3228
    %v3230 = vpop.f32.mrf.mxu0
    %3231 = vmatprep.mubr.bf16.mxu0 %v1644
    %3232 = vmatmul.mubr.bf16.gmra.mxu0 %v1643
    %v3233 = vpop.f32.mrf.mxu0
    %v3234 = vadd.f32 %v2945, %v3233
    %v3235 = vpop.f32.mrf.mxu0
    %v3236 = vpop.f32.mrf.mxu0
    %v3237 = vadd.f32 %v2948, %v3236
    %v3238 = vpop.f32.mrf.mxu0
    %3239 = vmatprep.mubr.bf16.mxu0 %v1653
    %3240 = vmatmul.mubr.bf16.gmra.mxu0 %v1652
    %v3241 = vpop.f32.mrf.mxu0
    %v3242 = vadd.f32 %v2953, %v3241
    %v3243 = vpop.f32.mrf.mxu0
    %v3244 = vpop.f32.mrf.mxu0
    %v3245 = vadd.f32 %v2956, %v3244
    %v3246 = vpop.f32.mrf.mxu0
    %3247 = vmatprep.mubr.bf16.mxu0 %v1662
    %3248 = vmatmul.mubr.bf16.gmra.mxu0 %v1661
    %v3249 = vpop.f32.mrf.mxu0
    %v3250 = vadd.f32 %v2961, %v3249
    %v3251 = vpop.f32.mrf.mxu0
    %v3252 = vpop.f32.mrf.mxu0
    %v3253 = vadd.f32 %v2964, %v3252
    %v3254 = vpop.f32.mrf.mxu0
    %3255 = vmatprep.mubr.bf16.mxu0 %v1671
    %3256 = vmatmul.mubr.bf16.gmra.mxu0 %v1670
    %v3257 = vpop.f32.mrf.mxu0
    %v3258 = vadd.f32 %v2969, %v3257
    %v3259 = vpop.f32.mrf.mxu0
    %v3260 = vpop.f32.mrf.mxu0
    %v3261 = vadd.f32 %v2972, %v3260
    %v3262 = vpop.f32.mrf.mxu0
    %3263 = vmatprep.mubr.bf16.mxu0 %v1680
    %3264 = vmatmul.mubr.bf16.gmra.mxu0 %v1679
    %v3265 = vpop.f32.mrf.mxu0
    %v3266 = vadd.f32 %v2977, %v3265
    %v3267 = vpop.f32.mrf.mxu0
    %v3268 = vpop.f32.mrf.mxu0
    %v3269 = vadd.f32 %v2980, %v3268
    %v3270 = vpop.f32.mrf.mxu0
    %3271 = vmatprep.mubr.bf16.mxu0 %v1689
    %3272 = vmatmul.mubr.bf16.gmra.mxu0 %v1688
    %v3273 = vpop.f32.mrf.mxu0
    %v3274 = vadd.f32 %v2985, %v3273
    %v3275 = vpop.f32.mrf.mxu0
    %v3276 = vpop.f32.mrf.mxu0
    %v3277 = vadd.f32 %v2988, %v3276
    %v3278 = vpop.f32.mrf.mxu0
    %3279 = vdwg.mxu0
    %3280 = vmatprep.subr.bf16.mxu0 0
    %3281 = vmatpush1.bf16.msra.mxu0 %v2324
    %3282 = vmatprep.subr.bf16.mxu0 0
    %3283 = vmatpush1.bf16.msra.mxu0 %v2323
    %3284 = vmatprep.subr.bf16.mxu0 0
    %3285 = vmatpush1.bf16.msra.mxu0 %v2322
    %3286 = vmatprep.subr.bf16.mxu0 0
    %3287 = vmatpush1.bf16.msra.mxu0 %v2321
    %3288 = vmatprep.subr.bf16.mxu0 0
    %3289 = vmatpush1.bf16.msra.mxu0 %v2320
    %3290 = vmatprep.subr.bf16.mxu0 0
    %3291 = vmatpush1.bf16.msra.mxu0 %v2319
    %3292 = vmatprep.subr.bf16.mxu0 0
    %3293 = vmatpush1.bf16.msra.mxu0 %v2318
    %3294 = vmatprep.subr.bf16.mxu0 0
    %3295 = vmatpush1.bf16.msra.mxu0 %v2317
    %3296 = vmatprep.subr.bf16.mxu0 0
    %3297 = vmatpush2.bf16.msra.mxu0 %v2332
    %3298 = vmatprep.subr.bf16.mxu0 0
    %3299 = vmatpush2.bf16.msra.mxu0 %v2331
    %3300 = vmatprep.subr.bf16.mxu0 0
    %3301 = vmatpush2.bf16.msra.mxu0 %v2330
    %3302 = vmatprep.subr.bf16.mxu0 0
    %3303 = vmatpush2.bf16.msra.mxu0 %v2329
    %3304 = vmatprep.subr.bf16.mxu0 0
    %3305 = vmatpush2.bf16.msra.mxu0 %v2328
    %3306 = vmatprep.subr.bf16.mxu0 0
    %3307 = vmatpush2.bf16.msra.mxu0 %v2327
    %3308 = vmatprep.subr.bf16.mxu0 0
    %3309 = vmatpush2.bf16.msra.mxu0 %v2326
    %3310 = vmatprep.subr.bf16.mxu0 0
    %3311 = vmatpush2.bf16.msra.mxu0 %v2325
    %3312 = vmatprep.mubr.bf16.mxu0 %v1412
    %3313 = vmatmul.mubr.bf16.gmra.mxu0 %v1411
    %v3314 = vpop.f32.mrf.mxu0
    %v3315 = vadd.f32 %v3026, %v3314
    %v3316 = vpop.f32.mrf.mxu0
    %v3317 = vpop.f32.mrf.mxu0
    %v3318 = vadd.f32 %v3029, %v3317
    %v3319 = vpop.f32.mrf.mxu0
    %3320 = vmatprep.mubr.bf16.mxu0 %v1421
    %3321 = vmatmul.mubr.bf16.gmra.mxu0 %v1420
    %v3322 = vpop.f32.mrf.mxu0
    %v3323 = vadd.f32 %v3034, %v3322
    %v3324 = vpop.f32.mrf.mxu0
    %v3325 = vpop.f32.mrf.mxu0
    %v3326 = vadd.f32 %v3037, %v3325
    %v3327 = vpop.f32.mrf.mxu0
    %3328 = vmatprep.mubr.bf16.mxu0 %v1430
    %3329 = vmatmul.mubr.bf16.gmra.mxu0 %v1429
    %v3330 = vpop.f32.mrf.mxu0
    %v3331 = vadd.f32 %v3042, %v3330
    %v3332 = vpop.f32.mrf.mxu0
    %v3333 = vpop.f32.mrf.mxu0
    %v3334 = vadd.f32 %v3045, %v3333
    %v3335 = vpop.f32.mrf.mxu0
    %3336 = vmatprep.mubr.bf16.mxu0 %v1439
    %3337 = vmatmul.mubr.bf16.gmra.mxu0 %v1438
    %v3338 = vpop.f32.mrf.mxu0
    %v3339 = vadd.f32 %v3050, %v3338
    %v3340 = vpop.f32.mrf.mxu0
    %v3341 = vpop.f32.mrf.mxu0
    %v3342 = vadd.f32 %v3053, %v3341
    %v3343 = vpop.f32.mrf.mxu0
    %3344 = vmatprep.mubr.bf16.mxu0 %v1448
    %3345 = vmatmul.mubr.bf16.gmra.mxu0 %v1447
    %v3346 = vpop.f32.mrf.mxu0
    %v3347 = vadd.f32 %v3058, %v3346
    %v3348 = vpop.f32.mrf.mxu0
    %v3349 = vpop.f32.mrf.mxu0
    %v3350 = vadd.f32 %v3061, %v3349
    %v3351 = vpop.f32.mrf.mxu0
    %3352 = vmatprep.mubr.bf16.mxu0 %v1457
    %3353 = vmatmul.mubr.bf16.gmra.mxu0 %v1456
    %v3354 = vpop.f32.mrf.mxu0
    %v3355 = vadd.f32 %v3066, %v3354
    %v3356 = vpop.f32.mrf.mxu0
    %v3357 = vpop.f32.mrf.mxu0
    %v3358 = vadd.f32 %v3069, %v3357
    %v3359 = vpop.f32.mrf.mxu0
    %3360 = vmatprep.mubr.bf16.mxu0 %v1466
    %3361 = vmatmul.mubr.bf16.gmra.mxu0 %v1465
    %v3362 = vpop.f32.mrf.mxu0
    %v3363 = vadd.f32 %v3074, %v3362
    %v3364 = vpop.f32.mrf.mxu0
    %v3365 = vpop.f32.mrf.mxu0
    %v3366 = vadd.f32 %v3077, %v3365
    %v3367 = vpop.f32.mrf.mxu0
    %3368 = vmatprep.mubr.bf16.mxu0 %v1475
    %3369 = vmatmul.mubr.bf16.gmra.mxu0 %v1474
    %v3370 = vpop.f32.mrf.mxu0
    %v3371 = vadd.f32 %v3082, %v3370
    %v3372 = vpop.f32.mrf.mxu0
    %v3373 = vpop.f32.mrf.mxu0
    %v3374 = vadd.f32 %v3085, %v3373
    %v3375 = vpop.f32.mrf.mxu0
    %3376 = vmatprep.mubr.bf16.mxu0 %v1484
    %3377 = vmatmul.mubr.bf16.gmra.mxu0 %v1483
    %v3378 = vpop.f32.mrf.mxu0
    %v3379 = vadd.f32 %v3090, %v3378
    %v3380 = vpop.f32.mrf.mxu0
    %v3381 = vpop.f32.mrf.mxu0
    %v3382 = vadd.f32 %v3093, %v3381
    %v3383 = vpop.f32.mrf.mxu0
    %3384 = vmatprep.mubr.bf16.mxu0 %v1493
    %3385 = vmatmul.mubr.bf16.gmra.mxu0 %v1492
    %v3386 = vpop.f32.mrf.mxu0
    %v3387 = vadd.f32 %v3098, %v3386
    %v3388 = vpop.f32.mrf.mxu0
    %v3389 = vpop.f32.mrf.mxu0
    %v3390 = vadd.f32 %v3101, %v3389
    %v3391 = vpop.f32.mrf.mxu0
    %3392 = vmatprep.mubr.bf16.mxu0 %v1502
    %3393 = vmatmul.mubr.bf16.gmra.mxu0 %v1501
    %v3394 = vpop.f32.mrf.mxu0
    %v3395 = vadd.f32 %v3106, %v3394
    %v3396 = vpop.f32.mrf.mxu0
    %v3397 = vpop.f32.mrf.mxu0
    %v3398 = vadd.f32 %v3109, %v3397
    %v3399 = vpop.f32.mrf.mxu0
    %3400 = vmatprep.mubr.bf16.mxu0 %v1511
    %3401 = vmatmul.mubr.bf16.gmra.mxu0 %v1510
    %v3402 = vpop.f32.mrf.mxu0
    %v3403 = vadd.f32 %v3114, %v3402
    %v3404 = vpop.f32.mrf.mxu0
    %v3405 = vpop.f32.mrf.mxu0
    %v3406 = vadd.f32 %v3117, %v3405
    %v3407 = vpop.f32.mrf.mxu0
    %3408 = vmatprep.mubr.bf16.mxu0 %v1520
    %3409 = vmatmul.mubr.bf16.gmra.mxu0 %v1519
    %v3410 = vpop.f32.mrf.mxu0
    %v3411 = vadd.f32 %v3122, %v3410
    %v3412 = vpop.f32.mrf.mxu0
    %v3413 = vpop.f32.mrf.mxu0
    %v3414 = vadd.f32 %v3125, %v3413
    %v3415 = vpop.f32.mrf.mxu0
    %3416 = vmatprep.mubr.bf16.mxu0 %v1529
    %3417 = vmatmul.mubr.bf16.gmra.mxu0 %v1528
    %v3418 = vpop.f32.mrf.mxu0
    %v3419 = vadd.f32 %v3130, %v3418
    %v3420 = vpop.f32.mrf.mxu0
    %v3421 = vpop.f32.mrf.mxu0
    %v3422 = vadd.f32 %v3133, %v3421
    %v3423 = vpop.f32.mrf.mxu0
    %3424 = vmatprep.mubr.bf16.mxu0 %v1538
    %3425 = vmatmul.mubr.bf16.gmra.mxu0 %v1537
    %v3426 = vpop.f32.mrf.mxu0
    %v3427 = vadd.f32 %v3138, %v3426
    %v3428 = vpop.f32.mrf.mxu0
    %v3429 = vpop.f32.mrf.mxu0
    %v3430 = vadd.f32 %v3141, %v3429
    %v3431 = vpop.f32.mrf.mxu0
    %3432 = vmatprep.mubr.bf16.mxu0 %v1547
    %3433 = vmatmul.mubr.bf16.gmra.mxu0 %v1546
    %v3434 = vpop.f32.mrf.mxu0
    %v3435 = vadd.f32 %v3146, %v3434
    %v3436 = vpop.f32.mrf.mxu0
    %v3437 = vpop.f32.mrf.mxu0
    %v3438 = vadd.f32 %v3149, %v3437
    %v3439 = vpop.f32.mrf.mxu0
    %3440 = vmatprep.mubr.bf16.mxu0 %v1556
    %3441 = vmatmul.mubr.bf16.gmra.mxu0 %v1555
    %v3442 = vpop.f32.mrf.mxu0
    %v3443 = vadd.f32 %v3154, %v3442
    %v3444 = vpop.f32.mrf.mxu0
    %v3445 = vpop.f32.mrf.mxu0
    %v3446 = vadd.f32 %v3157, %v3445
    %v3447 = vpop.f32.mrf.mxu0
    %3448 = vmatprep.mubr.bf16.mxu0 %v1565
    %3449 = vmatmul.mubr.bf16.gmra.mxu0 %v1564
    %v3450 = vpop.f32.mrf.mxu0
    %v3451 = vadd.f32 %v3162, %v3450
    %v3452 = vpop.f32.mrf.mxu0
    %v3453 = vpop.f32.mrf.mxu0
    %v3454 = vadd.f32 %v3165, %v3453
    %v3455 = vpop.f32.mrf.mxu0
    %3456 = vmatprep.mubr.bf16.mxu0 %v1574
    %3457 = vmatmul.mubr.bf16.gmra.mxu0 %v1573
    %v3458 = vpop.f32.mrf.mxu0
    %v3459 = vadd.f32 %v3170, %v3458
    %v3460 = vpop.f32.mrf.mxu0
    %v3461 = vpop.f32.mrf.mxu0
    %v3462 = vadd.f32 %v3173, %v3461
    %v3463 = vpop.f32.mrf.mxu0
    %3464 = vmatprep.mubr.bf16.mxu0 %v1583
    %3465 = vmatmul.mubr.bf16.gmra.mxu0 %v1582
    %v3466 = vpop.f32.mrf.mxu0
    %v3467 = vadd.f32 %v3178, %v3466
    %v3468 = vpop.f32.mrf.mxu0
    %v3469 = vpop.f32.mrf.mxu0
    %v3470 = vadd.f32 %v3181, %v3469
    %v3471 = vpop.f32.mrf.mxu0
    %3472 = vmatprep.mubr.bf16.mxu0 %v1592
    %3473 = vmatmul.mubr.bf16.gmra.mxu0 %v1591
    %v3474 = vpop.f32.mrf.mxu0
    %v3475 = vadd.f32 %v3186, %v3474
    %v3476 = vpop.f32.mrf.mxu0
    %v3477 = vpop.f32.mrf.mxu0
    %v3478 = vadd.f32 %v3189, %v3477
    %v3479 = vpop.f32.mrf.mxu0
    %3480 = vmatprep.mubr.bf16.mxu0 %v1601
    %3481 = vmatmul.mubr.bf16.gmra.mxu0 %v1600
    %v3482 = vpop.f32.mrf.mxu0
    %v3483 = vadd.f32 %v3194, %v3482
    %v3484 = vpop.f32.mrf.mxu0
    %v3485 = vpop.f32.mrf.mxu0
    %v3486 = vadd.f32 %v3197, %v3485
    %v3487 = vpop.f32.mrf.mxu0
    %3488 = vmatprep.mubr.bf16.mxu0 %v1610
    %3489 = vmatmul.mubr.bf16.gmra.mxu0 %v1609
    %v3490 = vpop.f32.mrf.mxu0
    %v3491 = vadd.f32 %v3202, %v3490
    %v3492 = vpop.f32.mrf.mxu0
    %v3493 = vpop.f32.mrf.mxu0
    %v3494 = vadd.f32 %v3205, %v3493
    %v3495 = vpop.f32.mrf.mxu0
    %3496 = vmatprep.mubr.bf16.mxu0 %v1619
    %3497 = vmatmul.mubr.bf16.gmra.mxu0 %v1618
    %v3498 = vpop.f32.mrf.mxu0
    %v3499 = vadd.f32 %v3210, %v3498
    %v3500 = vpop.f32.mrf.mxu0
    %v3501 = vpop.f32.mrf.mxu0
    %v3502 = vadd.f32 %v3213, %v3501
    %v3503 = vpop.f32.mrf.mxu0
    %3504 = vmatprep.mubr.bf16.mxu0 %v1628
    %3505 = vmatmul.mubr.bf16.gmra.mxu0 %v1627
    %v3506 = vpop.f32.mrf.mxu0
    %v3507 = vadd.f32 %v3218, %v3506
    %v3508 = vpop.f32.mrf.mxu0
    %v3509 = vpop.f32.mrf.mxu0
    %v3510 = vadd.f32 %v3221, %v3509
    %v3511 = vpop.f32.mrf.mxu0
    %3512 = vmatprep.mubr.bf16.mxu0 %v1637
    %3513 = vmatmul.mubr.bf16.gmra.mxu0 %v1636
    %v3514 = vpop.f32.mrf.mxu0
    %v3515 = vadd.f32 %v3226, %v3514
    %v3516 = vpop.f32.mrf.mxu0
    %v3517 = vpop.f32.mrf.mxu0
    %v3518 = vadd.f32 %v3229, %v3517
    %v3519 = vpop.f32.mrf.mxu0
    %3520 = vmatprep.mubr.bf16.mxu0 %v1646
    %3521 = vmatmul.mubr.bf16.gmra.mxu0 %v1645
    %v3522 = vpop.f32.mrf.mxu0
    %v3523 = vadd.f32 %v3234, %v3522
    %v3524 = vpop.f32.mrf.mxu0
    %v3525 = vpop.f32.mrf.mxu0
    %v3526 = vadd.f32 %v3237, %v3525
    %v3527 = vpop.f32.mrf.mxu0
    %3528 = vmatprep.mubr.bf16.mxu0 %v1655
    %3529 = vmatmul.mubr.bf16.gmra.mxu0 %v1654
    %v3530 = vpop.f32.mrf.mxu0
    %v3531 = vadd.f32 %v3242, %v3530
    %v3532 = vpop.f32.mrf.mxu0
    %v3533 = vpop.f32.mrf.mxu0
    %v3534 = vadd.f32 %v3245, %v3533
    %v3535 = vpop.f32.mrf.mxu0
    %3536 = vmatprep.mubr.bf16.mxu0 %v1664
    %3537 = vmatmul.mubr.bf16.gmra.mxu0 %v1663
    %v3538 = vpop.f32.mrf.mxu0
    %v3539 = vadd.f32 %v3250, %v3538
    %v3540 = vpop.f32.mrf.mxu0
    %v3541 = vpop.f32.mrf.mxu0
    %v3542 = vadd.f32 %v3253, %v3541
    %v3543 = vpop.f32.mrf.mxu0
    %3544 = vmatprep.mubr.bf16.mxu0 %v1673
    %3545 = vmatmul.mubr.bf16.gmra.mxu0 %v1672
    %v3546 = vpop.f32.mrf.mxu0
    %v3547 = vadd.f32 %v3258, %v3546
    %v3548 = vpop.f32.mrf.mxu0
    %v3549 = vpop.f32.mrf.mxu0
    %v3550 = vadd.f32 %v3261, %v3549
    %v3551 = vpop.f32.mrf.mxu0
    %3552 = vmatprep.mubr.bf16.mxu0 %v1682
    %3553 = vmatmul.mubr.bf16.gmra.mxu0 %v1681
    %v3554 = vpop.f32.mrf.mxu0
    %v3555 = vadd.f32 %v3266, %v3554
    %v3556 = vpop.f32.mrf.mxu0
    %v3557 = vpop.f32.mrf.mxu0
    %v3558 = vadd.f32 %v3269, %v3557
    %v3559 = vpop.f32.mrf.mxu0
    %3560 = vmatprep.mubr.bf16.mxu0 %v1691
    %3561 = vmatmul.mubr.bf16.gmra.mxu0 %v1690
    %v3562 = vpop.f32.mrf.mxu0
    %v3563 = vadd.f32 %v3274, %v3562
    %v3564 = vpop.f32.mrf.mxu0
    %v3565 = vpop.f32.mrf.mxu0
    %v3566 = vadd.f32 %v3277, %v3565
    %v3567 = vpop.f32.mrf.mxu0
    %3568 = vdwg.mxu0
    %3569 = vmatprep.subr.bf16.mxu0 0
    %3570 = vmatpush1.bf16.msra.mxu0 %v2340
    %3571 = vmatprep.subr.bf16.mxu0 0
    %3572 = vmatpush1.bf16.msra.mxu0 %v2339
    %3573 = vmatprep.subr.bf16.mxu0 0
    %3574 = vmatpush1.bf16.msra.mxu0 %v2338
    %3575 = vmatprep.subr.bf16.mxu0 0
    %3576 = vmatpush1.bf16.msra.mxu0 %v2337
    %3577 = vmatprep.subr.bf16.mxu0 0
    %3578 = vmatpush1.bf16.msra.mxu0 %v2336
    %3579 = vmatprep.subr.bf16.mxu0 0
    %3580 = vmatpush1.bf16.msra.mxu0 %v2335
    %3581 = vmatprep.subr.bf16.mxu0 0
    %3582 = vmatpush1.bf16.msra.mxu0 %v2334
    %3583 = vmatprep.subr.bf16.mxu0 0
    %3584 = vmatpush1.bf16.msra.mxu0 %v2333
    %3585 = vmatprep.subr.bf16.mxu0 0
    %3586 = vmatpush2.bf16.msra.mxu0 0
    %3587 = vmatprep.subr.bf16.mxu0 0
    %3588 = vmatpush2.bf16.msra.mxu0 0
    %3589 = vmatprep.subr.bf16.mxu0 0
    %3590 = vmatpush2.bf16.msra.mxu0 0
    %3591 = vmatprep.subr.bf16.mxu0 0
    %3592 = vmatpush2.bf16.msra.mxu0 0
    %3593 = vmatprep.subr.bf16.mxu0 0
    %3594 = vmatpush2.bf16.msra.mxu0 0
    %3595 = vmatprep.subr.bf16.mxu0 0
    %3596 = vmatpush2.bf16.msra.mxu0 0
    %3597 = vmatprep.subr.bf16.mxu0 0
    %3598 = vmatpush2.bf16.msra.mxu0 0
    %3599 = vmatprep.subr.bf16.mxu0 0
    %3600 = vmatpush2.bf16.msra.mxu0 0
    %3601 = vmatprep.mubr.bf16.mxu0 0
    %3602 = vmatmul.mubr.bf16.gmra.mxu0 %v1413
    %v3603 = vpop.f32.mrf.mxu0
    %v3604 = vadd.f32 %v3315, %v3603
    %v3605 = vpop.f32.mrf.mxu0
    %v3606 = vpop.f32.mrf.mxu0
    %v3607 = vadd.f32 %v3318, %v3606
    %v3608 = vpop.f32.mrf.mxu0
    %3609 = vmatprep.mubr.bf16.mxu0 0
    %3610 = vmatmul.mubr.bf16.gmra.mxu0 %v1422
    %v3611 = vpop.f32.mrf.mxu0
    %v3612 = vadd.f32 %v3323, %v3611
    %v3613 = vpop.f32.mrf.mxu0
    %v3614 = vpop.f32.mrf.mxu0
    %v3615 = vadd.f32 %v3326, %v3614
    %v3616 = vpop.f32.mrf.mxu0
    %3617 = vmatprep.mubr.bf16.mxu0 0
    %3618 = vmatmul.mubr.bf16.gmra.mxu0 %v1431
    %v3619 = vpop.f32.mrf.mxu0
    %v3620 = vadd.f32 %v3331, %v3619
    %v3621 = vpop.f32.mrf.mxu0
    %v3622 = vpop.f32.mrf.mxu0
    %v3623 = vadd.f32 %v3334, %v3622
    %v3624 = vpop.f32.mrf.mxu0
    %3625 = vmatprep.mubr.bf16.mxu0 0
    %3626 = vmatmul.mubr.bf16.gmra.mxu0 %v1440
    %v3627 = vpop.f32.mrf.mxu0
    %v3628 = vadd.f32 %v3339, %v3627
    %v3629 = vpop.f32.mrf.mxu0
    %v3630 = vpop.f32.mrf.mxu0
    %v3631 = vadd.f32 %v3342, %v3630
    %v3632 = vpop.f32.mrf.mxu0
    %3633 = vmatprep.mubr.bf16.mxu0 0
    %3634 = vmatmul.mubr.bf16.gmra.mxu0 %v1449
    %v3635 = vpop.f32.mrf.mxu0
    %v3636 = vadd.f32 %v3347, %v3635
    %v3637 = vpop.f32.mrf.mxu0
    %v3638 = vpop.f32.mrf.mxu0
    %v3639 = vadd.f32 %v3350, %v3638
    %v3640 = vpop.f32.mrf.mxu0
    %3641 = vmatprep.mubr.bf16.mxu0 0
    %3642 = vmatmul.mubr.bf16.gmra.mxu0 %v1458
    %v3643 = vpop.f32.mrf.mxu0
    %v3644 = vadd.f32 %v3355, %v3643
    %v3645 = vpop.f32.mrf.mxu0
    %v3646 = vpop.f32.mrf.mxu0
    %v3647 = vadd.f32 %v3358, %v3646
    %v3648 = vpop.f32.mrf.mxu0
    %3649 = vmatprep.mubr.bf16.mxu0 0
    %3650 = vmatmul.mubr.bf16.gmra.mxu0 %v1467
    %v3651 = vpop.f32.mrf.mxu0
    %v3652 = vadd.f32 %v3363, %v3651
    %v3653 = vpop.f32.mrf.mxu0
    %v3654 = vpop.f32.mrf.mxu0
    %v3655 = vadd.f32 %v3366, %v3654
    %v3656 = vpop.f32.mrf.mxu0
    %3657 = vmatprep.mubr.bf16.mxu0 0
    %3658 = vmatmul.mubr.bf16.gmra.mxu0 %v1476
    %v3659 = vpop.f32.mrf.mxu0
    %v3660 = vadd.f32 %v3371, %v3659
    %v3661 = vpop.f32.mrf.mxu0
    %v3662 = vpop.f32.mrf.mxu0
    %v3663 = vadd.f32 %v3374, %v3662
    %v3664 = vpop.f32.mrf.mxu0
    %3665 = vmatprep.mubr.bf16.mxu0 0
    %3666 = vmatmul.mubr.bf16.gmra.mxu0 %v1485
    %v3667 = vpop.f32.mrf.mxu0
    %v3668 = vadd.f32 %v3379, %v3667
    %v3669 = vpop.f32.mrf.mxu0
    %v3670 = vpop.f32.mrf.mxu0
    %v3671 = vadd.f32 %v3382, %v3670
    %v3672 = vpop.f32.mrf.mxu0
    %3673 = vmatprep.mubr.bf16.mxu0 0
    %3674 = vmatmul.mubr.bf16.gmra.mxu0 %v1494
    %v3675 = vpop.f32.mrf.mxu0
    %v3676 = vadd.f32 %v3387, %v3675
    %v3677 = vpop.f32.mrf.mxu0
    %v3678 = vpop.f32.mrf.mxu0
    %v3679 = vadd.f32 %v3390, %v3678
    %v3680 = vpop.f32.mrf.mxu0
    %3681 = vmatprep.mubr.bf16.mxu0 0
    %3682 = vmatmul.mubr.bf16.gmra.mxu0 %v1503
    %v3683 = vpop.f32.mrf.mxu0
    %v3684 = vadd.f32 %v3395, %v3683
    %v3685 = vpop.f32.mrf.mxu0
    %v3686 = vpop.f32.mrf.mxu0
    %v3687 = vadd.f32 %v3398, %v3686
    %v3688 = vpop.f32.mrf.mxu0
    %3689 = vmatprep.mubr.bf16.mxu0 0
    %3690 = vmatmul.mubr.bf16.gmra.mxu0 %v1512
    %v3691 = vpop.f32.mrf.mxu0
    %v3692 = vadd.f32 %v3403, %v3691
    %v3693 = vpop.f32.mrf.mxu0
    %v3694 = vpop.f32.mrf.mxu0
    %v3695 = vadd.f32 %v3406, %v3694
    %v3696 = vpop.f32.mrf.mxu0
    %3697 = vmatprep.mubr.bf16.mxu0 0
    %3698 = vmatmul.mubr.bf16.gmra.mxu0 %v1521
    %v3699 = vpop.f32.mrf.mxu0
    %v3700 = vadd.f32 %v3411, %v3699
    %v3701 = vpop.f32.mrf.mxu0
    %v3702 = vpop.f32.mrf.mxu0
    %v3703 = vadd.f32 %v3414, %v3702
    %v3704 = vpop.f32.mrf.mxu0
    %3705 = vmatprep.mubr.bf16.mxu0 0
    %3706 = vmatmul.mubr.bf16.gmra.mxu0 %v1530
    %v3707 = vpop.f32.mrf.mxu0
    %v3708 = vadd.f32 %v3419, %v3707
    %v3709 = vpop.f32.mrf.mxu0
    %v3710 = vpop.f32.mrf.mxu0
    %v3711 = vadd.f32 %v3422, %v3710
    %v3712 = vpop.f32.mrf.mxu0
    %3713 = vmatprep.mubr.bf16.mxu0 0
    %3714 = vmatmul.mubr.bf16.gmra.mxu0 %v1539
    %v3715 = vpop.f32.mrf.mxu0
    %v3716 = vadd.f32 %v3427, %v3715
    %v3717 = vpop.f32.mrf.mxu0
    %v3718 = vpop.f32.mrf.mxu0
    %v3719 = vadd.f32 %v3430, %v3718
    %v3720 = vpop.f32.mrf.mxu0
    %3721 = vmatprep.mubr.bf16.mxu0 0
    %3722 = vmatmul.mubr.bf16.gmra.mxu0 %v1548
    %v3723 = vpop.f32.mrf.mxu0
    %v3724 = vadd.f32 %v3435, %v3723
    %v3725 = vpop.f32.mrf.mxu0
    %v3726 = vpop.f32.mrf.mxu0
    %v3727 = vadd.f32 %v3438, %v3726
    %v3728 = vpop.f32.mrf.mxu0
    %3729 = vmatprep.mubr.bf16.mxu0 0
    %3730 = vmatmul.mubr.bf16.gmra.mxu0 %v1557
    %v3731 = vpop.f32.mrf.mxu0
    %v3732 = vadd.f32 %v3443, %v3731
    %v3733 = vpop.f32.mrf.mxu0
    %v3734 = vpop.f32.mrf.mxu0
    %v3735 = vadd.f32 %v3446, %v3734
    %v3736 = vpop.f32.mrf.mxu0
    %3737 = vmatprep.mubr.bf16.mxu0 0
    %3738 = vmatmul.mubr.bf16.gmra.mxu0 %v1566
    %v3739 = vpop.f32.mrf.mxu0
    %v3740 = vadd.f32 %v3451, %v3739
    %v3741 = vpop.f32.mrf.mxu0
    %v3742 = vpop.f32.mrf.mxu0
    %v3743 = vadd.f32 %v3454, %v3742
    %v3744 = vpop.f32.mrf.mxu0
    %3745 = vmatprep.mubr.bf16.mxu0 0
    %3746 = vmatmul.mubr.bf16.gmra.mxu0 %v1575
    %v3747 = vpop.f32.mrf.mxu0
    %v3748 = vadd.f32 %v3459, %v3747
    %v3749 = vpop.f32.mrf.mxu0
    %v3750 = vpop.f32.mrf.mxu0
    %v3751 = vadd.f32 %v3462, %v3750
    %v3752 = vpop.f32.mrf.mxu0
    %3753 = vmatprep.mubr.bf16.mxu0 0
    %3754 = vmatmul.mubr.bf16.gmra.mxu0 %v1584
    %v3755 = vpop.f32.mrf.mxu0
    %v3756 = vadd.f32 %v3467, %v3755
    %v3757 = vpop.f32.mrf.mxu0
    %v3758 = vpop.f32.mrf.mxu0
    %v3759 = vadd.f32 %v3470, %v3758
    %v3760 = vpop.f32.mrf.mxu0
    %3761 = vmatprep.mubr.bf16.mxu0 0
    %3762 = vmatmul.mubr.bf16.gmra.mxu0 %v1593
    %v3763 = vpop.f32.mrf.mxu0
    %v3764 = vadd.f32 %v3475, %v3763
    %v3765 = vpop.f32.mrf.mxu0
    %v3766 = vpop.f32.mrf.mxu0
    %v3767 = vadd.f32 %v3478, %v3766
    %v3768 = vpop.f32.mrf.mxu0
    %3769 = vmatprep.mubr.bf16.mxu0 0
    %3770 = vmatmul.mubr.bf16.gmra.mxu0 %v1602
    %v3771 = vpop.f32.mrf.mxu0
    %v3772 = vadd.f32 %v3483, %v3771
    %v3773 = vpop.f32.mrf.mxu0
    %v3774 = vpop.f32.mrf.mxu0
    %v3775 = vadd.f32 %v3486, %v3774
    %v3776 = vpop.f32.mrf.mxu0
    %3777 = vmatprep.mubr.bf16.mxu0 0
    %3778 = vmatmul.mubr.bf16.gmra.mxu0 %v1611
    %v3779 = vpop.f32.mrf.mxu0
    %v3780 = vadd.f32 %v3491, %v3779
    %v3781 = vpop.f32.mrf.mxu0
    %v3782 = vpop.f32.mrf.mxu0
    %v3783 = vadd.f32 %v3494, %v3782
    %v3784 = vpop.f32.mrf.mxu0
    %3785 = vmatprep.mubr.bf16.mxu0 0
    %3786 = vmatmul.mubr.bf16.gmra.mxu0 %v1620
    %v3787 = vpop.f32.mrf.mxu0
    %v3788 = vadd.f32 %v3499, %v3787
    %v3789 = vpop.f32.mrf.mxu0
    %v3790 = vpop.f32.mrf.mxu0
    %v3791 = vadd.f32 %v3502, %v3790
    %v3792 = vpop.f32.mrf.mxu0
    %3793 = vmatprep.mubr.bf16.mxu0 0
    %3794 = vmatmul.mubr.bf16.gmra.mxu0 %v1629
    %v3795 = vpop.f32.mrf.mxu0
    %v3796 = vadd.f32 %v3507, %v3795
    %v3797 = vpop.f32.mrf.mxu0
    %v3798 = vpop.f32.mrf.mxu0
    %v3799 = vadd.f32 %v3510, %v3798
    %v3800 = vpop.f32.mrf.mxu0
    %3801 = vmatprep.mubr.bf16.mxu0 0
    %3802 = vmatmul.mubr.bf16.gmra.mxu0 %v1638
    %v3803 = vpop.f32.mrf.mxu0
    %v3804 = vadd.f32 %v3515, %v3803
    %v3805 = vpop.f32.mrf.mxu0
    %v3806 = vpop.f32.mrf.mxu0
    %v3807 = vadd.f32 %v3518, %v3806
    %v3808 = vpop.f32.mrf.mxu0
    %3809 = vmatprep.mubr.bf16.mxu0 0
    %3810 = vmatmul.mubr.bf16.gmra.mxu0 %v1647
    %v3811 = vpop.f32.mrf.mxu0
    %v3812 = vadd.f32 %v3523, %v3811
    %v3813 = vpop.f32.mrf.mxu0
    %v3814 = vpop.f32.mrf.mxu0
    %v3815 = vadd.f32 %v3526, %v3814
    %v3816 = vpop.f32.mrf.mxu0
    %3817 = vmatprep.mubr.bf16.mxu0 0
    %3818 = vmatmul.mubr.bf16.gmra.mxu0 %v1656
    %v3819 = vpop.f32.mrf.mxu0
    %v3820 = vadd.f32 %v3531, %v3819
    %v3821 = vpop.f32.mrf.mxu0
    %v3822 = vpop.f32.mrf.mxu0
    %v3823 = vadd.f32 %v3534, %v3822
    %v3824 = vpop.f32.mrf.mxu0
    %3825 = vmatprep.mubr.bf16.mxu0 0
    %3826 = vmatmul.mubr.bf16.gmra.mxu0 %v1665
    %v3827 = vpop.f32.mrf.mxu0
    %v3828 = vadd.f32 %v3539, %v3827
    %v3829 = vpop.f32.mrf.mxu0
    %v3830 = vpop.f32.mrf.mxu0
    %v3831 = vadd.f32 %v3542, %v3830
    %v3832 = vpop.f32.mrf.mxu0
    %3833 = vmatprep.mubr.bf16.mxu0 0
    %3834 = vmatmul.mubr.bf16.gmra.mxu0 %v1674
    %v3835 = vpop.f32.mrf.mxu0
    %v3836 = vadd.f32 %v3547, %v3835
    %v3837 = vpop.f32.mrf.mxu0
    %v3838 = vpop.f32.mrf.mxu0
    %v3839 = vadd.f32 %v3550, %v3838
    %v3840 = vpop.f32.mrf.mxu0
    %3841 = vmatprep.mubr.bf16.mxu0 0
    %3842 = vmatmul.mubr.bf16.gmra.mxu0 %v1683
    %v3843 = vpop.f32.mrf.mxu0
    %v3844 = vadd.f32 %v3555, %v3843
    %v3845 = vpop.f32.mrf.mxu0
    %v3846 = vpop.f32.mrf.mxu0
    %v3847 = vadd.f32 %v3558, %v3846
    %v3848 = vpop.f32.mrf.mxu0
    %3849 = vmatprep.mubr.bf16.mxu0 0
    %3850 = vmatmul.mubr.bf16.gmra.mxu0 %v1692
    %v3851 = vpop.f32.mrf.mxu0
    %v3852 = vadd.f32 %v3563, %v3851
    %v3853 = vpop.f32.mrf.mxu0
    %v3854 = vpop.f32.mrf.mxu0
    %v3855 = vadd.f32 %v3566, %v3854
    %v3856 = vpop.f32.mrf.mxu0
    %3857 = vdwg.mxu0
    %v3858 = vpack.c.bf16 %v3607, %v3604
    %v3859 = vpack.c.bf16 %v3615, %v3612
    %v3860 = vpack.c.bf16 %v3623, %v3620
    %v3861 = vpack.c.bf16 %v3631, %v3628
    %v3862 = vpack.c.bf16 %v3639, %v3636
    %v3863 = vpack.c.bf16 %v3647, %v3644
    %v3864 = vpack.c.bf16 %v3655, %v3652
    %v3865 = vpack.c.bf16 %v3663, %v3660
    %v3866 = vpack.c.bf16 %v3671, %v3668
    %v3867 = vpack.c.bf16 %v3679, %v3676
    %v3868 = vpack.c.bf16 %v3687, %v3684
    %v3869 = vpack.c.bf16 %v3695, %v3692
    %v3870 = vpack.c.bf16 %v3703, %v3700
    %v3871 = vpack.c.bf16 %v3711, %v3708
    %v3872 = vpack.c.bf16 %v3719, %v3716
    %v3873 = vpack.c.bf16 %v3727, %v3724
    %v3874 = vpack.c.bf16 %v3735, %v3732
    %v3875 = vpack.c.bf16 %v3743, %v3740
    %v3876 = vpack.c.bf16 %v3751, %v3748
    %v3877 = vpack.c.bf16 %v3759, %v3756
    %v3878 = vpack.c.bf16 %v3767, %v3764
    %v3879 = vpack.c.bf16 %v3775, %v3772
    %v3880 = vpack.c.bf16 %v3783, %v3780
    %v3881 = vpack.c.bf16 %v3791, %v3788
    %v3882 = vpack.c.bf16 %v3799, %v3796
    %v3883 = vpack.c.bf16 %v3807, %v3804
    %v3884 = vpack.c.bf16 %v3815, %v3812
    %v3885 = vpack.c.bf16 %v3823, %v3820
    %v3886 = vpack.c.bf16 %v3831, %v3828
    %v3887 = vpack.c.bf16 %v3839, %v3836
    %v3888 = vpack.c.bf16 %v3847, %v3844
    %v3889 = vpack.c.bf16 %v3855, %v3852
    %v3922 = vunpack.c.l.b16 %v3858
    %v3923 = vunpack.c.h.b16 %v3858
    %v3924 = vunpack.c.l.b16 %v3859
    %v3925 = vunpack.c.h.b16 %v3859
    %v3926 = vunpack.c.l.b16 %v3860
    %v3927 = vunpack.c.h.b16 %v3860
    %v3928 = vunpack.c.l.b16 %v3861
    %v3929 = vunpack.c.h.b16 %v3861
    %v3930 = vunpack.c.l.b16 %v3862
    %v3931 = vunpack.c.h.b16 %v3862
    %v3932 = vunpack.c.l.b16 %v3863
    %v3933 = vunpack.c.h.b16 %v3863
    %v3934 = vunpack.c.l.b16 %v3864
    %v3935 = vunpack.c.h.b16 %v3864
    %v3936 = vunpack.c.l.b16 %v3865
    %v3937 = vunpack.c.h.b16 %v3865
    %v3938 = vunpack.c.l.b16 %v3866
    %v3939 = vunpack.c.h.b16 %v3866
    %v3940 = vunpack.c.l.b16 %v3867
    %v3941 = vunpack.c.h.b16 %v3867
    %v3942 = vunpack.c.l.b16 %v3868
    %v3943 = vunpack.c.h.b16 %v3868
    %v3944 = vunpack.c.l.b16 %v3869
    %v3945 = vunpack.c.h.b16 %v3869
    %v3946 = vunpack.c.l.b16 %v3870
    %v3947 = vunpack.c.h.b16 %v3870
    %v3948 = vunpack.c.l.b16 %v3871
    %v3949 = vunpack.c.h.b16 %v3871
    %v3950 = vunpack.c.l.b16 %v3872
    %v3951 = vunpack.c.h.b16 %v3872
    %v3952 = vunpack.c.l.b16 %v3873
    %v3953 = vunpack.c.h.b16 %v3873
    %v3954 = vunpack.c.l.b16 %v3874
    %v3955 = vunpack.c.h.b16 %v3874
    %v3956 = vunpack.c.l.b16 %v3875
    %v3957 = vunpack.c.h.b16 %v3875
    %v3958 = vunpack.c.l.b16 %v3876
    %v3959 = vunpack.c.h.b16 %v3876
    %v3960 = vunpack.c.l.b16 %v3877
    %v3961 = vunpack.c.h.b16 %v3877
    %v3962 = vunpack.c.l.b16 %v3878
    %v3963 = vunpack.c.h.b16 %v3878
    %v3964 = vunpack.c.l.b16 %v3879
    %v3965 = vunpack.c.h.b16 %v3879
    %v3966 = vunpack.c.l.b16 %v3880
    %v3967 = vunpack.c.h.b16 %v3880
    %v3968 = vunpack.c.l.b16 %v3881
    %v3969 = vunpack.c.h.b16 %v3881
    %v3970 = vunpack.c.l.b16 %v3882
    %v3971 = vunpack.c.h.b16 %v3882
    %v3972 = vunpack.c.l.b16 %v3883
    %v3973 = vunpack.c.h.b16 %v3883
    %v3974 = vunpack.c.l.b16 %v3884
    %v3975 = vunpack.c.h.b16 %v3884
    %v3976 = vunpack.c.l.b16 %v3885
    %v3977 = vunpack.c.h.b16 %v3885
    %v3978 = vunpack.c.l.b16 %v3886
    %v3979 = vunpack.c.h.b16 %v3886
    %v3980 = vunpack.c.l.b16 %v3887
    %v3981 = vunpack.c.h.b16 %v3887
    %v3982 = vunpack.c.l.b16 %v3888
    %v3983 = vunpack.c.h.b16 %v3888
    %v3984 = vunpack.c.l.b16 %v3889
    %v3985 = vunpack.c.h.b16 %v3889
    %v3986 = vpack.c.b16 %v3922, %v3922
    %v3987 = vpack.c.b16 %v3923, %v3923
    %v3988 = vpack.c.b16 %v3924, %v3924
    %v3989 = vpack.c.b16 %v3925, %v3925
    %v3990 = vpack.c.b16 %v3926, %v3926
    %v3991 = vpack.c.b16 %v3927, %v3927
    %v3992 = vpack.c.b16 %v3928, %v3928
    %v3993 = vpack.c.b16 %v3929, %v3929
    %v3994 = vpack.c.b16 %v3930, %v3930
    %v3995 = vpack.c.b16 %v3931, %v3931
    %v3996 = vpack.c.b16 %v3932, %v3932
    %v3997 = vpack.c.b16 %v3933, %v3933
    %v3998 = vpack.c.b16 %v3934, %v3934
    %v3999 = vpack.c.b16 %v3935, %v3935
    %v4000 = vpack.c.b16 %v3936, %v3936
    %v4001 = vpack.c.b16 %v3937, %v3937
    %v4002 = vpack.c.b16 %v3938, %v3938
    %v4003 = vpack.c.b16 %v3939, %v3939
    %v4004 = vpack.c.b16 %v3940, %v3940
    %v4005 = vpack.c.b16 %v3941, %v3941
    %v4006 = vpack.c.b16 %v3942, %v3942
    %v4007 = vpack.c.b16 %v3943, %v3943
    %v4008 = vpack.c.b16 %v3944, %v3944
    %v4009 = vpack.c.b16 %v3945, %v3945
    %v4010 = vpack.c.b16 %v3946, %v3946
    %v4011 = vpack.c.b16 %v3947, %v3947
    %v4012 = vpack.c.b16 %v3948, %v3948
    %v4013 = vpack.c.b16 %v3949, %v3949
    %v4014 = vpack.c.b16 %v3950, %v3950
    %v4015 = vpack.c.b16 %v3951, %v3951
    %v4016 = vpack.c.b16 %v3952, %v3952
    %v4017 = vpack.c.b16 %v3953, %v3953
    %v4018 = vpack.c.b16 %v3954, %v3954
    %v4019 = vpack.c.b16 %v3955, %v3955
    %v4020 = vpack.c.b16 %v3956, %v3956
    %v4021 = vpack.c.b16 %v3957, %v3957
    %v4022 = vpack.c.b16 %v3958, %v3958
    %v4023 = vpack.c.b16 %v3959, %v3959
    %v4024 = vpack.c.b16 %v3960, %v3960
    %v4025 = vpack.c.b16 %v3961, %v3961
    %v4026 = vpack.c.b16 %v3962, %v3962
    %v4027 = vpack.c.b16 %v3963, %v3963
    %v4028 = vpack.c.b16 %v3964, %v3964
    %v4029 = vpack.c.b16 %v3965, %v3965
    %v4030 = vpack.c.b16 %v3966, %v3966
    %v4031 = vpack.c.b16 %v3967, %v3967
    %v4032 = vpack.c.b16 %v3968, %v3968
    %v4033 = vpack.c.b16 %v3969, %v3969
    %v4034 = vpack.c.b16 %v3970, %v3970
    %v4035 = vpack.c.b16 %v3971, %v3971
    %v4036 = vpack.c.b16 %v3972, %v3972
    %v4037 = vpack.c.b16 %v3973, %v3973
    %v4038 = vpack.c.b16 %v3974, %v3974
    %v4039 = vpack.c.b16 %v3975, %v3975
    %v4040 = vpack.c.b16 %v3976, %v3976
    %v4041 = vpack.c.b16 %v3977, %v3977
    %v4042 = vpack.c.b16 %v3978, %v3978
    %v4043 = vpack.c.b16 %v3979, %v3979
    %v4044 = vpack.c.b16 %v3980, %v3980
    %v4045 = vpack.c.b16 %v3981, %v3981
    %v4046 = vpack.c.b16 %v3982, %v3982
    %v4047 = vpack.c.b16 %v3983, %v3983
    %v4048 = vpack.c.b16 %v3984, %v3984
    %v4049 = vpack.c.b16 %v3985, %v3985
    %4114 = vst [vmem:[#allocation7] sm:$0xf] %v3986
    %4115 = vst [vmem:[#allocation7 + $0x4] sm:$0xf] %v3987
    %4116 = vst [vmem:[#allocation7 + $0x8] sm:$0xf] %v3988
    %4117 = vst [vmem:[#allocation7 + $0xc] sm:$0xf] %v3989
    %4118 = vst [vmem:[#allocation7 + $0x10] sm:$0xf] %v3990
    %4119 = vst [vmem:[#allocation7 + $0x14] sm:$0xf] %v3991
    %4120 = vst [vmem:[#allocation7 + $0x18] sm:$0xf] %v3992
    %4121 = vst [vmem:[#allocation7 + $0x1c] sm:$0xf] %v3993
    %4122 = vst [vmem:[#allocation7 + $0x20] sm:$0xf] %v3994
    %4123 = vst [vmem:[#allocation7 + $0x24] sm:$0xf] %v3995
    %4124 = vst [vmem:[#allocation7 + $0x28] sm:$0xf] %v3996
    %4125 = vst [vmem:[#allocation7 + $0x2c] sm:$0xf] %v3997
    %4126 = vst [vmem:[#allocation7 + $0x30] sm:$0xf] %v3998
    %4127 = vst [vmem:[#allocation7 + $0x34] sm:$0xf] %v3999
    %4128 = vst [vmem:[#allocation7 + $0x38] sm:$0xf] %v4000
    %4129 = vst [vmem:[#allocation7 + $0x3c] sm:$0xf] %v4001
    %4130 = vst [vmem:[#allocation7 + $0x40] sm:$0xf] %v4002
    %4131 = vst [vmem:[#allocation7 + $0x44] sm:$0xf] %v4003
    %4132 = vst [vmem:[#allocation7 + $0x48] sm:$0xf] %v4004
    %4133 = vst [vmem:[#allocation7 + $0x4c] sm:$0xf] %v4005
    %4134 = vst [vmem:[#allocation7 + $0x50] sm:$0xf] %v4006
    %4135 = vst [vmem:[#allocation7 + $0x54] sm:$0xf] %v4007
    %4136 = vst [vmem:[#allocation7 + $0x58] sm:$0xf] %v4008
    %4137 = vst [vmem:[#allocation7 + $0x5c] sm:$0xf] %v4009
    %4138 = vst [vmem:[#allocation7 + $0x60] sm:$0xf] %v4010
    %4139 = vst [vmem:[#allocation7 + $0x64] sm:$0xf] %v4011
    %4140 = vst [vmem:[#allocation7 + $0x68] sm:$0xf] %v4012
    %4141 = vst [vmem:[#allocation7 + $0x6c] sm:$0xf] %v4013
    %4142 = vst [vmem:[#allocation7 + $0x70] sm:$0xf] %v4014
    %4143 = vst [vmem:[#allocation7 + $0x74] sm:$0xf] %v4015
    %4144 = vst [vmem:[#allocation7 + $0x78] sm:$0xf] %v4016
    %4145 = vst [vmem:[#allocation7 + $0x7c] sm:$0xf] %v4017
    %4146 = vst [vmem:[#allocation7 + $0x80] sm:$0xf] %v4018
    %4147 = vst [vmem:[#allocation7 + $0x84] sm:$0xf] %v4019
    %4148 = vst [vmem:[#allocation7 + $0x88] sm:$0xf] %v4020
    %4149 = vst [vmem:[#allocation7 + $0x8c] sm:$0xf] %v4021
    %4150 = vst [vmem:[#allocation7 + $0x90] sm:$0xf] %v4022
    %4151 = vst [vmem:[#allocation7 + $0x94] sm:$0xf] %v4023
    %4152 = vst [vmem:[#allocation7 + $0x98] sm:$0xf] %v4024
    %4153 = vst [vmem:[#allocation7 + $0x9c] sm:$0xf] %v4025
    %4154 = vst [vmem:[#allocation7 + $0xa0] sm:$0xf] %v4026
    %4155 = vst [vmem:[#allocation7 + $0xa4] sm:$0xf] %v4027
    %4156 = vst [vmem:[#allocation7 + $0xa8] sm:$0xf] %v4028
    %4157 = vst [vmem:[#allocation7 + $0xac] sm:$0xf] %v4029
    %4158 = vst [vmem:[#allocation7 + $0xb0] sm:$0xf] %v4030
    %4159 = vst [vmem:[#allocation7 + $0xb4] sm:$0xf] %v4031
    %4160 = vst [vmem:[#allocation7 + $0xb8] sm:$0xf] %v4032
    %4161 = vst [vmem:[#allocation7 + $0xbc] sm:$0xf] %v4033
    %4162 = vst [vmem:[#allocation7 + $0xc0] sm:$0xf] %v4034
    %4163 = vst [vmem:[#allocation7 + $0xc4] sm:$0xf] %v4035
    %4164 = vst [vmem:[#allocation7 + $0xc8] sm:$0xf] %v4036
    %4165 = vst [vmem:[#allocation7 + $0xcc] sm:$0xf] %v4037
    %4166 = vst [vmem:[#allocation7 + $0xd0] sm:$0xf] %v4038
    %4167 = vst [vmem:[#allocation7 + $0xd4] sm:$0xf] %v4039
    %4168 = vst [vmem:[#allocation7 + $0xd8] sm:$0xf] %v4040
    %4169 = vst [vmem:[#allocation7 + $0xdc] sm:$0xf] %v4041
    %4170 = vst [vmem:[#allocation7 + $0xe0] sm:$0xf] %v4042
    %4171 = vst [vmem:[#allocation7 + $0xe4] sm:$0xf] %v4043
    %4172 = vst [vmem:[#allocation7 + $0xe8] sm:$0xf] %v4044
    %4173 = vst [vmem:[#allocation7 + $0xec] sm:$0xf] %v4045
    %4174 = vst [vmem:[#allocation7 + $0xf0] sm:$0xf] %v4046
    %4175 = vst [vmem:[#allocation7 + $0xf4] sm:$0xf] %v4047
    %4176 = vst [vmem:[#allocation7 + $0xf8] sm:$0xf] %v4048
    %4177 = vst [vmem:[#allocation7 + $0xfc] sm:$0xf] %v4049
    %v4178 = vadd.f32 %v3604, %v3607
    %v4179 = vadd.f32 %v4178, %v3612
    %v4180 = vadd.f32 %v4179, %v3615
    %v4181 = vadd.f32 %v4180, %v3620
    %v4182 = vadd.f32 %v4181, %v3623
    %v4183 = vadd.f32 %v4182, %v3628
    %v4184 = vadd.f32 %v4183, %v3631
    %v4185 = vadd.f32 %v4184, %v3636
    %v4186 = vadd.f32 %v4185, %v3639
    %v4187 = vadd.f32 %v4186, %v3644
    %v4188 = vadd.f32 %v4187, %v3647
    %v4189 = vadd.f32 %v4188, %v3652
    %v4190 = vadd.f32 %v4189, %v3655
    %v4191 = vadd.f32 %v4190, %v3660
    %v4192 = vadd.f32 %v4191, %v3663
    %v4193 = vadd.f32 %v4192, %v3668
    %v4194 = vadd.f32 %v4193, %v3671
    %v4195 = vadd.f32 %v4194, %v3676
    %v4196 = vadd.f32 %v4195, %v3679
    %v4197 = vadd.f32 %v4196, %v3684
    %v4198 = vadd.f32 %v4197, %v3687
    %v4199 = vadd.f32 %v4198, %v3692
    %v4200 = vadd.f32 %v4199, %v3695
    %v4201 = vadd.f32 %v4200, %v3700
    %v4202 = vadd.f32 %v4201, %v3703
    %v4203 = vadd.f32 %v4202, %v3708
    %v4204 = vadd.f32 %v4203, %v3711
    %v4205 = vadd.f32 %v4204, %v3716
    %v4206 = vadd.f32 %v4205, %v3719
    %v4207 = vadd.f32 %v4206, %v3724
    %v4208 = vadd.f32 %v4207, %v3727
    %v4209 = vadd.f32 %v4208, %v3732
    %v4210 = vadd.f32 %v4209, %v3735
    %v4211 = vadd.f32 %v4210, %v3740
    %v4212 = vadd.f32 %v4211, %v3743
    %v4213 = vadd.f32 %v4212, %v3748
    %v4214 = vadd.f32 %v4213, %v3751
    %v4215 = vadd.f32 %v4214, %v3756
    %v4216 = vadd.f32 %v4215, %v3759
    %v4217 = vadd.f32 %v4216, %v3764
    %v4218 = vadd.f32 %v4217, %v3767
    %v4219 = vadd.f32 %v4218, %v3772
    %v4220 = vadd.f32 %v4219, %v3775
    %v4221 = vadd.f32 %v4220, %v3780
    %v4222 = vadd.f32 %v4221, %v3783
    %v4223 = vadd.f32 %v4222, %v3788
    %v4224 = vadd.f32 %v4223, %v3791
    %v4225 = vadd.f32 %v4224, %v3796
    %v4226 = vadd.f32 %v4225, %v3799
    %v4227 = vadd.f32 %v4226, %v3804
    %v4228 = vadd.f32 %v4227, %v3807
    %v4229 = vadd.f32 %v4228, %v3812
    %v4230 = vadd.f32 %v4229, %v3815
    %v4231 = vadd.f32 %v4230, %v3820
    %v4232 = vadd.f32 %v4231, %v3823
    %v4233 = vadd.f32 %v4232, %v3828
    %v4234 = vadd.f32 %v4233, %v3831
    %v4235 = vadd.f32 %v4234, %v3836
    %v4236 = vadd.f32 %v4235, %v3839
    %v4237 = vadd.f32 %v4236, %v3844
    %v4238 = vadd.f32 %v4237, %v3847
    %v4239 = vadd.f32 %v4238, %v3852
    %v4240 = vadd.f32 %v4239, %v3855
    %4241 = vst [vmem:[#allocation8] sm:$0xff] %v4240
    %v4242 = vmul.f32 %v3604, %v3604
    %v4243 = vmul.f32 %v3607, %v3607
    %v4244 = vmul.f32 %v3612, %v3612
    %v4245 = vmul.f32 %v3615, %v3615
    %v4246 = vmul.f32 %v3620, %v3620
    %v4247 = vmul.f32 %v3623, %v3623
    %v4248 = vmul.f32 %v3628, %v3628
    %v4249 = vmul.f32 %v3631, %v3631
    %v4250 = vmul.f32 %v3636, %v3636
    %v4251 = vmul.f32 %v3639, %v3639
    %v4252 = vmul.f32 %v3644, %v3644
    %v4253 = vmul.f32 %v3647, %v3647
    %v4254 = vmul.f32 %v3652, %v3652
    %v4255 = vmul.f32 %v3655, %v3655
    %v4256 = vmul.f32 %v3660, %v3660
    %v4257 = vmul.f32 %v3663, %v3663
    %v4258 = vmul.f32 %v3668, %v3668
    %v4259 = vmul.f32 %v3671, %v3671
    %v4260 = vmul.f32 %v3676, %v3676
    %v4261 = vmul.f32 %v3679, %v3679
    %v4262 = vmul.f32 %v3684, %v3684
    %v4263 = vmul.f32 %v3687, %v3687
    %v4264 = vmul.f32 %v3692, %v3692
    %v4265 = vmul.f32 %v3695, %v3695
    %v4266 = vmul.f32 %v3700, %v3700
    %v4267 = vmul.f32 %v3703, %v3703
    %v4268 = vmul.f32 %v3708, %v3708
    %v4269 = vmul.f32 %v3711, %v3711
    %v4270 = vmul.f32 %v3716, %v3716
    %v4271 = vmul.f32 %v3719, %v3719
    %v4272 = vmul.f32 %v3724, %v3724
    %v4273 = vmul.f32 %v3727, %v3727
    %v4274 = vmul.f32 %v3732, %v3732
    %v4275 = vmul.f32 %v3735, %v3735
    %v4276 = vmul.f32 %v3740, %v3740
    %v4277 = vmul.f32 %v3743, %v3743
    %v4278 = vmul.f32 %v3748, %v3748
    %v4279 = vmul.f32 %v3751, %v3751
    %v4280 = vmul.f32 %v3756, %v3756
    %v4281 = vmul.f32 %v3759, %v3759
    %v4282 = vmul.f32 %v3764, %v3764
    %v4283 = vmul.f32 %v3767, %v3767
    %v4284 = vmul.f32 %v3772, %v3772
    %v4285 = vmul.f32 %v3775, %v3775
    %v4286 = vmul.f32 %v3780, %v3780
    %v4287 = vmul.f32 %v3783, %v3783
    %v4288 = vmul.f32 %v3788, %v3788
    %v4289 = vmul.f32 %v3791, %v3791
    %v4290 = vmul.f32 %v3796, %v3796
    %v4291 = vmul.f32 %v3799, %v3799
    %v4292 = vmul.f32 %v3804, %v3804
    %v4293 = vmul.f32 %v3807, %v3807
    %v4294 = vmul.f32 %v3812, %v3812
    %v4295 = vmul.f32 %v3815, %v3815
    %v4296 = vmul.f32 %v3820, %v3820
    %v4297 = vmul.f32 %v3823, %v3823
    %v4298 = vmul.f32 %v3828, %v3828
    %v4299 = vmul.f32 %v3831, %v3831
    %v4300 = vmul.f32 %v3836, %v3836
    %v4301 = vmul.f32 %v3839, %v3839
    %v4302 = vmul.f32 %v3844, %v3844
    %v4303 = vmul.f32 %v3847, %v3847
    %v4304 = vmul.f32 %v3852, %v3852
    %v4305 = vmul.f32 %v3855, %v3855
    %v4306 = vadd.f32 %v4242, %v4243
    %v4307 = vadd.f32 %v4306, %v4244
    %v4308 = vadd.f32 %v4307, %v4245
    %v4309 = vadd.f32 %v4308, %v4246
    %v4310 = vadd.f32 %v4309, %v4247
    %v4311 = vadd.f32 %v4310, %v4248
    %v4312 = vadd.f32 %v4311, %v4249
    %v4313 = vadd.f32 %v4312, %v4250
    %v4314 = vadd.f32 %v4313, %v4251
    %v4315 = vadd.f32 %v4314, %v4252
    %v4316 = vadd.f32 %v4315, %v4253
    %v4317 = vadd.f32 %v4316, %v4254
    %v4318 = vadd.f32 %v4317, %v4255
    %v4319 = vadd.f32 %v4318, %v4256
    %v4320 = vadd.f32 %v4319, %v4257
    %v4321 = vadd.f32 %v4320, %v4258
    %v4322 = vadd.f32 %v4321, %v4259
    %v4323 = vadd.f32 %v4322, %v4260
    %v4324 = vadd.f32 %v4323, %v4261
    %v4325 = vadd.f32 %v4324, %v4262
    %v4326 = vadd.f32 %v4325, %v4263
    %v4327 = vadd.f32 %v4326, %v4264
    %v4328 = vadd.f32 %v4327, %v4265
    %v4329 = vadd.f32 %v4328, %v4266
    %v4330 = vadd.f32 %v4329, %v4267
    %v4331 = vadd.f32 %v4330, %v4268
    %v4332 = vadd.f32 %v4331, %v4269
    %v4333 = vadd.f32 %v4332, %v4270
    %v4334 = vadd.f32 %v4333, %v4271
    %v4335 = vadd.f32 %v4334, %v4272
    %v4336 = vadd.f32 %v4335, %v4273
    %v4337 = vadd.f32 %v4336, %v4274
    %v4338 = vadd.f32 %v4337, %v4275
    %v4339 = vadd.f32 %v4338, %v4276
    %v4340 = vadd.f32 %v4339, %v4277
    %v4341 = vadd.f32 %v4340, %v4278
    %v4342 = vadd.f32 %v4341, %v4279
    %v4343 = vadd.f32 %v4342, %v4280
    %v4344 = vadd.f32 %v4343, %v4281
    %v4345 = vadd.f32 %v4344, %v4282
    %v4346 = vadd.f32 %v4345, %v4283
    %v4347 = vadd.f32 %v4346, %v4284
    %v4348 = vadd.f32 %v4347, %v4285
    %v4349 = vadd.f32 %v4348, %v4286
    %v4350 = vadd.f32 %v4349, %v4287
    %v4351 = vadd.f32 %v4350, %v4288
    %v4352 = vadd.f32 %v4351, %v4289
    %v4353 = vadd.f32 %v4352, %v4290
    %v4354 = vadd.f32 %v4353, %v4291
    %v4355 = vadd.f32 %v4354, %v4292
    %v4356 = vadd.f32 %v4355, %v4293
    %v4357 = vadd.f32 %v4356, %v4294
    %v4358 = vadd.f32 %v4357, %v4295
    %v4359 = vadd.f32 %v4358, %v4296
    %v4360 = vadd.f32 %v4359, %v4297
    %v4361 = vadd.f32 %v4360, %v4298
    %v4362 = vadd.f32 %v4361, %v4299
    %v4363 = vadd.f32 %v4362, %v4300
    %v4364 = vadd.f32 %v4363, %v4301
    %v4365 = vadd.f32 %v4364, %v4302
    %v4366 = vadd.f32 %v4365, %v4303
    %v4367 = vadd.f32 %v4366, %v4304
    %v4368 = vadd.f32 %v4367, %v4305
    %4369 = vst [vmem:[#allocation10] sm:$0xff] %v4368
    // Predicated region
    $region18: #{tpu_custom_call.1} parent=1 // pred_check
      _
    $region19: #{tpu_custom_call.1} parent=1 // pred_check_branch
      %4371 = sbr.rel (0) target = $region21
    $region20: #{tpu_custom_call.1} parent=1 // pred_region
      %s4373 = ssub.s32 4096, 4096
      %4374 = vsyncadd [#allocation4], %s4373
      %s4375 = sshll.u32 [#allocation7], 4
      %s4376 = int_to_ptr.vmem [resolvable:$true] %s4375
      %4381 = dma.vmem_to_hbm [thread:$0]  %s4376, 4096, %s2, [#allocation4], 64, 64, 4
    $region21: #{tpu_custom_call.1} parent=1 // pred_fallthru
      _
    // Predicated region
    $region22: #{tpu_custom_call.1} parent=1 // pred_check
      _
    $region23: #{tpu_custom_call.1} parent=1 // pred_check_branch
      %4383 = sbr.rel (0) target = $region25
    $region24: #{tpu_custom_call.1} parent=1 // pred_region
      %s4385 = ssub.s32 128, 128
      %4386 = vsyncadd [#allocation9], %s4385
      %s4388 = sshll.u32 [#allocation8], 4
      %s4389 = int_to_ptr.vmem [resolvable:$true] %s4388
      %4391 = dma.vmem_to_hbm [thread:$0]  %s4389, 128, %s3, [#allocation9]
    $region25: #{tpu_custom_call.1} parent=1 // pred_fallthru
      _
    // Predicated region
    $region26: #{tpu_custom_call.1} parent=1 // pred_check
      _
    $region27: #{tpu_custom_call.1} parent=1 // pred_check_branch
      %4393 = sbr.rel (0) target = $region29
    $region28: #{tpu_custom_call.1} parent=1 // pred_region
      %s4395 = ssub.s32 128, 128
      %4396 = vsyncadd [#allocation9], %s4395
      %s4398 = sshll.u32 [#allocation10], 4
      %s4399 = int_to_ptr.vmem [resolvable:$true] %s4398
      %4401 = dma.vmem_to_hbm [thread:$0]  %s4399, 128, %s4, [#allocation9]
    $region29: #{tpu_custom_call.1} parent=1 // pred_fallthru
      _
    // Predicated region
    $region30: #{tpu_custom_call.1} parent=1 // pred_check
      _
    $region31: #{tpu_custom_call.1} parent=1 // pred_check_branch
      %4403 = sbr.rel (0) target = $region33
    $region32: #{tpu_custom_call.1} parent=1 // pred_region
      %4404 = dma.done [#allocation4], 4096
    $region33: #{tpu_custom_call.1} parent=1 // pred_fallthru
      _
    // Predicated region
    $region34: #{tpu_custom_call.1} parent=1 // pred_check
      _
    $region35: #{tpu_custom_call.1} parent=1 // pred_check_branch
      %4406 = sbr.rel (0) target = $region37
    $region36: #{tpu_custom_call.1} parent=1 // pred_region
      %4407 = dma.done [#allocation9], 128
    $region37: #{tpu_custom_call.1} parent=1 // pred_fallthru
      _
    // Predicated region
    $region38: #{tpu_custom_call.1} parent=1 // pred_check
      _
    $region39: #{tpu_custom_call.1} parent=1 // pred_check_branch
      %4409 = sbr.rel (0) target = $region41
    $region40: #{tpu_custom_call.1} parent=1 // pred_region
      %4410 = dma.done [#allocation9], 128
    $region41: #{tpu_custom_call.1} parent=1 // pred_fallthru
      _
    %4411 = vsyncpa [#allocation3], 1
    %4412 = vsyncpa [#allocation6], 1
    %4413 = vsyncpa [#allocation4], 1
    %4414 = vsyncpa [#allocation9], 1

</llo_original>
